<compile_context>
chip_gen: v7x
topology: tpu7x:2x2x1
jax: 0.10.0
libtpu: 0.0.40
codegen_flags: <defaults>
</compile_context>

<pallas_src>
import numpy as np
import jax
import jax.numpy as jnp
from jax import lax
from jax.experimental import pallas as pl
from jax.experimental.pallas import tpu as pltpu

# ---- module hyper-parameters (textCNN.__init__ defaults; t_sizea=200 forces S=1000).
BATCH = 2
VOCAB_SIZE = 64
EMBED_SIZE = 32
SEQ_LEN = 1000
FIRST_LABELS = 6
SECOND_LABELS = 20
STATEMENT_LABELS = 4
T_SIZEA = 200
CONV_KH = 5
POOL_KW = 5
POOL_PAD = 2
WIN = POOL_KW + CONV_KH - 1            # 9 input rows feed one pool window
NUM_CH = FIRST_LABELS * FIRST_LABELS   # 36 fused conv channels (6 convs x 6 out-ch)
CH_PAD = 64                            # channels padded to 64 -> aligned lane groups
NBIG = POOL_KW * CH_PAD                # 320 = 5 pool positions x 64 padded channels
VV = VOCAB_SIZE + 1                    # per-window-row block: 64 vocab + 1 pad indicator
K1 = WIN * VV + 1                      # 586 = 9*65 + 1 bias row
KSEL = WIN + 1                         # 10 = 9 window-row codes + 1 bias code
BIG = 1.0e9                            # kills invalid boundary conv positions via ReLU
M_TOTAL = BATCH * T_SIZEA              # batch folded into the matmul M dimension


def _textcnn_kernel(idx_ref, sel_ref, wf_ref, wb_ref, wbb_ref, wc_ref, wcb_ref, out_ref):
    # idx_ref : (M, KSEL) f32   window codes: token_id + VV*j (sentinel VOCAB for pads),
    #                           last column = WIN*VV (selects the bias row)
    # sel_ref : (KSEL, K1) f32  0/1 block selector (broadcasts code j across its VV cols)
    # wf_ref  : (K1, NBIG) bf16 fused embedding+conv weights (+bias row, -BIG pad rows)
    # wb_ref  : (20, 200) f32 ; wbb_ref: (20, 1) ; wc_ref: (4, 6) ; wcb_ref: (4, 1)
    # out_ref : (B, 4, 20) f32

    # 1. Broadcast each code across its 65-wide column block (tiny f32 MXU matmul),
    #    one equality compare against a lane iota builds the exact (0/1) one-hot.
    codes = jnp.dot(idx_ref[...], sel_ref[...], preferred_element_type=jnp.float32)
    col = lax.broadcasted_iota(jnp.int32, codes.shape, 1).astype(jnp.float32)
    onehot = jnp.where(codes == col, 1.0, 0.0).astype(jnp.bfloat16)          # (M, K1)

    # 2. Embedding + all 6 convs + bias + boundary masking in ONE bf16 MXU matmul
    #    (f32 accumulation).  Invalid boundary conv positions pick up -BIG -> ReLU 0.
    conv = jnp.dot(onehot, wf_ref[...], preferred_element_type=jnp.float32)  # (M, 320)
    conv = jnp.maximum(conv, 0.0)                                            # ReLU

    # 3. MaxPool over the 5 pool positions: 64-lane-aligned groups.
    pooled = conv[:, 0:CH_PAD]
    for jj in range(1, POOL_KW):
        pooled = jnp.maximum(pooled, conv[:, jj * CH_PAD:(jj + 1) * CH_PAD])  # (M, 64)

    # 4. Max over each conv's 6 output channels (lane ch = c*6 + k): 3-step log tree
    #    of shifted lane slices; lanes >= 36 are exactly 0 (neutral under ReLU+max).
    t = jnp.maximum(pooled[:, 0:58], pooled[:, 6:64])
    t = jnp.maximum(t[:, 0:46], t[:, 12:58])
    t = jnp.maximum(t[:, 0:22], t[:, 24:46])          # t[:, k] == ajt[b, k, w] (rows b*200+w)

    # 5. Tiny f32 heads + exact softmax per batch element (batch is folded into M).
    for b in range(BATCH):
        ajt_b = t[b * T_SIZEA:(b + 1) * T_SIZEA, 0:FIRST_LABELS]             # (200, 6)
        bjt = jnp.dot(wb_ref[...], ajt_b,
                      preferred_element_type=jnp.float32) + wbb_ref[...]     # (20, 6)
        ojt = lax.dot_general(wc_ref[...], bjt, (((1,), (1,)), ((), ())),
                              preferred_element_type=jnp.float32) + wcb_ref[...]  # (4, 20)
        m = jnp.max(ojt, axis=0, keepdims=True)
        e = jnp.exp(ojt - m)
        out_ref[b] = (e / jnp.sum(e, axis=0, keepdims=True)).astype(out_ref.dtype)


def init_params(key):
    ks = jax.random.split(key, 7)
    return dict(
        emb=0.1 * jax.random.normal(ks[0], (VOCAB_SIZE, EMBED_SIZE), jnp.float32),
        # 6 Conv2d(1, 6, (5, E)) layers: (k, out_c, in=1, kh, kw=E)
        conv_w=0.1 * jax.random.normal(
            ks[1], (FIRST_LABELS, FIRST_LABELS, 1, CONV_KH, EMBED_SIZE), jnp.float32),
        conv_b=0.05 * jax.random.normal(ks[2], (FIRST_LABELS, FIRST_LABELS), jnp.float32),
        wb_w=0.05 * jax.random.normal(ks[3], (SECOND_LABELS, T_SIZEA), jnp.float32),
        wb_b=0.05 * jax.random.normal(ks[4], (SECOND_LABELS,), jnp.float32),
        wc_w=0.1 * jax.random.normal(ks[5], (STATEMENT_LABELS, FIRST_LABELS), jnp.float32),
        wc_b=0.05 * jax.random.normal(ks[6], (STATEMENT_LABELS,), jnp.float32),
    )


def pack_params(params):
    """One-time parameter packing (hoisted out of the per-call forward).

    Wfused[j*VV + v, jj*CH_PAD + ch]:
      v <  VOCAB : (emb @ conv_w[dt=j-jj])[v, ch]        for 0 <= j-jj < 5, else 0
      v == VOCAB : -BIG (sentinel pad row -> kills the whole conv position via ReLU)
    Wfused[WIN*VV, jj*CH_PAD + ch] = conv bias (bias folded into the matmul).
    """
    f32 = jnp.float32
    emb = params['emb'].astype(f32)                                        # (V, E)
    cw = params['conv_w'][:, :, 0].astype(f32)                             # (k, c, 5, E)
    # fused channel = c*6 + k, zero-padded to CH_PAD
    w36 = jnp.transpose(cw, (2, 3, 1, 0)).reshape(CONV_KH, EMBED_SIZE, NUM_CH)
    w64 = jnp.pad(w36, ((0, 0), (0, 0), (0, CH_PAD - NUM_CH)))             # (5, E, 64)
    b64 = jnp.pad(jnp.transpose(params['conv_b']).reshape(NUM_CH),
                  (0, CH_PAD - NUM_CH))                                    # (64,)

    rows = []
    for j in range(WIN):
        blk = jnp.zeros((VV, NBIG), f32)
        for jj in range(POOL_KW):
            dt = j - jj
            if 0 <= dt < CONV_KH:
                blk = blk.at[:VOCAB_SIZE, jj * CH_PAD:(jj + 1) * CH_PAD].set(emb @ w64[dt])
                blk = blk.at[VOCAB_SIZE, jj * CH_PAD:(jj + 1) * CH_PAD].set(-BIG)
        rows.append(blk)
    rows.append(jnp.tile(b64, POOL_KW).reshape(1, NBIG))                   # bias row
    wfused = jnp.concatenate(rows, axis=0).astype(jnp.bfloat16)            # (586, 320)

    sel = np.zeros((KSEL, K1), np.float32)                                 # block selector
    for j in range(WIN):
        sel[j, j * VV:(j + 1) * VV] = 1.0
    sel[WIN, WIN * VV] = 1.0

    return dict(
        wfused=wfused,
        sel=jnp.asarray(sel),
        wb_w=params['wb_w'].astype(f32),                                   # (20, 200)
        wb_b=params['wb_b'].reshape(SECOND_LABELS, 1).astype(f32),
        wc_w=params['wc_w'].astype(f32),                                   # (4, 6)
        wc_b=params['wc_b'].reshape(STATEMENT_LABELS, 1).astype(f32),
    )


@jax.jit
def textcnn_forward(ids, packed):
    B, S = ids.shape
    nW = S // POOL_KW
    assert B == BATCH and S == SEQ_LEN and nW == T_SIZEA

    # Tiny integer glue on the (B, S) ids (everything heavy is inside the kernel):
    # window w, row j -> token at input position 5w - 2 + j (sentinel VOCAB if OOB),
    # encoded as id + VV*j; a constant WIN*VV column selects the folded conv bias.
    pad_back = (POOL_KW * nW + WIN - 1) - (S + POOL_PAD)                   # = 6
    ids_pad = jnp.pad(ids, ((0, 0), (POOL_PAD, pad_back)), constant_values=VOCAB_SIZE)
    win = jnp.stack([ids_pad[:, j:j + POOL_KW * nW:POOL_KW] for j in range(WIN)],
                    axis=2)                                                # (B, nW, 9)
    codes = win + (VV * jnp.arange(WIN, dtype=jnp.int32))[None, None, :]
    codes = jnp.concatenate(
        [codes, jnp.full((B, nW, 1), WIN * VV, dtype=jnp.int32)], axis=2)  # (B, nW, 10)
    codes = codes.reshape(B * nW, KSEL).astype(jnp.float32)

    # grid=(1,) with the batch folded into the matmul M dim (best for single-TC
    # v5e/v6e; on v7x a grid=(B,)+"parallel" split would shave <1us off a ~1-2us
    # kernel, not worth a second code path).  Working set << VMEM on all gens.
    return pl.pallas_call(
        _textcnn_kernel,
        out_shape=jax.ShapeDtypeStruct((B, STATEMENT_LABELS, SECOND_LABELS), jnp.float32),
        grid_spec=pltpu.PrefetchScalarGridSpec(
            num_scalar_prefetch=0,
            grid=(1,),
            in_specs=[
                pl.BlockSpec((B * nW, KSEL), lambda i: (0, 0)),
                pl.BlockSpec((KSEL, K1), lambda i: (0, 0)),
                pl.BlockSpec((K1, NBIG), lambda i: (0, 0)),
                pl.BlockSpec((SECOND_LABELS, T_SIZEA), lambda i: (0, 0)),
                pl.BlockSpec((SECOND_LABELS, 1), lambda i: (0, 0)),
                pl.BlockSpec((STATEMENT_LABELS, FIRST_LABELS), lambda i: (0, 0)),
                pl.BlockSpec((STATEMENT_LABELS, 1), lambda i: (0, 0)),
            ],
            out_specs=pl.BlockSpec((B, STATEMENT_LABELS, SECOND_LABELS),
                                   lambda i: (0, 0, 0)),
        ),
        compiler_params=pltpu.CompilerParams(dimension_semantics=("arbitrary",)),
    )(codes, packed['sel'], packed['wfused'], packed['wb_w'], packed['wb_b'],
      packed['wc_w'], packed['wc_b'])


def reference_forward(ids, params):
    """Plain-JAX (f32) replica of the PyTorch forward, for correctness checking."""
    x = jnp.take(params['emb'], ids, axis=0).astype(jnp.float32)           # (B, S, E)
    B, S, E = x.shape
    L = S - (CONV_KH - 1)
    nW = S // POOL_KW
    xs = jnp.stack([x[:, dt:dt + L, :] for dt in range(CONV_KH)], axis=2)  # (B, L, 5, E)
    ajt = []
    for k in range(FIRST_LABELS):
        w = params['conv_w'][k, :, 0]                                      # (6, 5, E)
        b = params['conv_b'][k]                                            # (6,)
        conv = jnp.einsum('blde,cde->bcl', xs, w) + b[None, :, None]       # (B, 6, L)
        p = jnp.maximum(conv, 0.0)
        p = jnp.pad(p, ((0, 0), (0, 0), (POOL_PAD, POOL_PAD)))             # (B, 6, S)
        p = p.reshape(B, FIRST_LABELS, nW, POOL_KW)
        ajt.append(jnp.max(p, axis=(1, 3)))                                # (B, nW)
    ajt = jnp.stack(ajt, axis=1)                                           # (B, 6, 200)
    bjt = jnp.einsum('bkw,jw->bkj', ajt, params['wb_w']) + params['wb_b'][None, None, :]
    ojt = jnp.einsum('bkj,sk->bsj', bjt, params['wc_w']) + params['wc_b'][None, :, None]
    return jax.nn.softmax(ojt, axis=1)                                     # (B, 4, 20)


if __name__ == "__main__":
    key = jax.random.PRNGKey(0)
    pkey, ikey = jax.random.split(key)
    params = init_params(pkey)
    packed = pack_params(params)                       # one-time packing
    ids = jax.random.randint(ikey, (BATCH, SEQ_LEN), 0, VOCAB_SIZE, dtype=jnp.int32)

    out = jax.block_until_ready(textcnn_forward(ids, packed))
    ref = jax.block_until_ready(reference_forward(ids, params))

    assert out.shape == (BATCH, STATEMENT_LABELS, SECOND_LABELS)
    np.testing.assert_allclose(np.asarray(out), np.asarray(ref), atol=1e-2, rtol=1e-2)
    # softmax over dim=1: exact divide in the kernel -> rows sum to 1 (f32 accuracy)
    assert np.allclose(np.asarray(out).sum(axis=1), 1.0, atol=1e-4)
    print("KERNEL_OK")
</pallas_src>

<mosaic_0001>
module attributes {stable_mosaic.version = 11 : i64} {
  func.func @_textcnn_kernel(%arg0: i32, %arg1: memref<400x10xf32, #tpu.memory_space<vmem>>, %arg2: memref<10x586xf32, #tpu.memory_space<vmem>>, %arg3: memref<586x320xbf16, #tpu.memory_space<vmem>>, %arg4: memref<20x200xf32, #tpu.memory_space<vmem>>, %arg5: memref<20x1xf32, #tpu.memory_space<vmem>>, %arg6: memref<4x6xf32, #tpu.memory_space<vmem>>, %arg7: memref<4x1xf32, #tpu.memory_space<vmem>>, %arg8: memref<2x4x20xf32, #tpu.memory_space<vmem>>) attributes {dimension_semantics = [#tpu.dimension_semantics<arbitrary>], iteration_bounds = array<i64: 1>, scalar_prefetch = 0 : i64, scratch_operands = 0 : i64, tpu.core_type = #tpu.core_type<tc>, window_params = [{pipeline_mode = #tpu.pipeline_mode<synchronous>, transform_indices = @transform_0, window_bounds = array<i64: 400, 10>}, {pipeline_mode = #tpu.pipeline_mode<synchronous>, transform_indices = @transform_1, window_bounds = array<i64: 10, 586>}, {pipeline_mode = #tpu.pipeline_mode<synchronous>, transform_indices = @transform_2, window_bounds = array<i64: 586, 320>}, {pipeline_mode = #tpu.pipeline_mode<synchronous>, transform_indices = @transform_3, window_bounds = array<i64: 20, 200>}, {pipeline_mode = #tpu.pipeline_mode<synchronous>, transform_indices = @transform_4, window_bounds = array<i64: 20, 1>}, {pipeline_mode = #tpu.pipeline_mode<synchronous>, transform_indices = @transform_5, window_bounds = array<i64: 4, 6>}, {pipeline_mode = #tpu.pipeline_mode<synchronous>, transform_indices = @transform_6, window_bounds = array<i64: 4, 1>}, {pipeline_mode = #tpu.pipeline_mode<synchronous>, transform_indices = @transform_7, window_bounds = array<i64: 2, 4, 20>}]} {
    %c0 = arith.constant 0 : index
    %c0_0 = arith.constant 0 : index
    %0 = vector.load %arg1[%c0, %c0_0] : memref<400x10xf32, #tpu.memory_space<vmem>>, vector<400x10xf32>
    %c0_1 = arith.constant 0 : index
    %c0_2 = arith.constant 0 : index
    %1 = vector.load %arg2[%c0_1, %c0_2] : memref<10x586xf32, #tpu.memory_space<vmem>>, vector<10x586xf32>
    %cst = arith.constant dense<0.000000e+00> : vector<400x586xf32>
    %2 = tpu.matmul %0, %1, %cst {dimension_numbers = #tpu.dot_dimension_numbers<[1], [0], [0], [1], [0, 0, 1, 1], [], []>} : vector<400x10xf32>, vector<10x586xf32>, vector<400x586xf32> -> vector<400x586xf32>
    %3 = tpu.iota {dimensions = array<i32: 1>} : vector<400x586xi32>
    %4 = arith.sitofp %3 : vector<400x586xi32> to vector<400x586xf32>
    %5 = arith.cmpf oeq, %2, %4 : vector<400x586xf32>
    %cst_3 = arith.constant 1.000000e+00 : f32
    %cst_4 = arith.constant 0.000000e+00 : f32
    %6 = vector.broadcast %cst_3 : f32 to vector<400x586xf32>
    %7 = vector.broadcast %cst_4 : f32 to vector<400x586xf32>
    %8 = arith.select %5, %6, %7 : vector<400x586xi1>, vector<400x586xf32>
    %9 = arith.truncf %8 : vector<400x586xf32> to vector<400x586xbf16>
    %c0_5 = arith.constant 0 : index
    %c0_6 = arith.constant 0 : index
    %10 = vector.load %arg3[%c0_5, %c0_6] : memref<586x320xbf16, #tpu.memory_space<vmem>>, vector<586x320xbf16>
    %cst_7 = arith.constant dense<0.000000e+00> : vector<400x320xf32>
    %11 = tpu.matmul %9, %10, %cst_7 {dimension_numbers = #tpu.dot_dimension_numbers<[1], [0], [0], [1], [0, 0, 1, 1], [], []>} : vector<400x586xbf16>, vector<586x320xbf16>, vector<400x320xf32> -> vector<400x320xf32>
    %cst_8 = arith.constant 0.000000e+00 : f32
    %12 = vector.broadcast %cst_8 : f32 to vector<400x320xf32>
    %13 = arith.maximumf %11, %12 : vector<400x320xf32>
    %14 = vector.extract_strided_slice %13 {offsets = [0, 0], sizes = [400, 64], strides = [1, 1]} : vector<400x320xf32> to vector<400x64xf32>
    %15 = vector.extract_strided_slice %13 {offsets = [0, 64], sizes = [400, 64], strides = [1, 1]} : vector<400x320xf32> to vector<400x64xf32>
    %16 = arith.maximumf %14, %15 : vector<400x64xf32>
    %17 = vector.extract_strided_slice %13 {offsets = [0, 128], sizes = [400, 64], strides = [1, 1]} : vector<400x320xf32> to vector<400x64xf32>
    %18 = arith.maximumf %16, %17 : vector<400x64xf32>
    %19 = vector.extract_strided_slice %13 {offsets = [0, 192], sizes = [400, 64], strides = [1, 1]} : vector<400x320xf32> to vector<400x64xf32>
    %20 = arith.maximumf %18, %19 : vector<400x64xf32>
    %21 = vector.extract_strided_slice %13 {offsets = [0, 256], sizes = [400, 64], strides = [1, 1]} : vector<400x320xf32> to vector<400x64xf32>
    %22 = arith.maximumf %20, %21 : vector<400x64xf32>
    %23 = vector.extract_strided_slice %22 {offsets = [0, 0], sizes = [400, 58], strides = [1, 1]} : vector<400x64xf32> to vector<400x58xf32>
    %24 = vector.extract_strided_slice %22 {offsets = [0, 6], sizes = [400, 58], strides = [1, 1]} : vector<400x64xf32> to vector<400x58xf32>
    %25 = arith.maximumf %23, %24 : vector<400x58xf32>
    %26 = vector.extract_strided_slice %25 {offsets = [0, 0], sizes = [400, 46], strides = [1, 1]} : vector<400x58xf32> to vector<400x46xf32>
    %27 = vector.extract_strided_slice %25 {offsets = [0, 12], sizes = [400, 46], strides = [1, 1]} : vector<400x58xf32> to vector<400x46xf32>
    %28 = arith.maximumf %26, %27 : vector<400x46xf32>
    %29 = vector.extract_strided_slice %28 {offsets = [0, 0], sizes = [400, 22], strides = [1, 1]} : vector<400x46xf32> to vector<400x22xf32>
    %30 = vector.extract_strided_slice %28 {offsets = [0, 24], sizes = [400, 22], strides = [1, 1]} : vector<400x46xf32> to vector<400x22xf32>
    %31 = arith.maximumf %29, %30 : vector<400x22xf32>
    %32 = vector.extract_strided_slice %31 {offsets = [0, 0], sizes = [200, 6], strides = [1, 1]} : vector<400x22xf32> to vector<200x6xf32>
    %c0_9 = arith.constant 0 : index
    %c0_10 = arith.constant 0 : index
    %33 = vector.load %arg4[%c0_9, %c0_10] : memref<20x200xf32, #tpu.memory_space<vmem>>, vector<20x200xf32>
    %cst_11 = arith.constant dense<0.000000e+00> : vector<20x6xf32>
    %34 = tpu.matmul %33, %32, %cst_11 {dimension_numbers = #tpu.dot_dimension_numbers<[1], [0], [0], [1], [0, 0, 1, 1], [], []>} : vector<20x200xf32>, vector<200x6xf32>, vector<20x6xf32> -> vector<20x6xf32>
    %c0_12 = arith.constant 0 : index
    %c0_13 = arith.constant 0 : index
    %35 = vector.load %arg5[%c0_12, %c0_13] : memref<20x1xf32, #tpu.memory_space<vmem>>, vector<20x1xf32>
    %36 = vector.broadcast %35 : vector<20x1xf32> to vector<20x6xf32>
    %37 = arith.addf %34, %36 : vector<20x6xf32>
    %c0_14 = arith.constant 0 : index
    %c0_15 = arith.constant 0 : index
    %38 = vector.load %arg6[%c0_14, %c0_15] : memref<4x6xf32, #tpu.memory_space<vmem>>, vector<4x6xf32>
    %cst_16 = arith.constant dense<0.000000e+00> : vector<4x20xf32>
    %39 = tpu.matmul %38, %37, %cst_16 {dimension_numbers = #tpu.dot_dimension_numbers<[1], [1], [0], [0], [0, 0, 1, 0], [], []>} : vector<4x6xf32>, vector<20x6xf32>, vector<4x20xf32> -> vector<4x20xf32>
    %c0_17 = arith.constant 0 : index
    %c0_18 = arith.constant 0 : index
    %40 = vector.load %arg7[%c0_17, %c0_18] : memref<4x1xf32, #tpu.memory_space<vmem>>, vector<4x1xf32>
    %41 = vector.broadcast %40 : vector<4x1xf32> to vector<4x20xf32>
    %42 = arith.addf %39, %41 : vector<4x20xf32>
    %cst_19 = arith.constant dense<0xFF800000> : vector<20xf32>
    %43 = vector.multi_reduction <maximumf>, %42, %cst_19 [0] : vector<4x20xf32> to vector<20xf32>
    %44 = vector.shape_cast %43 : vector<20xf32> to vector<1x20xf32>
    %45 = vector.broadcast %44 : vector<1x20xf32> to vector<4x20xf32>
    %46 = arith.subf %42, %45 : vector<4x20xf32>
    %47 = math.exp %46 : vector<4x20xf32>
    %cst_20 = arith.constant dense<0.000000e+00> : vector<20xf32>
    %48 = vector.multi_reduction <add>, %47, %cst_20 [0] : vector<4x20xf32> to vector<20xf32>
    %49 = vector.shape_cast %48 : vector<20xf32> to vector<1x20xf32>
    %50 = vector.broadcast %49 : vector<1x20xf32> to vector<4x20xf32>
    %51 = arith.divf %47, %50 : vector<4x20xf32>
    %c0_21 = arith.constant 0 : index
    %c0_22 = arith.constant 0 : index
    %c0_23 = arith.constant 0 : index
    %52 = vector.load %arg8[%c0_21, %c0_22, %c0_23] : memref<2x4x20xf32, #tpu.memory_space<vmem>>, vector<1x4x20xf32>
    %53 = vector.shape_cast %52 : vector<1x4x20xf32> to vector<4x20xf32>
    %54 = vector.shape_cast %51 : vector<4x20xf32> to vector<1x4x20xf32>
    tpu.vector_store %arg8[%c0_21, %c0_22, %c0_23], %54 {strides = array<i32>} : memref<2x4x20xf32, #tpu.memory_space<vmem>>, vector<1x4x20xf32>,
    %55 = vector.extract_strided_slice %31 {offsets = [200, 0], sizes = [200, 6], strides = [1, 1]} : vector<400x22xf32> to vector<200x6xf32>
    %c0_24 = arith.constant 0 : index
    %c0_25 = arith.constant 0 : index
    %56 = vector.load %arg4[%c0_24, %c0_25] : memref<20x200xf32, #tpu.memory_space<vmem>>, vector<20x200xf32>
    %cst_26 = arith.constant dense<0.000000e+00> : vector<20x6xf32>
    %57 = tpu.matmul %56, %55, %cst_26 {dimension_numbers = #tpu.dot_dimension_numbers<[1], [0], [0], [1], [0, 0, 1, 1], [], []>} : vector<20x200xf32>, vector<200x6xf32>, vector<20x6xf32> -> vector<20x6xf32>
    %c0_27 = arith.constant 0 : index
    %c0_28 = arith.constant 0 : index
    %58 = vector.load %arg5[%c0_27, %c0_28] : memref<20x1xf32, #tpu.memory_space<vmem>>, vector<20x1xf32>
    %59 = vector.broadcast %58 : vector<20x1xf32> to vector<20x6xf32>
    %60 = arith.addf %57, %59 : vector<20x6xf32>
    %c0_29 = arith.constant 0 : index
    %c0_30 = arith.constant 0 : index
    %61 = vector.load %arg6[%c0_29, %c0_30] : memref<4x6xf32, #tpu.memory_space<vmem>>, vector<4x6xf32>
    %cst_31 = arith.constant dense<0.000000e+00> : vector<4x20xf32>
    %62 = tpu.matmul %61, %60, %cst_31 {dimension_numbers = #tpu.dot_dimension_numbers<[1], [1], [0], [0], [0, 0, 1, 0], [], []>} : vector<4x6xf32>, vector<20x6xf32>, vector<4x20xf32> -> vector<4x20xf32>
    %c0_32 = arith.constant 0 : index
    %c0_33 = arith.constant 0 : index
    %63 = vector.load %arg7[%c0_32, %c0_33] : memref<4x1xf32, #tpu.memory_space<vmem>>, vector<4x1xf32>
    %64 = vector.broadcast %63 : vector<4x1xf32> to vector<4x20xf32>
    %65 = arith.addf %62, %64 : vector<4x20xf32>
    %cst_34 = arith.constant dense<0xFF800000> : vector<20xf32>
    %66 = vector.multi_reduction <maximumf>, %65, %cst_34 [0] : vector<4x20xf32> to vector<20xf32>
    %67 = vector.shape_cast %66 : vector<20xf32> to vector<1x20xf32>
    %68 = vector.broadcast %67 : vector<1x20xf32> to vector<4x20xf32>
    %69 = arith.subf %65, %68 : vector<4x20xf32>
    %70 = math.exp %69 : vector<4x20xf32>
    %cst_35 = arith.constant dense<0.000000e+00> : vector<20xf32>
    %71 = vector.multi_reduction <add>, %70, %cst_35 [0] : vector<4x20xf32> to vector<20xf32>
    %72 = vector.shape_cast %71 : vector<20xf32> to vector<1x20xf32>
    %73 = vector.broadcast %72 : vector<1x20xf32> to vector<4x20xf32>
    %74 = arith.divf %70, %73 : vector<4x20xf32>
    %c1 = arith.constant 1 : index
    %c0_36 = arith.constant 0 : index
    %c0_37 = arith.constant 0 : index
    %75 = vector.load %arg8[%c1, %c0_36, %c0_37] : memref<2x4x20xf32, #tpu.memory_space<vmem>>, vector<1x4x20xf32>
    %76 = vector.shape_cast %75 : vector<1x4x20xf32> to vector<4x20xf32>
    %77 = vector.shape_cast %74 : vector<4x20xf32> to vector<1x4x20xf32>
    tpu.vector_store %arg8[%c1, %c0_36, %c0_37], %77 {strides = array<i32>} : memref<2x4x20xf32, #tpu.memory_space<vmem>>, vector<1x4x20xf32>,
    return
  }
  func.func @transform_0(%arg0: i32) -> (i32, i32) {
    %c0_i32 = arith.constant 0 : i32
    %c0_i32_0 = arith.constant 0 : i32
    %c0_i32_1 = arith.constant 0 : i32
    return %c0_i32, %c0_i32_0 : i32, i32
  }
  func.func @transform_1(%arg0: i32) -> (i32, i32) {
    %c0_i32 = arith.constant 0 : i32
    %c0_i32_0 = arith.constant 0 : i32
    %c0_i32_1 = arith.constant 0 : i32
    return %c0_i32, %c0_i32_0 : i32, i32
  }
  func.func @transform_2(%arg0: i32) -> (i32, i32) {
    %c0_i32 = arith.constant 0 : i32
    %c0_i32_0 = arith.constant 0 : i32
    %c0_i32_1 = arith.constant 0 : i32
    return %c0_i32, %c0_i32_0 : i32, i32
  }
  func.func @transform_3(%arg0: i32) -> (i32, i32) {
    %c0_i32 = arith.constant 0 : i32
    %c0_i32_0 = arith.constant 0 : i32
    %c0_i32_1 = arith.constant 0 : i32
    return %c0_i32, %c0_i32_0 : i32, i32
  }
  func.func @transform_4(%arg0: i32) -> (i32, i32) {
    %c0_i32 = arith.constant 0 : i32
    %c0_i32_0 = arith.constant 0 : i32
    %c0_i32_1 = arith.constant 0 : i32
    return %c0_i32, %c0_i32_0 : i32, i32
  }
  func.func @transform_5(%arg0: i32) -> (i32, i32) {
    %c0_i32 = arith.constant 0 : i32
    %c0_i32_0 = arith.constant 0 : i32
    %c0_i32_1 = arith.constant 0 : i32
    return %c0_i32, %c0_i32_0 : i32, i32
  }
  func.func @transform_6(%arg0: i32) -> (i32, i32) {
    %c0_i32 = arith.constant 0 : i32
    %c0_i32_0 = arith.constant 0 : i32
    %c0_i32_1 = arith.constant 0 : i32
    return %c0_i32, %c0_i32_0 : i32, i32
  }
  func.func @transform_7(%arg0: i32) -> (i32, i32, i32) {
    %c0_i32 = arith.constant 0 : i32
    %c0_i32_0 = arith.constant 0 : i32
    %c0_i32_1 = arith.constant 0 : i32
    %c0_i32_2 = arith.constant 0 : i32
    return %c0_i32, %c0_i32_0, %c0_i32_1 : i32, i32, i32
  }
}

</mosaic_0001>

<llo_original>
// kernel: textcnn_forward.1
$region0: #{textcnn_forward.1}
  #allocation0 [shape = 'u32[]', space=smem, size = 0x4, offset = 0x4, fixed_abs, tag = 'smem constant byte address 0x4 - core index']
  #allocation1 [shape = 'u32[144,128]{1,0:T(1,128)}', space=vmem, size = 0x12000, scoped, tag = 'internal scratch']
  %s0 = inlined_call_operand.vmem [shape: f32[400,10], index: 0, kind: input, shape index: {}]
  %s1 = inlined_call_operand.vmem [shape: f32[10,586], index: 1, kind: input, shape index: {}]
  %s2 = inlined_call_operand.vmem [shape: bf16[586,320], index: 2, kind: input, shape index: {}]
  %s3 = inlined_call_operand.vmem [shape: f32[20,200], index: 3, kind: input, shape index: {}]
  %s4 = inlined_call_operand.vmem [shape: f32[20,1], index: 4, kind: input, shape index: {}]
  %s5 = inlined_call_operand.vmem [shape: f32[4,6], index: 5, kind: input, shape index: {}]
  %s6 = inlined_call_operand.vmem [shape: f32[4,1], index: 6, kind: input, shape index: {}]
  %s7 = inlined_call_operand.hbm [shape: f32[2,4,20], index: 7, kind: output, shape index: {}]
  %s8 = sld [smem:[#allocation0]]
  $region38: #{textcnn_forward.1} parent=0
    _
  %s10 = ssub.s32 1, %s8
  %s11 = scalar_select 0, %s10, %s8
  $region1: #{textcnn_forward.1} parent=0
    #allocation2 [shape = 'u8[4096]{0}', space=vmem, size = 0x1000, scoped, tag = 'output window, operand 0, single buffered']
    #allocation3 [shape = 's32[1]{0}', space=sflag, size = 0x4, scoped, tag = 'scoped memory for textcnn_forward.1']
    %12 = vsyncpa [#allocation3], 0
    // Predicated region
    $region2: #{textcnn_forward.1} parent=1 // pred_check
      _
    $region3: #{textcnn_forward.1} parent=1 // pred_check_branch
      %14 = sbr.rel (0) target = $region5
    $region4: #{textcnn_forward.1} parent=1 // pred_region
      _
    $region5: #{textcnn_forward.1} parent=1 // pred_fallthru
      _
    // Predicated region
    $region6: #{textcnn_forward.1} parent=1 // pred_check
      _
    $region7: #{textcnn_forward.1} parent=1 // pred_check_branch
      %16 = sbr.rel (0) target = $region9
    $region8: #{textcnn_forward.1} parent=1 // pred_region
      _
    $region9: #{textcnn_forward.1} parent=1 // pred_fallthru
      _
    // Predicated region
    $region10: #{textcnn_forward.1} parent=1 // pred_check
      _
    $region11: #{textcnn_forward.1} parent=1 // pred_check_branch
      %18 = sbr.rel (0) target = $region13
    $region12: #{textcnn_forward.1} parent=1 // pred_region
      _
    $region13: #{textcnn_forward.1} parent=1 // pred_fallthru
      _
    // Predicated region
    $region14: #{textcnn_forward.1} parent=1 // pred_check
      _
    $region15: #{textcnn_forward.1} parent=1 // pred_check_branch
      %20 = sbr.rel (0) target = $region17
    $region16: #{textcnn_forward.1} parent=1 // pred_region
      _
    $region17: #{textcnn_forward.1} parent=1 // pred_fallthru
      _
    // Predicated region
    $region18: #{textcnn_forward.1} parent=1 // pred_check
      _
    $region19: #{textcnn_forward.1} parent=1 // pred_check_branch
      %22 = sbr.rel (0) target = $region21
    $region20: #{textcnn_forward.1} parent=1 // pred_region
      _
    $region21: #{textcnn_forward.1} parent=1 // pred_fallthru
      _
    // Predicated region
    $region22: #{textcnn_forward.1} parent=1 // pred_check
      _
    $region23: #{textcnn_forward.1} parent=1 // pred_check_branch
      %24 = sbr.rel (0) target = $region25
    $region24: #{textcnn_forward.1} parent=1 // pred_region
      _
    $region25: #{textcnn_forward.1} parent=1 // pred_fallthru
      _
    // Predicated region
    $region26: #{textcnn_forward.1} parent=1 // pred_check
      _
    $region27: #{textcnn_forward.1} parent=1 // pred_check_branch
      %26 = sbr.rel (0) target = $region29
    $region28: #{textcnn_forward.1} parent=1 // pred_region
      _
    $region29: #{textcnn_forward.1} parent=1 // pred_fallthru
      _
    %v28 = vld [vmem:[%s0] sm:$0xff]
    %v29 = vld [vmem:[%s0 + $0x8] sm:$0xff]
    %v30 = vld [vmem:[%s0 + $0x10] sm:$0xff]
    %v31 = vld [vmem:[%s0 + $0x18] sm:$0xff]
    %v32 = vld [vmem:[%s0 + $0x20] sm:$0xff]
    %v33 = vld [vmem:[%s0 + $0x28] sm:$0xff]
    %v34 = vld [vmem:[%s0 + $0x30] sm:$0xff]
    %v35 = vld [vmem:[%s0 + $0x38] sm:$0xff]
    %v36 = vld [vmem:[%s0 + $0x40] sm:$0xff]
    %v37 = vld [vmem:[%s0 + $0x48] sm:$0xff]
    %v38 = vld [vmem:[%s0 + $0x50] sm:$0xff]
    %v39 = vld [vmem:[%s0 + $0x58] sm:$0xff]
    %v40 = vld [vmem:[%s0 + $0x60] sm:$0xff]
    %v41 = vld [vmem:[%s0 + $0x68] sm:$0xff]
    %v42 = vld [vmem:[%s0 + $0x70] sm:$0xff]
    %v43 = vld [vmem:[%s0 + $0x78] sm:$0xff]
    %v44 = vld [vmem:[%s0 + $0x80] sm:$0xff]
    %v45 = vld [vmem:[%s0 + $0x88] sm:$0xff]
    %v46 = vld [vmem:[%s0 + $0x90] sm:$0xff]
    %v47 = vld [vmem:[%s0 + $0x98] sm:$0xff]
    %v48 = vld [vmem:[%s0 + $0xa0] sm:$0xff]
    %v49 = vld [vmem:[%s0 + $0xa8] sm:$0xff]
    %v50 = vld [vmem:[%s0 + $0xb0] sm:$0xff]
    %v51 = vld [vmem:[%s0 + $0xb8] sm:$0xff]
    %v52 = vld [vmem:[%s0 + $0xc0] sm:$0xff]
    %v53 = vld [vmem:[%s0 + $0xc8] sm:$0xff]
    %v54 = vld [vmem:[%s0 + $0xd0] sm:$0xff]
    %v55 = vld [vmem:[%s0 + $0xd8] sm:$0xff]
    %v56 = vld [vmem:[%s0 + $0xe0] sm:$0xff]
    %v57 = vld [vmem:[%s0 + $0xe8] sm:$0xff]
    %v58 = vld [vmem:[%s0 + $0xf0] sm:$0xff]
    %v59 = vld [vmem:[%s0 + $0xf8] sm:$0xff]
    %v60 = vld [vmem:[%s0 + $0x100] sm:$0xff]
    %v61 = vld [vmem:[%s0 + $0x108] sm:$0xff]
    %v62 = vld [vmem:[%s0 + $0x110] sm:$0xff]
    %v63 = vld [vmem:[%s0 + $0x118] sm:$0xff]
    %v64 = vld [vmem:[%s0 + $0x120] sm:$0xff]
    %v65 = vld [vmem:[%s0 + $0x128] sm:$0xff]
    %v66 = vld [vmem:[%s0 + $0x130] sm:$0xff]
    %v67 = vld [vmem:[%s0 + $0x138] sm:$0xff]
    %v68 = vld [vmem:[%s0 + $0x140] sm:$0xff]
    %v69 = vld [vmem:[%s0 + $0x148] sm:$0xff]
    %v70 = vld [vmem:[%s0 + $0x150] sm:$0xff]
    %v71 = vld [vmem:[%s0 + $0x158] sm:$0xff]
    %v72 = vld [vmem:[%s0 + $0x160] sm:$0xff]
    %v73 = vld [vmem:[%s0 + $0x168] sm:$0xff]
    %v74 = vld [vmem:[%s0 + $0x170] sm:$0xff]
    %v75 = vld [vmem:[%s0 + $0x178] sm:$0xff]
    %v76 = vld [vmem:[%s0 + $0x180] sm:$0xff]
    %v77 = vld [vmem:[%s0 + $0x188] sm:$0xff]
    %v78 = vld [vmem:[%s1] sm:$0xff]
    %v79 = vld [vmem:[%s1 + $0x8] sm:$0xff]
    %v80 = vld [vmem:[%s1 + $0x10] sm:$0xff]
    %v81 = vld [vmem:[%s1 + $0x18] sm:$0xff]
    %v82 = vld [vmem:[%s1 + $0x20] sm:$0xff]
    %v83 = vld [vmem:[%s1 + $0x28] sm:$0x3]
    %v84 = vld [vmem:[%s1 + $0x30] sm:$0x3]
    %v85 = vld [vmem:[%s1 + $0x38] sm:$0x3]
    %v86 = vld [vmem:[%s1 + $0x40] sm:$0x3]
    %v87 = vld [vmem:[%s1 + $0x48] sm:$0x3]
    %vm88 = vcmask 80896
    %v90 = vsel %vm88, %v28, 0
    %v93 = vsel %vm88, %v29, 0
    %v96 = vsel %vm88, %v30, 0
    %v99 = vsel %vm88, %v31, 0
    %v102 = vsel %vm88, %v32, 0
    %v105 = vsel %vm88, %v33, 0
    %v108 = vsel %vm88, %v34, 0
    %v111 = vsel %vm88, %v35, 0
    %v114 = vsel %vm88, %v36, 0
    %v117 = vsel %vm88, %v37, 0
    %v120 = vsel %vm88, %v38, 0
    %v123 = vsel %vm88, %v39, 0
    %v126 = vsel %vm88, %v40, 0
    %v129 = vsel %vm88, %v41, 0
    %v132 = vsel %vm88, %v42, 0
    %v135 = vsel %vm88, %v43, 0
    %v138 = vsel %vm88, %v44, 0
    %v141 = vsel %vm88, %v45, 0
    %v144 = vsel %vm88, %v46, 0
    %v147 = vsel %vm88, %v47, 0
    %v150 = vsel %vm88, %v48, 0
    %v153 = vsel %vm88, %v49, 0
    %v156 = vsel %vm88, %v50, 0
    %v159 = vsel %vm88, %v51, 0
    %v162 = vsel %vm88, %v52, 0
    %v165 = vsel %vm88, %v53, 0
    %v168 = vsel %vm88, %v54, 0
    %v171 = vsel %vm88, %v55, 0
    %v174 = vsel %vm88, %v56, 0
    %v177 = vsel %vm88, %v57, 0
    %v180 = vsel %vm88, %v58, 0
    %v183 = vsel %vm88, %v59, 0
    %v186 = vsel %vm88, %v60, 0
    %v189 = vsel %vm88, %v61, 0
    %v192 = vsel %vm88, %v62, 0
    %v195 = vsel %vm88, %v63, 0
    %v198 = vsel %vm88, %v64, 0
    %v201 = vsel %vm88, %v65, 0
    %v204 = vsel %vm88, %v66, 0
    %v207 = vsel %vm88, %v67, 0
    %v210 = vsel %vm88, %v68, 0
    %v213 = vsel %vm88, %v69, 0
    %v216 = vsel %vm88, %v70, 0
    %v219 = vsel %vm88, %v71, 0
    %v222 = vsel %vm88, %v72, 0
    %v225 = vsel %vm88, %v73, 0
    %v228 = vsel %vm88, %v74, 0
    %v231 = vsel %vm88, %v75, 0
    %v234 = vsel %vm88, %v76, 0
    %v237 = vsel %vm88, %v77, 0
    %vm239 = vcmask 1041408
    %v241 = vsel %vm239, %v83, 0
    %v244 = vsel %vm239, %v84, 0
    %v247 = vsel %vm239, %v85, 0
    %v250 = vsel %vm239, %v86, 0
    %v253 = vsel %vm239, %v87, 0
    %255 = vmatprep.subr.mxu0 %v79
    %256 = vmatpush1.msra.mxu0 %v78
    %257 = vmatprep.subr.mxu0 %v244
    %258 = vmatpush1.msra.mxu0 %v241
    %259 = vmatprep.subr.mxu0 0.0
    %260 = vmatpush1.msra.mxu0 0.0
    %261 = vmatprep.subr.mxu0 0.0
    %262 = vmatpush1.msra.mxu0 0.0
    %263 = vmatprep.subr.mxu0 0.0
    %264 = vmatpush1.msra.mxu0 0.0
    %265 = vmatprep.subr.mxu0 0.0
    %266 = vmatpush1.msra.mxu0 0.0
    %267 = vmatprep.subr.mxu0 0.0
    %268 = vmatpush1.msra.mxu0 0.0
    %269 = vmatprep.subr.mxu0 0.0
    %270 = vmatpush1.msra.mxu0 0.0
    %271 = vmatprep.subr.mxu0 0.0
    %272 = vmatpush1.msra.mxu0 0.0
    %273 = vmatprep.subr.mxu0 0.0
    %274 = vmatpush1.msra.mxu0 0.0
    %275 = vmatprep.subr.mxu0 0.0
    %276 = vmatpush1.msra.mxu0 0.0
    %277 = vmatprep.subr.mxu0 0.0
    %278 = vmatpush1.msra.mxu0 0.0
    %279 = vmatprep.subr.mxu0 0.0
    %280 = vmatpush1.msra.mxu0 0.0
    %281 = vmatprep.subr.mxu0 0.0
    %282 = vmatpush1.msra.mxu0 0.0
    %283 = vmatprep.subr.mxu0 0.0
    %284 = vmatpush1.msra.mxu0 0.0
    %285 = vmatprep.subr.mxu0 0.0
    %286 = vmatpush1.msra.mxu0 0.0
    %287 = vmatprep.subr.mxu0 0.0
    %288 = vmatpush1.msra.mxu0 0.0
    %289 = vmatprep.subr.mxu0 0.0
    %290 = vmatpush1.msra.mxu0 0.0
    %291 = vmatprep.subr.mxu0 0.0
    %292 = vmatpush1.msra.mxu0 0.0
    %293 = vmatprep.subr.mxu0 0.0
    %294 = vmatpush1.msra.mxu0 0.0
    %295 = vmatprep.subr.mxu0 0.0
    %296 = vmatpush1.msra.mxu0 0.0
    %297 = vmatprep.subr.mxu0 0.0
    %298 = vmatpush1.msra.mxu0 0.0
    %299 = vmatprep.subr.mxu0 0.0
    %300 = vmatpush1.msra.mxu0 0.0
    %301 = vmatprep.subr.mxu0 0.0
    %302 = vmatpush1.msra.mxu0 0.0
    %303 = vmatprep.subr.mxu0 0.0
    %304 = vmatpush1.msra.mxu0 0.0
    %305 = vmatprep.subr.mxu0 0.0
    %306 = vmatpush1.msra.mxu0 0.0
    %307 = vmatprep.subr.mxu0 0.0
    %308 = vmatpush1.msra.mxu0 0.0
    %309 = vmatprep.subr.mxu0 0.0
    %310 = vmatpush1.msra.mxu0 0.0
    %311 = vmatprep.subr.mxu0 0.0
    %312 = vmatpush1.msra.mxu0 0.0
    %313 = vmatprep.subr.mxu0 0.0
    %314 = vmatpush1.msra.mxu0 0.0
    %315 = vmatprep.subr.mxu0 0.0
    %316 = vmatpush1.msra.mxu0 0.0
    %317 = vmatprep.subr.mxu0 0.0
    %318 = vmatpush1.msra.mxu0 0.0
    %319 = vmatprep.mubr.f32.mxu0 0.0
    %320 = vmatmul.mubr.f32.gmra.mrb[0].mxu0 %v90
    %v321 = vpop.f32.mrb[0].mxu0
    %v322 = vadd.f32 0.0, %v321
    %v323 = vpop.f32.mrb[0].mxu0
    %v324 = vadd.f32 0.0, %v323
    %325 = vmatprep.mubr.f32.mxu0 0.0
    %326 = vmatmul.mubr.f32.gmra.mrb[0].mxu0 %v93
    %v327 = vpop.f32.mrb[0].mxu0
    %v328 = vadd.f32 0.0, %v327
    %v329 = vpop.f32.mrb[0].mxu0
    %v330 = vadd.f32 0.0, %v329
    %331 = vmatprep.mubr.f32.mxu0 0.0
    %332 = vmatmul.mubr.f32.gmra.mrb[0].mxu0 %v96
    %v333 = vpop.f32.mrb[0].mxu0
    %v334 = vadd.f32 0.0, %v333
    %v335 = vpop.f32.mrb[0].mxu0
    %v336 = vadd.f32 0.0, %v335
    %337 = vmatprep.mubr.f32.mxu0 0.0
    %338 = vmatmul.mubr.f32.gmra.mrb[0].mxu0 %v99
    %v339 = vpop.f32.mrb[0].mxu0
    %v340 = vadd.f32 0.0, %v339
    %v341 = vpop.f32.mrb[0].mxu0
    %v342 = vadd.f32 0.0, %v341
    %343 = vmatprep.mubr.f32.mxu0 0.0
    %344 = vmatmul.mubr.f32.gmra.mrb[0].mxu0 %v102
    %v345 = vpop.f32.mrb[0].mxu0
    %v346 = vadd.f32 0.0, %v345
    %v347 = vpop.f32.mrb[0].mxu0
    %v348 = vadd.f32 0.0, %v347
    %349 = vmatprep.mubr.f32.mxu0 0.0
    %350 = vmatmul.mubr.f32.gmra.mrb[0].mxu0 %v105
    %v351 = vpop.f32.mrb[0].mxu0
    %v352 = vadd.f32 0.0, %v351
    %v353 = vpop.f32.mrb[0].mxu0
    %v354 = vadd.f32 0.0, %v353
    %355 = vmatprep.mubr.f32.mxu0 0.0
    %356 = vmatmul.mubr.f32.gmra.mrb[0].mxu0 %v108
    %v357 = vpop.f32.mrb[0].mxu0
    %v358 = vadd.f32 0.0, %v357
    %v359 = vpop.f32.mrb[0].mxu0
    %v360 = vadd.f32 0.0, %v359
    %361 = vmatprep.mubr.f32.mxu0 0.0
    %362 = vmatmul.mubr.f32.gmra.mrb[0].mxu0 %v111
    %v363 = vpop.f32.mrb[0].mxu0
    %v364 = vadd.f32 0.0, %v363
    %v365 = vpop.f32.mrb[0].mxu0
    %v366 = vadd.f32 0.0, %v365
    %367 = vmatprep.mubr.f32.mxu0 0.0
    %368 = vmatmul.mubr.f32.gmra.mrb[0].mxu0 %v114
    %v369 = vpop.f32.mrb[0].mxu0
    %v370 = vadd.f32 0.0, %v369
    %v371 = vpop.f32.mrb[0].mxu0
    %v372 = vadd.f32 0.0, %v371
    %373 = vmatprep.mubr.f32.mxu0 0.0
    %374 = vmatmul.mubr.f32.gmra.mrb[0].mxu0 %v117
    %v375 = vpop.f32.mrb[0].mxu0
    %v376 = vadd.f32 0.0, %v375
    %v377 = vpop.f32.mrb[0].mxu0
    %v378 = vadd.f32 0.0, %v377
    %379 = vmatprep.mubr.f32.mxu0 0.0
    %380 = vmatmul.mubr.f32.gmra.mrb[0].mxu0 %v120
    %v381 = vpop.f32.mrb[0].mxu0
    %v382 = vadd.f32 0.0, %v381
    %v383 = vpop.f32.mrb[0].mxu0
    %v384 = vadd.f32 0.0, %v383
    %385 = vmatprep.mubr.f32.mxu0 0.0
    %386 = vmatmul.mubr.f32.gmra.mrb[0].mxu0 %v123
    %v387 = vpop.f32.mrb[0].mxu0
    %v388 = vadd.f32 0.0, %v387
    %v389 = vpop.f32.mrb[0].mxu0
    %v390 = vadd.f32 0.0, %v389
    %391 = vmatprep.mubr.f32.mxu0 0.0
    %392 = vmatmul.mubr.f32.gmra.mrb[0].mxu0 %v126
    %v393 = vpop.f32.mrb[0].mxu0
    %v394 = vadd.f32 0.0, %v393
    %v395 = vpop.f32.mrb[0].mxu0
    %v396 = vadd.f32 0.0, %v395
    %397 = vmatprep.mubr.f32.mxu0 0.0
    %398 = vmatmul.mubr.f32.gmra.mrb[0].mxu0 %v129
    %v399 = vpop.f32.mrb[0].mxu0
    %v400 = vadd.f32 0.0, %v399
    %v401 = vpop.f32.mrb[0].mxu0
    %v402 = vadd.f32 0.0, %v401
    %403 = vmatprep.mubr.f32.mxu0 0.0
    %404 = vmatmul.mubr.f32.gmra.mrb[0].mxu0 %v132
    %v405 = vpop.f32.mrb[0].mxu0
    %v406 = vadd.f32 0.0, %v405
    %v407 = vpop.f32.mrb[0].mxu0
    %v408 = vadd.f32 0.0, %v407
    %409 = vmatprep.mubr.f32.mxu0 0.0
    %410 = vmatmul.mubr.f32.gmra.mrb[0].mxu0 %v135
    %v411 = vpop.f32.mrb[0].mxu0
    %v412 = vadd.f32 0.0, %v411
    %v413 = vpop.f32.mrb[0].mxu0
    %v414 = vadd.f32 0.0, %v413
    %415 = vmatprep.mubr.f32.mxu0 0.0
    %416 = vmatmul.mubr.f32.gmra.mrb[0].mxu0 %v138
    %v417 = vpop.f32.mrb[0].mxu0
    %v418 = vadd.f32 0.0, %v417
    %v419 = vpop.f32.mrb[0].mxu0
    %v420 = vadd.f32 0.0, %v419
    %421 = vmatprep.mubr.f32.mxu0 0.0
    %422 = vmatmul.mubr.f32.gmra.mrb[0].mxu0 %v141
    %v423 = vpop.f32.mrb[0].mxu0
    %v424 = vadd.f32 0.0, %v423
    %v425 = vpop.f32.mrb[0].mxu0
    %v426 = vadd.f32 0.0, %v425
    %427 = vmatprep.mubr.f32.mxu0 0.0
    %428 = vmatmul.mubr.f32.gmra.mrb[0].mxu0 %v144
    %v429 = vpop.f32.mrb[0].mxu0
    %v430 = vadd.f32 0.0, %v429
    %v431 = vpop.f32.mrb[0].mxu0
    %v432 = vadd.f32 0.0, %v431
    %433 = vmatprep.mubr.f32.mxu0 0.0
    %434 = vmatmul.mubr.f32.gmra.mrb[0].mxu0 %v147
    %v435 = vpop.f32.mrb[0].mxu0
    %v436 = vadd.f32 0.0, %v435
    %v437 = vpop.f32.mrb[0].mxu0
    %v438 = vadd.f32 0.0, %v437
    %439 = vmatprep.mubr.f32.mxu0 0.0
    %440 = vmatmul.mubr.f32.gmra.mrb[0].mxu0 %v150
    %v441 = vpop.f32.mrb[0].mxu0
    %v442 = vadd.f32 0.0, %v441
    %v443 = vpop.f32.mrb[0].mxu0
    %v444 = vadd.f32 0.0, %v443
    %445 = vmatprep.mubr.f32.mxu0 0.0
    %446 = vmatmul.mubr.f32.gmra.mrb[0].mxu0 %v153
    %v447 = vpop.f32.mrb[0].mxu0
    %v448 = vadd.f32 0.0, %v447
    %v449 = vpop.f32.mrb[0].mxu0
    %v450 = vadd.f32 0.0, %v449
    %451 = vmatprep.mubr.f32.mxu0 0.0
    %452 = vmatmul.mubr.f32.gmra.mrb[0].mxu0 %v156
    %v453 = vpop.f32.mrb[0].mxu0
    %v454 = vadd.f32 0.0, %v453
    %v455 = vpop.f32.mrb[0].mxu0
    %v456 = vadd.f32 0.0, %v455
    %457 = vmatprep.mubr.f32.mxu0 0.0
    %458 = vmatmul.mubr.f32.gmra.mrb[0].mxu0 %v159
    %v459 = vpop.f32.mrb[0].mxu0
    %v460 = vadd.f32 0.0, %v459
    %v461 = vpop.f32.mrb[0].mxu0
    %v462 = vadd.f32 0.0, %v461
    %463 = vmatprep.mubr.f32.mxu0 0.0
    %464 = vmatmul.mubr.f32.gmra.mrb[0].mxu0 %v162
    %v465 = vpop.f32.mrb[0].mxu0
    %v466 = vadd.f32 0.0, %v465
    %v467 = vpop.f32.mrb[0].mxu0
    %v468 = vadd.f32 0.0, %v467
    %469 = vmatprep.mubr.f32.mxu0 0.0
    %470 = vmatmul.mubr.f32.gmra.mrb[0].mxu0 %v165
    %v471 = vpop.f32.mrb[0].mxu0
    %v472 = vadd.f32 0.0, %v471
    %v473 = vpop.f32.mrb[0].mxu0
    %v474 = vadd.f32 0.0, %v473
    %475 = vmatprep.mubr.f32.mxu0 0.0
    %476 = vmatmul.mubr.f32.gmra.mrb[0].mxu0 %v168
    %v477 = vpop.f32.mrb[0].mxu0
    %v478 = vadd.f32 0.0, %v477
    %v479 = vpop.f32.mrb[0].mxu0
    %v480 = vadd.f32 0.0, %v479
    %481 = vmatprep.mubr.f32.mxu0 0.0
    %482 = vmatmul.mubr.f32.gmra.mrb[0].mxu0 %v171
    %v483 = vpop.f32.mrb[0].mxu0
    %v484 = vadd.f32 0.0, %v483
    %v485 = vpop.f32.mrb[0].mxu0
    %v486 = vadd.f32 0.0, %v485
    %487 = vmatprep.mubr.f32.mxu0 0.0
    %488 = vmatmul.mubr.f32.gmra.mrb[0].mxu0 %v174
    %v489 = vpop.f32.mrb[0].mxu0
    %v490 = vadd.f32 0.0, %v489
    %v491 = vpop.f32.mrb[0].mxu0
    %v492 = vadd.f32 0.0, %v491
    %493 = vmatprep.mubr.f32.mxu0 0.0
    %494 = vmatmul.mubr.f32.gmra.mrb[0].mxu0 %v177
    %v495 = vpop.f32.mrb[0].mxu0
    %v496 = vadd.f32 0.0, %v495
    %v497 = vpop.f32.mrb[0].mxu0
    %v498 = vadd.f32 0.0, %v497
    %499 = vmatprep.mubr.f32.mxu0 0.0
    %500 = vmatmul.mubr.f32.gmra.mrb[0].mxu0 %v180
    %v501 = vpop.f32.mrb[0].mxu0
    %v502 = vadd.f32 0.0, %v501
    %v503 = vpop.f32.mrb[0].mxu0
    %v504 = vadd.f32 0.0, %v503
    %505 = vmatprep.mubr.f32.mxu0 0.0
    %506 = vmatmul.mubr.f32.gmra.mrb[0].mxu0 %v183
    %v507 = vpop.f32.mrb[0].mxu0
    %v508 = vadd.f32 0.0, %v507
    %v509 = vpop.f32.mrb[0].mxu0
    %v510 = vadd.f32 0.0, %v509
    %511 = vmatprep.mubr.f32.mxu0 0.0
    %512 = vmatmul.mubr.f32.gmra.mrb[0].mxu0 %v186
    %v513 = vpop.f32.mrb[0].mxu0
    %v514 = vadd.f32 0.0, %v513
    %v515 = vpop.f32.mrb[0].mxu0
    %v516 = vadd.f32 0.0, %v515
    %517 = vmatprep.mubr.f32.mxu0 0.0
    %518 = vmatmul.mubr.f32.gmra.mrb[0].mxu0 %v189
    %v519 = vpop.f32.mrb[0].mxu0
    %v520 = vadd.f32 0.0, %v519
    %v521 = vpop.f32.mrb[0].mxu0
    %v522 = vadd.f32 0.0, %v521
    %523 = vmatprep.mubr.f32.mxu0 0.0
    %524 = vmatmul.mubr.f32.gmra.mrb[0].mxu0 %v192
    %v525 = vpop.f32.mrb[0].mxu0
    %v526 = vadd.f32 0.0, %v525
    %v527 = vpop.f32.mrb[0].mxu0
    %v528 = vadd.f32 0.0, %v527
    %529 = vmatprep.mubr.f32.mxu0 0.0
    %530 = vmatmul.mubr.f32.gmra.mrb[0].mxu0 %v195
    %v531 = vpop.f32.mrb[0].mxu0
    %v532 = vadd.f32 0.0, %v531
    %v533 = vpop.f32.mrb[0].mxu0
    %v534 = vadd.f32 0.0, %v533
    %535 = vmatprep.mubr.f32.mxu0 0.0
    %536 = vmatmul.mubr.f32.gmra.mrb[0].mxu0 %v198
    %v537 = vpop.f32.mrb[0].mxu0
    %v538 = vadd.f32 0.0, %v537
    %v539 = vpop.f32.mrb[0].mxu0
    %v540 = vadd.f32 0.0, %v539
    %541 = vmatprep.mubr.f32.mxu0 0.0
    %542 = vmatmul.mubr.f32.gmra.mrb[0].mxu0 %v201
    %v543 = vpop.f32.mrb[0].mxu0
    %v544 = vadd.f32 0.0, %v543
    %v545 = vpop.f32.mrb[0].mxu0
    %v546 = vadd.f32 0.0, %v545
    %547 = vmatprep.mubr.f32.mxu0 0.0
    %548 = vmatmul.mubr.f32.gmra.mrb[0].mxu0 %v204
    %v549 = vpop.f32.mrb[0].mxu0
    %v550 = vadd.f32 0.0, %v549
    %v551 = vpop.f32.mrb[0].mxu0
    %v552 = vadd.f32 0.0, %v551
    %553 = vmatprep.mubr.f32.mxu0 0.0
    %554 = vmatmul.mubr.f32.gmra.mrb[0].mxu0 %v207
    %v555 = vpop.f32.mrb[0].mxu0
    %v556 = vadd.f32 0.0, %v555
    %v557 = vpop.f32.mrb[0].mxu0
    %v558 = vadd.f32 0.0, %v557
    %559 = vmatprep.mubr.f32.mxu0 0.0
    %560 = vmatmul.mubr.f32.gmra.mrb[0].mxu0 %v210
    %v561 = vpop.f32.mrb[0].mxu0
    %v562 = vadd.f32 0.0, %v561
    %v563 = vpop.f32.mrb[0].mxu0
    %v564 = vadd.f32 0.0, %v563
    %565 = vmatprep.mubr.f32.mxu0 0.0
    %566 = vmatmul.mubr.f32.gmra.mrb[0].mxu0 %v213
    %v567 = vpop.f32.mrb[0].mxu0
    %v568 = vadd.f32 0.0, %v567
    %v569 = vpop.f32.mrb[0].mxu0
    %v570 = vadd.f32 0.0, %v569
    %571 = vmatprep.mubr.f32.mxu0 0.0
    %572 = vmatmul.mubr.f32.gmra.mrb[0].mxu0 %v216
    %v573 = vpop.f32.mrb[0].mxu0
    %v574 = vadd.f32 0.0, %v573
    %v575 = vpop.f32.mrb[0].mxu0
    %v576 = vadd.f32 0.0, %v575
    %577 = vmatprep.mubr.f32.mxu0 0.0
    %578 = vmatmul.mubr.f32.gmra.mrb[0].mxu0 %v219
    %v579 = vpop.f32.mrb[0].mxu0
    %v580 = vadd.f32 0.0, %v579
    %v581 = vpop.f32.mrb[0].mxu0
    %v582 = vadd.f32 0.0, %v581
    %583 = vmatprep.mubr.f32.mxu0 0.0
    %584 = vmatmul.mubr.f32.gmra.mrb[0].mxu0 %v222
    %v585 = vpop.f32.mrb[0].mxu0
    %v586 = vadd.f32 0.0, %v585
    %v587 = vpop.f32.mrb[0].mxu0
    %v588 = vadd.f32 0.0, %v587
    %589 = vmatprep.mubr.f32.mxu0 0.0
    %590 = vmatmul.mubr.f32.gmra.mrb[0].mxu0 %v225
    %v591 = vpop.f32.mrb[0].mxu0
    %v592 = vadd.f32 0.0, %v591
    %v593 = vpop.f32.mrb[0].mxu0
    %v594 = vadd.f32 0.0, %v593
    %595 = vmatprep.mubr.f32.mxu0 0.0
    %596 = vmatmul.mubr.f32.gmra.mrb[0].mxu0 %v228
    %v597 = vpop.f32.mrb[0].mxu0
    %v598 = vadd.f32 0.0, %v597
    %v599 = vpop.f32.mrb[0].mxu0
    %v600 = vadd.f32 0.0, %v599
    %601 = vmatprep.mubr.f32.mxu0 0.0
    %602 = vmatmul.mubr.f32.gmra.mrb[0].mxu0 %v231
    %v603 = vpop.f32.mrb[0].mxu0
    %v604 = vadd.f32 0.0, %v603
    %v605 = vpop.f32.mrb[0].mxu0
    %v606 = vadd.f32 0.0, %v605
    %607 = vmatprep.mubr.f32.mxu0 0.0
    %608 = vmatmul.mubr.f32.gmra.mrb[0].mxu0 %v234
    %v609 = vpop.f32.mrb[0].mxu0
    %v610 = vadd.f32 0.0, %v609
    %v611 = vpop.f32.mrb[0].mxu0
    %v612 = vadd.f32 0.0, %v611
    %613 = vmatprep.mubr.f32.mxu0 0.0
    %614 = vmatmul.mubr.f32.gmra.mrb[0].mxu0 %v237
    %v615 = vpop.f32.mrb[0].mxu0
    %v616 = vadd.f32 0.0, %v615
    %v617 = vpop.f32.mrb[0].mxu0
    %v618 = vadd.f32 0.0, %v617
    %619 = vdwg.mxu0
    %620 = vmatprep.subr.mxu0 %v81
    %621 = vmatpush1.msra.mxu0 %v80
    %622 = vmatprep.subr.mxu0 %v250
    %623 = vmatpush1.msra.mxu0 %v247
    %624 = vmatprep.subr.mxu0 0.0
    %625 = vmatpush1.msra.mxu0 0.0
    %626 = vmatprep.subr.mxu0 0.0
    %627 = vmatpush1.msra.mxu0 0.0
    %628 = vmatprep.subr.mxu0 0.0
    %629 = vmatpush1.msra.mxu0 0.0
    %630 = vmatprep.subr.mxu0 0.0
    %631 = vmatpush1.msra.mxu0 0.0
    %632 = vmatprep.subr.mxu0 0.0
    %633 = vmatpush1.msra.mxu0 0.0
    %634 = vmatprep.subr.mxu0 0.0
    %635 = vmatpush1.msra.mxu0 0.0
    %636 = vmatprep.subr.mxu0 0.0
    %637 = vmatpush1.msra.mxu0 0.0
    %638 = vmatprep.subr.mxu0 0.0
    %639 = vmatpush1.msra.mxu0 0.0
    %640 = vmatprep.subr.mxu0 0.0
    %641 = vmatpush1.msra.mxu0 0.0
    %642 = vmatprep.subr.mxu0 0.0
    %643 = vmatpush1.msra.mxu0 0.0
    %644 = vmatprep.subr.mxu0 0.0
    %645 = vmatpush1.msra.mxu0 0.0
    %646 = vmatprep.subr.mxu0 0.0
    %647 = vmatpush1.msra.mxu0 0.0
    %648 = vmatprep.subr.mxu0 0.0
    %649 = vmatpush1.msra.mxu0 0.0
    %650 = vmatprep.subr.mxu0 0.0
    %651 = vmatpush1.msra.mxu0 0.0
    %652 = vmatprep.subr.mxu0 0.0
    %653 = vmatpush1.msra.mxu0 0.0
    %654 = vmatprep.subr.mxu0 0.0
    %655 = vmatpush1.msra.mxu0 0.0
    %656 = vmatprep.subr.mxu0 0.0
    %657 = vmatpush1.msra.mxu0 0.0
    %658 = vmatprep.subr.mxu0 0.0
    %659 = vmatpush1.msra.mxu0 0.0
    %660 = vmatprep.subr.mxu0 0.0
    %661 = vmatpush1.msra.mxu0 0.0
    %662 = vmatprep.subr.mxu0 0.0
    %663 = vmatpush1.msra.mxu0 0.0
    %664 = vmatprep.subr.mxu0 0.0
    %665 = vmatpush1.msra.mxu0 0.0
    %666 = vmatprep.subr.mxu0 0.0
    %667 = vmatpush1.msra.mxu0 0.0
    %668 = vmatprep.subr.mxu0 0.0
    %669 = vmatpush1.msra.mxu0 0.0
    %670 = vmatprep.subr.mxu0 0.0
    %671 = vmatpush1.msra.mxu0 0.0
    %672 = vmatprep.subr.mxu0 0.0
    %673 = vmatpush1.msra.mxu0 0.0
    %674 = vmatprep.subr.mxu0 0.0
    %675 = vmatpush1.msra.mxu0 0.0
    %676 = vmatprep.subr.mxu0 0.0
    %677 = vmatpush1.msra.mxu0 0.0
    %678 = vmatprep.subr.mxu0 0.0
    %679 = vmatpush1.msra.mxu0 0.0
    %680 = vmatprep.subr.mxu0 0.0
    %681 = vmatpush1.msra.mxu0 0.0
    %682 = vmatprep.subr.mxu0 0.0
    %683 = vmatpush1.msra.mxu0 0.0
    %684 = vmatprep.mubr.f32.mxu0 0.0
    %685 = vmatmul.mubr.f32.gmra.mrb[0].mxu0 %v90
    %v686 = vpop.f32.mrb[0].mxu0
    %v687 = vadd.f32 0.0, %v686
    %v688 = vpop.f32.mrb[0].mxu0
    %v689 = vadd.f32 0.0, %v688
    %690 = vmatprep.mubr.f32.mxu0 0.0
    %691 = vmatmul.mubr.f32.gmra.mrb[0].mxu0 %v93
    %v692 = vpop.f32.mrb[0].mxu0
    %v693 = vadd.f32 0.0, %v692
    %v694 = vpop.f32.mrb[0].mxu0
    %v695 = vadd.f32 0.0, %v694
    %696 = vmatprep.mubr.f32.mxu0 0.0
    %697 = vmatmul.mubr.f32.gmra.mrb[0].mxu0 %v96
    %v698 = vpop.f32.mrb[0].mxu0
    %v699 = vadd.f32 0.0, %v698
    %v700 = vpop.f32.mrb[0].mxu0
    %v701 = vadd.f32 0.0, %v700
    %702 = vmatprep.mubr.f32.mxu0 0.0
    %703 = vmatmul.mubr.f32.gmra.mrb[0].mxu0 %v99
    %v704 = vpop.f32.mrb[0].mxu0
    %v705 = vadd.f32 0.0, %v704
    %v706 = vpop.f32.mrb[0].mxu0
    %v707 = vadd.f32 0.0, %v706
    %708 = vmatprep.mubr.f32.mxu0 0.0
    %709 = vmatmul.mubr.f32.gmra.mrb[0].mxu0 %v102
    %v710 = vpop.f32.mrb[0].mxu0
    %v711 = vadd.f32 0.0, %v710
    %v712 = vpop.f32.mrb[0].mxu0
    %v713 = vadd.f32 0.0, %v712
    %714 = vmatprep.mubr.f32.mxu0 0.0
    %715 = vmatmul.mubr.f32.gmra.mrb[0].mxu0 %v105
    %v716 = vpop.f32.mrb[0].mxu0
    %v717 = vadd.f32 0.0, %v716
    %v718 = vpop.f32.mrb[0].mxu0
    %v719 = vadd.f32 0.0, %v718
    %720 = vmatprep.mubr.f32.mxu0 0.0
    %721 = vmatmul.mubr.f32.gmra.mrb[0].mxu0 %v108
    %v722 = vpop.f32.mrb[0].mxu0
    %v723 = vadd.f32 0.0, %v722
    %v724 = vpop.f32.mrb[0].mxu0
    %v725 = vadd.f32 0.0, %v724
    %726 = vmatprep.mubr.f32.mxu0 0.0
    %727 = vmatmul.mubr.f32.gmra.mrb[0].mxu0 %v111
    %v728 = vpop.f32.mrb[0].mxu0
    %v729 = vadd.f32 0.0, %v728
    %v730 = vpop.f32.mrb[0].mxu0
    %v731 = vadd.f32 0.0, %v730
    %732 = vmatprep.mubr.f32.mxu0 0.0
    %733 = vmatmul.mubr.f32.gmra.mrb[0].mxu0 %v114
    %v734 = vpop.f32.mrb[0].mxu0
    %v735 = vadd.f32 0.0, %v734
    %v736 = vpop.f32.mrb[0].mxu0
    %v737 = vadd.f32 0.0, %v736
    %738 = vmatprep.mubr.f32.mxu0 0.0
    %739 = vmatmul.mubr.f32.gmra.mrb[0].mxu0 %v117
    %v740 = vpop.f32.mrb[0].mxu0
    %v741 = vadd.f32 0.0, %v740
    %v742 = vpop.f32.mrb[0].mxu0
    %v743 = vadd.f32 0.0, %v742
    %744 = vmatprep.mubr.f32.mxu0 0.0
    %745 = vmatmul.mubr.f32.gmra.mrb[0].mxu0 %v120
    %v746 = vpop.f32.mrb[0].mxu0
    %v747 = vadd.f32 0.0, %v746
    %v748 = vpop.f32.mrb[0].mxu0
    %v749 = vadd.f32 0.0, %v748
    %750 = vmatprep.mubr.f32.mxu0 0.0
    %751 = vmatmul.mubr.f32.gmra.mrb[0].mxu0 %v123
    %v752 = vpop.f32.mrb[0].mxu0
    %v753 = vadd.f32 0.0, %v752
    %v754 = vpop.f32.mrb[0].mxu0
    %v755 = vadd.f32 0.0, %v754
    %756 = vmatprep.mubr.f32.mxu0 0.0
    %757 = vmatmul.mubr.f32.gmra.mrb[0].mxu0 %v126
    %v758 = vpop.f32.mrb[0].mxu0
    %v759 = vadd.f32 0.0, %v758
    %v760 = vpop.f32.mrb[0].mxu0
    %v761 = vadd.f32 0.0, %v760
    %762 = vmatprep.mubr.f32.mxu0 0.0
    %763 = vmatmul.mubr.f32.gmra.mrb[0].mxu0 %v129
    %v764 = vpop.f32.mrb[0].mxu0
    %v765 = vadd.f32 0.0, %v764
    %v766 = vpop.f32.mrb[0].mxu0
    %v767 = vadd.f32 0.0, %v766
    %768 = vmatprep.mubr.f32.mxu0 0.0
    %769 = vmatmul.mubr.f32.gmra.mrb[0].mxu0 %v132
    %v770 = vpop.f32.mrb[0].mxu0
    %v771 = vadd.f32 0.0, %v770
    %v772 = vpop.f32.mrb[0].mxu0
    %v773 = vadd.f32 0.0, %v772
    %774 = vmatprep.mubr.f32.mxu0 0.0
    %775 = vmatmul.mubr.f32.gmra.mrb[0].mxu0 %v135
    %v776 = vpop.f32.mrb[0].mxu0
    %v777 = vadd.f32 0.0, %v776
    %v778 = vpop.f32.mrb[0].mxu0
    %v779 = vadd.f32 0.0, %v778
    %780 = vmatprep.mubr.f32.mxu0 0.0
    %781 = vmatmul.mubr.f32.gmra.mrb[0].mxu0 %v138
    %v782 = vpop.f32.mrb[0].mxu0
    %v783 = vadd.f32 0.0, %v782
    %v784 = vpop.f32.mrb[0].mxu0
    %v785 = vadd.f32 0.0, %v784
    %786 = vmatprep.mubr.f32.mxu0 0.0
    %787 = vmatmul.mubr.f32.gmra.mrb[0].mxu0 %v141
    %v788 = vpop.f32.mrb[0].mxu0
    %v789 = vadd.f32 0.0, %v788
    %v790 = vpop.f32.mrb[0].mxu0
    %v791 = vadd.f32 0.0, %v790
    %792 = vmatprep.mubr.f32.mxu0 0.0
    %793 = vmatmul.mubr.f32.gmra.mrb[0].mxu0 %v144
    %v794 = vpop.f32.mrb[0].mxu0
    %v795 = vadd.f32 0.0, %v794
    %v796 = vpop.f32.mrb[0].mxu0
    %v797 = vadd.f32 0.0, %v796
    %798 = vmatprep.mubr.f32.mxu0 0.0
    %799 = vmatmul.mubr.f32.gmra.mrb[0].mxu0 %v147
    %v800 = vpop.f32.mrb[0].mxu0
    %v801 = vadd.f32 0.0, %v800
    %v802 = vpop.f32.mrb[0].mxu0
    %v803 = vadd.f32 0.0, %v802
    %804 = vmatprep.mubr.f32.mxu0 0.0
    %805 = vmatmul.mubr.f32.gmra.mrb[0].mxu0 %v150
    %v806 = vpop.f32.mrb[0].mxu0
    %v807 = vadd.f32 0.0, %v806
    %v808 = vpop.f32.mrb[0].mxu0
    %v809 = vadd.f32 0.0, %v808
    %810 = vmatprep.mubr.f32.mxu0 0.0
    %811 = vmatmul.mubr.f32.gmra.mrb[0].mxu0 %v153
    %v812 = vpop.f32.mrb[0].mxu0
    %v813 = vadd.f32 0.0, %v812
    %v814 = vpop.f32.mrb[0].mxu0
    %v815 = vadd.f32 0.0, %v814
    %816 = vmatprep.mubr.f32.mxu0 0.0
    %817 = vmatmul.mubr.f32.gmra.mrb[0].mxu0 %v156
    %v818 = vpop.f32.mrb[0].mxu0
    %v819 = vadd.f32 0.0, %v818
    %v820 = vpop.f32.mrb[0].mxu0
    %v821 = vadd.f32 0.0, %v820
    %822 = vmatprep.mubr.f32.mxu0 0.0
    %823 = vmatmul.mubr.f32.gmra.mrb[0].mxu0 %v159
    %v824 = vpop.f32.mrb[0].mxu0
    %v825 = vadd.f32 0.0, %v824
    %v826 = vpop.f32.mrb[0].mxu0
    %v827 = vadd.f32 0.0, %v826
    %828 = vmatprep.mubr.f32.mxu0 0.0
    %829 = vmatmul.mubr.f32.gmra.mrb[0].mxu0 %v162
    %v830 = vpop.f32.mrb[0].mxu0
    %v831 = vadd.f32 0.0, %v830
    %v832 = vpop.f32.mrb[0].mxu0
    %v833 = vadd.f32 0.0, %v832
    %834 = vmatprep.mubr.f32.mxu0 0.0
    %835 = vmatmul.mubr.f32.gmra.mrb[0].mxu0 %v165
    %v836 = vpop.f32.mrb[0].mxu0
    %v837 = vadd.f32 0.0, %v836
    %v838 = vpop.f32.mrb[0].mxu0
    %v839 = vadd.f32 0.0, %v838
    %840 = vmatprep.mubr.f32.mxu0 0.0
    %841 = vmatmul.mubr.f32.gmra.mrb[0].mxu0 %v168
    %v842 = vpop.f32.mrb[0].mxu0
    %v843 = vadd.f32 0.0, %v842
    %v844 = vpop.f32.mrb[0].mxu0
    %v845 = vadd.f32 0.0, %v844
    %846 = vmatprep.mubr.f32.mxu0 0.0
    %847 = vmatmul.mubr.f32.gmra.mrb[0].mxu0 %v171
    %v848 = vpop.f32.mrb[0].mxu0
    %v849 = vadd.f32 0.0, %v848
    %v850 = vpop.f32.mrb[0].mxu0
    %v851 = vadd.f32 0.0, %v850
    %852 = vmatprep.mubr.f32.mxu0 0.0
    %853 = vmatmul.mubr.f32.gmra.mrb[0].mxu0 %v174
    %v854 = vpop.f32.mrb[0].mxu0
    %v855 = vadd.f32 0.0, %v854
    %v856 = vpop.f32.mrb[0].mxu0
    %v857 = vadd.f32 0.0, %v856
    %858 = vmatprep.mubr.f32.mxu0 0.0
    %859 = vmatmul.mubr.f32.gmra.mrb[0].mxu0 %v177
    %v860 = vpop.f32.mrb[0].mxu0
    %v861 = vadd.f32 0.0, %v860
    %v862 = vpop.f32.mrb[0].mxu0
    %v863 = vadd.f32 0.0, %v862
    %864 = vmatprep.mubr.f32.mxu0 0.0
    %865 = vmatmul.mubr.f32.gmra.mrb[0].mxu0 %v180
    %v866 = vpop.f32.mrb[0].mxu0
    %v867 = vadd.f32 0.0, %v866
    %v868 = vpop.f32.mrb[0].mxu0
    %v869 = vadd.f32 0.0, %v868
    %870 = vmatprep.mubr.f32.mxu0 0.0
    %871 = vmatmul.mubr.f32.gmra.mrb[0].mxu0 %v183
    %v872 = vpop.f32.mrb[0].mxu0
    %v873 = vadd.f32 0.0, %v872
    %v874 = vpop.f32.mrb[0].mxu0
    %v875 = vadd.f32 0.0, %v874
    %876 = vmatprep.mubr.f32.mxu0 0.0
    %877 = vmatmul.mubr.f32.gmra.mrb[0].mxu0 %v186
    %v878 = vpop.f32.mrb[0].mxu0
    %v879 = vadd.f32 0.0, %v878
    %v880 = vpop.f32.mrb[0].mxu0
    %v881 = vadd.f32 0.0, %v880
    %882 = vmatprep.mubr.f32.mxu0 0.0
    %883 = vmatmul.mubr.f32.gmra.mrb[0].mxu0 %v189
    %v884 = vpop.f32.mrb[0].mxu0
    %v885 = vadd.f32 0.0, %v884
    %v886 = vpop.f32.mrb[0].mxu0
    %v887 = vadd.f32 0.0, %v886
    %888 = vmatprep.mubr.f32.mxu0 0.0
    %889 = vmatmul.mubr.f32.gmra.mrb[0].mxu0 %v192
    %v890 = vpop.f32.mrb[0].mxu0
    %v891 = vadd.f32 0.0, %v890
    %v892 = vpop.f32.mrb[0].mxu0
    %v893 = vadd.f32 0.0, %v892
    %894 = vmatprep.mubr.f32.mxu0 0.0
    %895 = vmatmul.mubr.f32.gmra.mrb[0].mxu0 %v195
    %v896 = vpop.f32.mrb[0].mxu0
    %v897 = vadd.f32 0.0, %v896
    %v898 = vpop.f32.mrb[0].mxu0
    %v899 = vadd.f32 0.0, %v898
    %900 = vmatprep.mubr.f32.mxu0 0.0
    %901 = vmatmul.mubr.f32.gmra.mrb[0].mxu0 %v198
    %v902 = vpop.f32.mrb[0].mxu0
    %v903 = vadd.f32 0.0, %v902
    %v904 = vpop.f32.mrb[0].mxu0
    %v905 = vadd.f32 0.0, %v904
    %906 = vmatprep.mubr.f32.mxu0 0.0
    %907 = vmatmul.mubr.f32.gmra.mrb[0].mxu0 %v201
    %v908 = vpop.f32.mrb[0].mxu0
    %v909 = vadd.f32 0.0, %v908
    %v910 = vpop.f32.mrb[0].mxu0
    %v911 = vadd.f32 0.0, %v910
    %912 = vmatprep.mubr.f32.mxu0 0.0
    %913 = vmatmul.mubr.f32.gmra.mrb[0].mxu0 %v204
    %v914 = vpop.f32.mrb[0].mxu0
    %v915 = vadd.f32 0.0, %v914
    %v916 = vpop.f32.mrb[0].mxu0
    %v917 = vadd.f32 0.0, %v916
    %918 = vmatprep.mubr.f32.mxu0 0.0
    %919 = vmatmul.mubr.f32.gmra.mrb[0].mxu0 %v207
    %v920 = vpop.f32.mrb[0].mxu0
    %v921 = vadd.f32 0.0, %v920
    %v922 = vpop.f32.mrb[0].mxu0
    %v923 = vadd.f32 0.0, %v922
    %924 = vmatprep.mubr.f32.mxu0 0.0
    %925 = vmatmul.mubr.f32.gmra.mrb[0].mxu0 %v210
    %v926 = vpop.f32.mrb[0].mxu0
    %v927 = vadd.f32 0.0, %v926
    %v928 = vpop.f32.mrb[0].mxu0
    %v929 = vadd.f32 0.0, %v928
    %930 = vmatprep.mubr.f32.mxu0 0.0
    %931 = vmatmul.mubr.f32.gmra.mrb[0].mxu0 %v213
    %v932 = vpop.f32.mrb[0].mxu0
    %v933 = vadd.f32 0.0, %v932
    %v934 = vpop.f32.mrb[0].mxu0
    %v935 = vadd.f32 0.0, %v934
    %936 = vmatprep.mubr.f32.mxu0 0.0
    %937 = vmatmul.mubr.f32.gmra.mrb[0].mxu0 %v216
    %v938 = vpop.f32.mrb[0].mxu0
    %v939 = vadd.f32 0.0, %v938
    %v940 = vpop.f32.mrb[0].mxu0
    %v941 = vadd.f32 0.0, %v940
    %942 = vmatprep.mubr.f32.mxu0 0.0
    %943 = vmatmul.mubr.f32.gmra.mrb[0].mxu0 %v219
    %v944 = vpop.f32.mrb[0].mxu0
    %v945 = vadd.f32 0.0, %v944
    %v946 = vpop.f32.mrb[0].mxu0
    %v947 = vadd.f32 0.0, %v946
    %948 = vmatprep.mubr.f32.mxu0 0.0
    %949 = vmatmul.mubr.f32.gmra.mrb[0].mxu0 %v222
    %v950 = vpop.f32.mrb[0].mxu0
    %v951 = vadd.f32 0.0, %v950
    %v952 = vpop.f32.mrb[0].mxu0
    %v953 = vadd.f32 0.0, %v952
    %954 = vmatprep.mubr.f32.mxu0 0.0
    %955 = vmatmul.mubr.f32.gmra.mrb[0].mxu0 %v225
    %v956 = vpop.f32.mrb[0].mxu0
    %v957 = vadd.f32 0.0, %v956
    %v958 = vpop.f32.mrb[0].mxu0
    %v959 = vadd.f32 0.0, %v958
    %960 = vmatprep.mubr.f32.mxu0 0.0
    %961 = vmatmul.mubr.f32.gmra.mrb[0].mxu0 %v228
    %v962 = vpop.f32.mrb[0].mxu0
    %v963 = vadd.f32 0.0, %v962
    %v964 = vpop.f32.mrb[0].mxu0
    %v965 = vadd.f32 0.0, %v964
    %966 = vmatprep.mubr.f32.mxu0 0.0
    %967 = vmatmul.mubr.f32.gmra.mrb[0].mxu0 %v231
    %v968 = vpop.f32.mrb[0].mxu0
    %v969 = vadd.f32 0.0, %v968
    %v970 = vpop.f32.mrb[0].mxu0
    %v971 = vadd.f32 0.0, %v970
    %972 = vmatprep.mubr.f32.mxu0 0.0
    %973 = vmatmul.mubr.f32.gmra.mrb[0].mxu0 %v234
    %v974 = vpop.f32.mrb[0].mxu0
    %v975 = vadd.f32 0.0, %v974
    %v976 = vpop.f32.mrb[0].mxu0
    %v977 = vadd.f32 0.0, %v976
    %978 = vmatprep.mubr.f32.mxu0 0.0
    %979 = vmatmul.mubr.f32.gmra.mrb[0].mxu0 %v237
    %v980 = vpop.f32.mrb[0].mxu0
    %v981 = vadd.f32 0.0, %v980
    %v982 = vpop.f32.mrb[0].mxu0
    %v983 = vadd.f32 0.0, %v982
    %984 = vdwg.mxu0
    %985 = vmatprep.subr.mxu0 0.0
    %986 = vmatpush1.msra.mxu0 %v82
    %987 = vmatprep.subr.mxu0 0.0
    %988 = vmatpush1.msra.mxu0 %v253
    %989 = vmatprep.subr.mxu0 0.0
    %990 = vmatpush1.msra.mxu0 0.0
    %991 = vmatprep.subr.mxu0 0.0
    %992 = vmatpush1.msra.mxu0 0.0
    %993 = vmatprep.subr.mxu0 0.0
    %994 = vmatpush1.msra.mxu0 0.0
    %995 = vmatprep.subr.mxu0 0.0
    %996 = vmatpush1.msra.mxu0 0.0
    %997 = vmatprep.subr.mxu0 0.0
    %998 = vmatpush1.msra.mxu0 0.0
    %999 = vmatprep.subr.mxu0 0.0
    %1000 = vmatpush1.msra.mxu0 0.0
    %1001 = vmatprep.subr.mxu0 0.0
    %1002 = vmatpush1.msra.mxu0 0.0
    %1003 = vmatprep.subr.mxu0 0.0
    %1004 = vmatpush1.msra.mxu0 0.0
    %1005 = vmatprep.subr.mxu0 0.0
    %1006 = vmatpush1.msra.mxu0 0.0
    %1007 = vmatprep.subr.mxu0 0.0
    %1008 = vmatpush1.msra.mxu0 0.0
    %1009 = vmatprep.subr.mxu0 0.0
    %1010 = vmatpush1.msra.mxu0 0.0
    %1011 = vmatprep.subr.mxu0 0.0
    %1012 = vmatpush1.msra.mxu0 0.0
    %1013 = vmatprep.subr.mxu0 0.0
    %1014 = vmatpush1.msra.mxu0 0.0
    %1015 = vmatprep.subr.mxu0 0.0
    %1016 = vmatpush1.msra.mxu0 0.0
    %1017 = vmatprep.subr.mxu0 0.0
    %1018 = vmatpush1.msra.mxu0 0.0
    %1019 = vmatprep.subr.mxu0 0.0
    %1020 = vmatpush1.msra.mxu0 0.0
    %1021 = vmatprep.subr.mxu0 0.0
    %1022 = vmatpush1.msra.mxu0 0.0
    %1023 = vmatprep.subr.mxu0 0.0
    %1024 = vmatpush1.msra.mxu0 0.0
    %1025 = vmatprep.subr.mxu0 0.0
    %1026 = vmatpush1.msra.mxu0 0.0
    %1027 = vmatprep.subr.mxu0 0.0
    %1028 = vmatpush1.msra.mxu0 0.0
    %1029 = vmatprep.subr.mxu0 0.0
    %1030 = vmatpush1.msra.mxu0 0.0
    %1031 = vmatprep.subr.mxu0 0.0
    %1032 = vmatpush1.msra.mxu0 0.0
    %1033 = vmatprep.subr.mxu0 0.0
    %1034 = vmatpush1.msra.mxu0 0.0
    %1035 = vmatprep.subr.mxu0 0.0
    %1036 = vmatpush1.msra.mxu0 0.0
    %1037 = vmatprep.subr.mxu0 0.0
    %1038 = vmatpush1.msra.mxu0 0.0
    %1039 = vmatprep.subr.mxu0 0.0
    %1040 = vmatpush1.msra.mxu0 0.0
    %1041 = vmatprep.subr.mxu0 0.0
    %1042 = vmatpush1.msra.mxu0 0.0
    %1043 = vmatprep.subr.mxu0 0.0
    %1044 = vmatpush1.msra.mxu0 0.0
    %1045 = vmatprep.subr.mxu0 0.0
    %1046 = vmatpush1.msra.mxu0 0.0
    %1047 = vmatprep.subr.mxu0 0.0
    %1048 = vmatpush1.msra.mxu0 0.0
    %1049 = vmatprep.mubr.f32.mxu0 0.0
    %1050 = vmatmul.mubr.f32.gmra.mrb[0].mxu0 %v90
    %v1051 = vpop.f32.mrb[0].mxu0
    %v1052 = vadd.f32 0.0, %v1051
    %v1053 = vpop.f32.mrb[0].mxu0
    %1054 = vmatprep.mubr.f32.mxu0 0.0
    %1055 = vmatmul.mubr.f32.gmra.mrb[0].mxu0 %v93
    %v1056 = vpop.f32.mrb[0].mxu0
    %v1057 = vadd.f32 0.0, %v1056
    %v1058 = vpop.f32.mrb[0].mxu0
    %1059 = vmatprep.mubr.f32.mxu0 0.0
    %1060 = vmatmul.mubr.f32.gmra.mrb[0].mxu0 %v96
    %v1061 = vpop.f32.mrb[0].mxu0
    %v1062 = vadd.f32 0.0, %v1061
    %v1063 = vpop.f32.mrb[0].mxu0
    %1064 = vmatprep.mubr.f32.mxu0 0.0
    %1065 = vmatmul.mubr.f32.gmra.mrb[0].mxu0 %v99
    %v1066 = vpop.f32.mrb[0].mxu0
    %v1067 = vadd.f32 0.0, %v1066
    %v1068 = vpop.f32.mrb[0].mxu0
    %1069 = vmatprep.mubr.f32.mxu0 0.0
    %1070 = vmatmul.mubr.f32.gmra.mrb[0].mxu0 %v102
    %v1071 = vpop.f32.mrb[0].mxu0
    %v1072 = vadd.f32 0.0, %v1071
    %v1073 = vpop.f32.mrb[0].mxu0
    %1074 = vmatprep.mubr.f32.mxu0 0.0
    %1075 = vmatmul.mubr.f32.gmra.mrb[0].mxu0 %v105
    %v1076 = vpop.f32.mrb[0].mxu0
    %v1077 = vadd.f32 0.0, %v1076
    %v1078 = vpop.f32.mrb[0].mxu0
    %1079 = vmatprep.mubr.f32.mxu0 0.0
    %1080 = vmatmul.mubr.f32.gmra.mrb[0].mxu0 %v108
    %v1081 = vpop.f32.mrb[0].mxu0
    %v1082 = vadd.f32 0.0, %v1081
    %v1083 = vpop.f32.mrb[0].mxu0
    %1084 = vmatprep.mubr.f32.mxu0 0.0
    %1085 = vmatmul.mubr.f32.gmra.mrb[0].mxu0 %v111
    %v1086 = vpop.f32.mrb[0].mxu0
    %v1087 = vadd.f32 0.0, %v1086
    %v1088 = vpop.f32.mrb[0].mxu0
    %1089 = vmatprep.mubr.f32.mxu0 0.0
    %1090 = vmatmul.mubr.f32.gmra.mrb[0].mxu0 %v114
    %v1091 = vpop.f32.mrb[0].mxu0
    %v1092 = vadd.f32 0.0, %v1091
    %v1093 = vpop.f32.mrb[0].mxu0
    %1094 = vmatprep.mubr.f32.mxu0 0.0
    %1095 = vmatmul.mubr.f32.gmra.mrb[0].mxu0 %v117
    %v1096 = vpop.f32.mrb[0].mxu0
    %v1097 = vadd.f32 0.0, %v1096
    %v1098 = vpop.f32.mrb[0].mxu0
    %1099 = vmatprep.mubr.f32.mxu0 0.0
    %1100 = vmatmul.mubr.f32.gmra.mrb[0].mxu0 %v120
    %v1101 = vpop.f32.mrb[0].mxu0
    %v1102 = vadd.f32 0.0, %v1101
    %v1103 = vpop.f32.mrb[0].mxu0
    %1104 = vmatprep.mubr.f32.mxu0 0.0
    %1105 = vmatmul.mubr.f32.gmra.mrb[0].mxu0 %v123
    %v1106 = vpop.f32.mrb[0].mxu0
    %v1107 = vadd.f32 0.0, %v1106
    %v1108 = vpop.f32.mrb[0].mxu0
    %1109 = vmatprep.mubr.f32.mxu0 0.0
    %1110 = vmatmul.mubr.f32.gmra.mrb[0].mxu0 %v126
    %v1111 = vpop.f32.mrb[0].mxu0
    %v1112 = vadd.f32 0.0, %v1111
    %v1113 = vpop.f32.mrb[0].mxu0
    %1114 = vmatprep.mubr.f32.mxu0 0.0
    %1115 = vmatmul.mubr.f32.gmra.mrb[0].mxu0 %v129
    %v1116 = vpop.f32.mrb[0].mxu0
    %v1117 = vadd.f32 0.0, %v1116
    %v1118 = vpop.f32.mrb[0].mxu0
    %1119 = vmatprep.mubr.f32.mxu0 0.0
    %1120 = vmatmul.mubr.f32.gmra.mrb[0].mxu0 %v132
    %v1121 = vpop.f32.mrb[0].mxu0
    %v1122 = vadd.f32 0.0, %v1121
    %v1123 = vpop.f32.mrb[0].mxu0
    %1124 = vmatprep.mubr.f32.mxu0 0.0
    %1125 = vmatmul.mubr.f32.gmra.mrb[0].mxu0 %v135
    %v1126 = vpop.f32.mrb[0].mxu0
    %v1127 = vadd.f32 0.0, %v1126
    %v1128 = vpop.f32.mrb[0].mxu0
    %1129 = vmatprep.mubr.f32.mxu0 0.0
    %1130 = vmatmul.mubr.f32.gmra.mrb[0].mxu0 %v138
    %v1131 = vpop.f32.mrb[0].mxu0
    %v1132 = vadd.f32 0.0, %v1131
    %v1133 = vpop.f32.mrb[0].mxu0
    %1134 = vmatprep.mubr.f32.mxu0 0.0
    %1135 = vmatmul.mubr.f32.gmra.mrb[0].mxu0 %v141
    %v1136 = vpop.f32.mrb[0].mxu0
    %v1137 = vadd.f32 0.0, %v1136
    %v1138 = vpop.f32.mrb[0].mxu0
    %1139 = vmatprep.mubr.f32.mxu0 0.0
    %1140 = vmatmul.mubr.f32.gmra.mrb[0].mxu0 %v144
    %v1141 = vpop.f32.mrb[0].mxu0
    %v1142 = vadd.f32 0.0, %v1141
    %v1143 = vpop.f32.mrb[0].mxu0
    %1144 = vmatprep.mubr.f32.mxu0 0.0
    %1145 = vmatmul.mubr.f32.gmra.mrb[0].mxu0 %v147
    %v1146 = vpop.f32.mrb[0].mxu0
    %v1147 = vadd.f32 0.0, %v1146
    %v1148 = vpop.f32.mrb[0].mxu0
    %1149 = vmatprep.mubr.f32.mxu0 0.0
    %1150 = vmatmul.mubr.f32.gmra.mrb[0].mxu0 %v150
    %v1151 = vpop.f32.mrb[0].mxu0
    %v1152 = vadd.f32 0.0, %v1151
    %v1153 = vpop.f32.mrb[0].mxu0
    %1154 = vmatprep.mubr.f32.mxu0 0.0
    %1155 = vmatmul.mubr.f32.gmra.mrb[0].mxu0 %v153
    %v1156 = vpop.f32.mrb[0].mxu0
    %v1157 = vadd.f32 0.0, %v1156
    %v1158 = vpop.f32.mrb[0].mxu0
    %1159 = vmatprep.mubr.f32.mxu0 0.0
    %1160 = vmatmul.mubr.f32.gmra.mrb[0].mxu0 %v156
    %v1161 = vpop.f32.mrb[0].mxu0
    %v1162 = vadd.f32 0.0, %v1161
    %v1163 = vpop.f32.mrb[0].mxu0
    %1164 = vmatprep.mubr.f32.mxu0 0.0
    %1165 = vmatmul.mubr.f32.gmra.mrb[0].mxu0 %v159
    %v1166 = vpop.f32.mrb[0].mxu0
    %v1167 = vadd.f32 0.0, %v1166
    %v1168 = vpop.f32.mrb[0].mxu0
    %1169 = vmatprep.mubr.f32.mxu0 0.0
    %1170 = vmatmul.mubr.f32.gmra.mrb[0].mxu0 %v162
    %v1171 = vpop.f32.mrb[0].mxu0
    %v1172 = vadd.f32 0.0, %v1171
    %v1173 = vpop.f32.mrb[0].mxu0
    %1174 = vmatprep.mubr.f32.mxu0 0.0
    %1175 = vmatmul.mubr.f32.gmra.mrb[0].mxu0 %v165
    %v1176 = vpop.f32.mrb[0].mxu0
    %v1177 = vadd.f32 0.0, %v1176
    %v1178 = vpop.f32.mrb[0].mxu0
    %1179 = vmatprep.mubr.f32.mxu0 0.0
    %1180 = vmatmul.mubr.f32.gmra.mrb[0].mxu0 %v168
    %v1181 = vpop.f32.mrb[0].mxu0
    %v1182 = vadd.f32 0.0, %v1181
    %v1183 = vpop.f32.mrb[0].mxu0
    %1184 = vmatprep.mubr.f32.mxu0 0.0
    %1185 = vmatmul.mubr.f32.gmra.mrb[0].mxu0 %v171
    %v1186 = vpop.f32.mrb[0].mxu0
    %v1187 = vadd.f32 0.0, %v1186
    %v1188 = vpop.f32.mrb[0].mxu0
    %1189 = vmatprep.mubr.f32.mxu0 0.0
    %1190 = vmatmul.mubr.f32.gmra.mrb[0].mxu0 %v174
    %v1191 = vpop.f32.mrb[0].mxu0
    %v1192 = vadd.f32 0.0, %v1191
    %v1193 = vpop.f32.mrb[0].mxu0
    %1194 = vmatprep.mubr.f32.mxu0 0.0
    %1195 = vmatmul.mubr.f32.gmra.mrb[0].mxu0 %v177
    %v1196 = vpop.f32.mrb[0].mxu0
    %v1197 = vadd.f32 0.0, %v1196
    %v1198 = vpop.f32.mrb[0].mxu0
    %1199 = vmatprep.mubr.f32.mxu0 0.0
    %1200 = vmatmul.mubr.f32.gmra.mrb[0].mxu0 %v180
    %v1201 = vpop.f32.mrb[0].mxu0
    %v1202 = vadd.f32 0.0, %v1201
    %v1203 = vpop.f32.mrb[0].mxu0
    %1204 = vmatprep.mubr.f32.mxu0 0.0
    %1205 = vmatmul.mubr.f32.gmra.mrb[0].mxu0 %v183
    %v1206 = vpop.f32.mrb[0].mxu0
    %v1207 = vadd.f32 0.0, %v1206
    %v1208 = vpop.f32.mrb[0].mxu0
    %1209 = vmatprep.mubr.f32.mxu0 0.0
    %1210 = vmatmul.mubr.f32.gmra.mrb[0].mxu0 %v186
    %v1211 = vpop.f32.mrb[0].mxu0
    %v1212 = vadd.f32 0.0, %v1211
    %v1213 = vpop.f32.mrb[0].mxu0
    %1214 = vmatprep.mubr.f32.mxu0 0.0
    %1215 = vmatmul.mubr.f32.gmra.mrb[0].mxu0 %v189
    %v1216 = vpop.f32.mrb[0].mxu0
    %v1217 = vadd.f32 0.0, %v1216
    %v1218 = vpop.f32.mrb[0].mxu0
    %1219 = vmatprep.mubr.f32.mxu0 0.0
    %1220 = vmatmul.mubr.f32.gmra.mrb[0].mxu0 %v192
    %v1221 = vpop.f32.mrb[0].mxu0
    %v1222 = vadd.f32 0.0, %v1221
    %v1223 = vpop.f32.mrb[0].mxu0
    %1224 = vmatprep.mubr.f32.mxu0 0.0
    %1225 = vmatmul.mubr.f32.gmra.mrb[0].mxu0 %v195
    %v1226 = vpop.f32.mrb[0].mxu0
    %v1227 = vadd.f32 0.0, %v1226
    %v1228 = vpop.f32.mrb[0].mxu0
    %1229 = vmatprep.mubr.f32.mxu0 0.0
    %1230 = vmatmul.mubr.f32.gmra.mrb[0].mxu0 %v198
    %v1231 = vpop.f32.mrb[0].mxu0
    %v1232 = vadd.f32 0.0, %v1231
    %v1233 = vpop.f32.mrb[0].mxu0
    %1234 = vmatprep.mubr.f32.mxu0 0.0
    %1235 = vmatmul.mubr.f32.gmra.mrb[0].mxu0 %v201
    %v1236 = vpop.f32.mrb[0].mxu0
    %v1237 = vadd.f32 0.0, %v1236
    %v1238 = vpop.f32.mrb[0].mxu0
    %1239 = vmatprep.mubr.f32.mxu0 0.0
    %1240 = vmatmul.mubr.f32.gmra.mrb[0].mxu0 %v204
    %v1241 = vpop.f32.mrb[0].mxu0
    %v1242 = vadd.f32 0.0, %v1241
    %v1243 = vpop.f32.mrb[0].mxu0
    %1244 = vmatprep.mubr.f32.mxu0 0.0
    %1245 = vmatmul.mubr.f32.gmra.mrb[0].mxu0 %v207
    %v1246 = vpop.f32.mrb[0].mxu0
    %v1247 = vadd.f32 0.0, %v1246
    %v1248 = vpop.f32.mrb[0].mxu0
    %1249 = vmatprep.mubr.f32.mxu0 0.0
    %1250 = vmatmul.mubr.f32.gmra.mrb[0].mxu0 %v210
    %v1251 = vpop.f32.mrb[0].mxu0
    %v1252 = vadd.f32 0.0, %v1251
    %v1253 = vpop.f32.mrb[0].mxu0
    %1254 = vmatprep.mubr.f32.mxu0 0.0
    %1255 = vmatmul.mubr.f32.gmra.mrb[0].mxu0 %v213
    %v1256 = vpop.f32.mrb[0].mxu0
    %v1257 = vadd.f32 0.0, %v1256
    %v1258 = vpop.f32.mrb[0].mxu0
    %1259 = vmatprep.mubr.f32.mxu0 0.0
    %1260 = vmatmul.mubr.f32.gmra.mrb[0].mxu0 %v216
    %v1261 = vpop.f32.mrb[0].mxu0
    %v1262 = vadd.f32 0.0, %v1261
    %v1263 = vpop.f32.mrb[0].mxu0
    %1264 = vmatprep.mubr.f32.mxu0 0.0
    %1265 = vmatmul.mubr.f32.gmra.mrb[0].mxu0 %v219
    %v1266 = vpop.f32.mrb[0].mxu0
    %v1267 = vadd.f32 0.0, %v1266
    %v1268 = vpop.f32.mrb[0].mxu0
    %1269 = vmatprep.mubr.f32.mxu0 0.0
    %1270 = vmatmul.mubr.f32.gmra.mrb[0].mxu0 %v222
    %v1271 = vpop.f32.mrb[0].mxu0
    %v1272 = vadd.f32 0.0, %v1271
    %v1273 = vpop.f32.mrb[0].mxu0
    %1274 = vmatprep.mubr.f32.mxu0 0.0
    %1275 = vmatmul.mubr.f32.gmra.mrb[0].mxu0 %v225
    %v1276 = vpop.f32.mrb[0].mxu0
    %v1277 = vadd.f32 0.0, %v1276
    %v1278 = vpop.f32.mrb[0].mxu0
    %1279 = vmatprep.mubr.f32.mxu0 0.0
    %1280 = vmatmul.mubr.f32.gmra.mrb[0].mxu0 %v228
    %v1281 = vpop.f32.mrb[0].mxu0
    %v1282 = vadd.f32 0.0, %v1281
    %v1283 = vpop.f32.mrb[0].mxu0
    %1284 = vmatprep.mubr.f32.mxu0 0.0
    %1285 = vmatmul.mubr.f32.gmra.mrb[0].mxu0 %v231
    %v1286 = vpop.f32.mrb[0].mxu0
    %v1287 = vadd.f32 0.0, %v1286
    %v1288 = vpop.f32.mrb[0].mxu0
    %1289 = vmatprep.mubr.f32.mxu0 0.0
    %1290 = vmatmul.mubr.f32.gmra.mrb[0].mxu0 %v234
    %v1291 = vpop.f32.mrb[0].mxu0
    %v1292 = vadd.f32 0.0, %v1291
    %v1293 = vpop.f32.mrb[0].mxu0
    %1294 = vmatprep.mubr.f32.mxu0 0.0
    %1295 = vmatmul.mubr.f32.gmra.mrb[0].mxu0 %v237
    %v1296 = vpop.f32.mrb[0].mxu0
    %v1297 = vadd.f32 0.0, %v1296
    %v1298 = vpop.f32.mrb[0].mxu0
    %1299 = vdwg.mxu0
    %v1300 = vlaneseq
    %v1301 = vand.u32 %v1300, 127
    %v1302 = vadd.s32 %v1301, 128
    %v1303 = vadd.s32 %v1301, 256
    %v1304 = vadd.s32 %v1301, 384
    %v1305 = vadd.s32 %v1301, 512
    %v1306 = vcvt.s32.f32 %v1301
    %v1307 = vcvt.s32.f32 %v1302
    %v1308 = vcvt.s32.f32 %v1303
    %v1309 = vcvt.s32.f32 %v1304
    %v1310 = vcvt.s32.f32 %v1305
    %vm1311 = vcmp.eq.f32.partialorder %v322, %v1306
    %vm1312 = vcmp.eq.f32.partialorder %v324, %v1307
    %vm1313 = vcmp.eq.f32.partialorder %v687, %v1308
    %vm1314 = vcmp.eq.f32.partialorder %v689, %v1309
    %vm1315 = vcmp.eq.f32.partialorder %v1052, %v1310
    %vm1316 = vcmp.eq.f32.partialorder %v328, %v1306
    %vm1317 = vcmp.eq.f32.partialorder %v330, %v1307
    %vm1318 = vcmp.eq.f32.partialorder %v693, %v1308
    %vm1319 = vcmp.eq.f32.partialorder %v695, %v1309
    %vm1320 = vcmp.eq.f32.partialorder %v1057, %v1310
    %vm1321 = vcmp.eq.f32.partialorder %v334, %v1306
    %vm1322 = vcmp.eq.f32.partialorder %v336, %v1307
    %vm1323 = vcmp.eq.f32.partialorder %v699, %v1308
    %vm1324 = vcmp.eq.f32.partialorder %v701, %v1309
    %vm1325 = vcmp.eq.f32.partialorder %v1062, %v1310
    %vm1326 = vcmp.eq.f32.partialorder %v340, %v1306
    %vm1327 = vcmp.eq.f32.partialorder %v342, %v1307
    %vm1328 = vcmp.eq.f32.partialorder %v705, %v1308
    %vm1329 = vcmp.eq.f32.partialorder %v707, %v1309
    %vm1330 = vcmp.eq.f32.partialorder %v1067, %v1310
    %vm1331 = vcmp.eq.f32.partialorder %v346, %v1306
    %vm1332 = vcmp.eq.f32.partialorder %v348, %v1307
    %vm1333 = vcmp.eq.f32.partialorder %v711, %v1308
    %vm1334 = vcmp.eq.f32.partialorder %v713, %v1309
    %vm1335 = vcmp.eq.f32.partialorder %v1072, %v1310
    %vm1336 = vcmp.eq.f32.partialorder %v352, %v1306
    %vm1337 = vcmp.eq.f32.partialorder %v354, %v1307
    %vm1338 = vcmp.eq.f32.partialorder %v717, %v1308
    %vm1339 = vcmp.eq.f32.partialorder %v719, %v1309
    %vm1340 = vcmp.eq.f32.partialorder %v1077, %v1310
    %vm1341 = vcmp.eq.f32.partialorder %v358, %v1306
    %vm1342 = vcmp.eq.f32.partialorder %v360, %v1307
    %vm1343 = vcmp.eq.f32.partialorder %v723, %v1308
    %vm1344 = vcmp.eq.f32.partialorder %v725, %v1309
    %vm1345 = vcmp.eq.f32.partialorder %v1082, %v1310
    %vm1346 = vcmp.eq.f32.partialorder %v364, %v1306
    %vm1347 = vcmp.eq.f32.partialorder %v366, %v1307
    %vm1348 = vcmp.eq.f32.partialorder %v729, %v1308
    %vm1349 = vcmp.eq.f32.partialorder %v731, %v1309
    %vm1350 = vcmp.eq.f32.partialorder %v1087, %v1310
    %vm1351 = vcmp.eq.f32.partialorder %v370, %v1306
    %vm1352 = vcmp.eq.f32.partialorder %v372, %v1307
    %vm1353 = vcmp.eq.f32.partialorder %v735, %v1308
    %vm1354 = vcmp.eq.f32.partialorder %v737, %v1309
    %vm1355 = vcmp.eq.f32.partialorder %v1092, %v1310
    %vm1356 = vcmp.eq.f32.partialorder %v376, %v1306
    %vm1357 = vcmp.eq.f32.partialorder %v378, %v1307
    %vm1358 = vcmp.eq.f32.partialorder %v741, %v1308
    %vm1359 = vcmp.eq.f32.partialorder %v743, %v1309
    %vm1360 = vcmp.eq.f32.partialorder %v1097, %v1310
    %vm1361 = vcmp.eq.f32.partialorder %v382, %v1306
    %vm1362 = vcmp.eq.f32.partialorder %v384, %v1307
    %vm1363 = vcmp.eq.f32.partialorder %v747, %v1308
    %vm1364 = vcmp.eq.f32.partialorder %v749, %v1309
    %vm1365 = vcmp.eq.f32.partialorder %v1102, %v1310
    %vm1366 = vcmp.eq.f32.partialorder %v388, %v1306
    %vm1367 = vcmp.eq.f32.partialorder %v390, %v1307
    %vm1368 = vcmp.eq.f32.partialorder %v753, %v1308
    %vm1369 = vcmp.eq.f32.partialorder %v755, %v1309
    %vm1370 = vcmp.eq.f32.partialorder %v1107, %v1310
    %vm1371 = vcmp.eq.f32.partialorder %v394, %v1306
    %vm1372 = vcmp.eq.f32.partialorder %v396, %v1307
    %vm1373 = vcmp.eq.f32.partialorder %v759, %v1308
    %vm1374 = vcmp.eq.f32.partialorder %v761, %v1309
    %vm1375 = vcmp.eq.f32.partialorder %v1112, %v1310
    %vm1376 = vcmp.eq.f32.partialorder %v400, %v1306
    %vm1377 = vcmp.eq.f32.partialorder %v402, %v1307
    %vm1378 = vcmp.eq.f32.partialorder %v765, %v1308
    %vm1379 = vcmp.eq.f32.partialorder %v767, %v1309
    %vm1380 = vcmp.eq.f32.partialorder %v1117, %v1310
    %vm1381 = vcmp.eq.f32.partialorder %v406, %v1306
    %vm1382 = vcmp.eq.f32.partialorder %v408, %v1307
    %vm1383 = vcmp.eq.f32.partialorder %v771, %v1308
    %vm1384 = vcmp.eq.f32.partialorder %v773, %v1309
    %vm1385 = vcmp.eq.f32.partialorder %v1122, %v1310
    %vm1386 = vcmp.eq.f32.partialorder %v412, %v1306
    %vm1387 = vcmp.eq.f32.partialorder %v414, %v1307
    %vm1388 = vcmp.eq.f32.partialorder %v777, %v1308
    %vm1389 = vcmp.eq.f32.partialorder %v779, %v1309
    %vm1390 = vcmp.eq.f32.partialorder %v1127, %v1310
    %vm1391 = vcmp.eq.f32.partialorder %v418, %v1306
    %vm1392 = vcmp.eq.f32.partialorder %v420, %v1307
    %vm1393 = vcmp.eq.f32.partialorder %v783, %v1308
    %vm1394 = vcmp.eq.f32.partialorder %v785, %v1309
    %vm1395 = vcmp.eq.f32.partialorder %v1132, %v1310
    %vm1396 = vcmp.eq.f32.partialorder %v424, %v1306
    %vm1397 = vcmp.eq.f32.partialorder %v426, %v1307
    %vm1398 = vcmp.eq.f32.partialorder %v789, %v1308
    %vm1399 = vcmp.eq.f32.partialorder %v791, %v1309
    %vm1400 = vcmp.eq.f32.partialorder %v1137, %v1310
    %vm1401 = vcmp.eq.f32.partialorder %v430, %v1306
    %vm1402 = vcmp.eq.f32.partialorder %v432, %v1307
    %vm1403 = vcmp.eq.f32.partialorder %v795, %v1308
    %vm1404 = vcmp.eq.f32.partialorder %v797, %v1309
    %vm1405 = vcmp.eq.f32.partialorder %v1142, %v1310
    %vm1406 = vcmp.eq.f32.partialorder %v436, %v1306
    %vm1407 = vcmp.eq.f32.partialorder %v438, %v1307
    %vm1408 = vcmp.eq.f32.partialorder %v801, %v1308
    %vm1409 = vcmp.eq.f32.partialorder %v803, %v1309
    %vm1410 = vcmp.eq.f32.partialorder %v1147, %v1310
    %vm1411 = vcmp.eq.f32.partialorder %v442, %v1306
    %vm1412 = vcmp.eq.f32.partialorder %v444, %v1307
    %vm1413 = vcmp.eq.f32.partialorder %v807, %v1308
    %vm1414 = vcmp.eq.f32.partialorder %v809, %v1309
    %vm1415 = vcmp.eq.f32.partialorder %v1152, %v1310
    %vm1416 = vcmp.eq.f32.partialorder %v448, %v1306
    %vm1417 = vcmp.eq.f32.partialorder %v450, %v1307
    %vm1418 = vcmp.eq.f32.partialorder %v813, %v1308
    %vm1419 = vcmp.eq.f32.partialorder %v815, %v1309
    %vm1420 = vcmp.eq.f32.partialorder %v1157, %v1310
    %vm1421 = vcmp.eq.f32.partialorder %v454, %v1306
    %vm1422 = vcmp.eq.f32.partialorder %v456, %v1307
    %vm1423 = vcmp.eq.f32.partialorder %v819, %v1308
    %vm1424 = vcmp.eq.f32.partialorder %v821, %v1309
    %vm1425 = vcmp.eq.f32.partialorder %v1162, %v1310
    %vm1426 = vcmp.eq.f32.partialorder %v460, %v1306
    %vm1427 = vcmp.eq.f32.partialorder %v462, %v1307
    %vm1428 = vcmp.eq.f32.partialorder %v825, %v1308
    %vm1429 = vcmp.eq.f32.partialorder %v827, %v1309
    %vm1430 = vcmp.eq.f32.partialorder %v1167, %v1310
    %vm1431 = vcmp.eq.f32.partialorder %v466, %v1306
    %vm1432 = vcmp.eq.f32.partialorder %v468, %v1307
    %vm1433 = vcmp.eq.f32.partialorder %v831, %v1308
    %vm1434 = vcmp.eq.f32.partialorder %v833, %v1309
    %vm1435 = vcmp.eq.f32.partialorder %v1172, %v1310
    %vm1436 = vcmp.eq.f32.partialorder %v472, %v1306
    %vm1437 = vcmp.eq.f32.partialorder %v474, %v1307
    %vm1438 = vcmp.eq.f32.partialorder %v837, %v1308
    %vm1439 = vcmp.eq.f32.partialorder %v839, %v1309
    %vm1440 = vcmp.eq.f32.partialorder %v1177, %v1310
    %vm1441 = vcmp.eq.f32.partialorder %v478, %v1306
    %vm1442 = vcmp.eq.f32.partialorder %v480, %v1307
    %vm1443 = vcmp.eq.f32.partialorder %v843, %v1308
    %vm1444 = vcmp.eq.f32.partialorder %v845, %v1309
    %vm1445 = vcmp.eq.f32.partialorder %v1182, %v1310
    %vm1446 = vcmp.eq.f32.partialorder %v484, %v1306
    %vm1447 = vcmp.eq.f32.partialorder %v486, %v1307
    %vm1448 = vcmp.eq.f32.partialorder %v849, %v1308
    %vm1449 = vcmp.eq.f32.partialorder %v851, %v1309
    %vm1450 = vcmp.eq.f32.partialorder %v1187, %v1310
    %vm1451 = vcmp.eq.f32.partialorder %v490, %v1306
    %vm1452 = vcmp.eq.f32.partialorder %v492, %v1307
    %vm1453 = vcmp.eq.f32.partialorder %v855, %v1308
    %vm1454 = vcmp.eq.f32.partialorder %v857, %v1309
    %vm1455 = vcmp.eq.f32.partialorder %v1192, %v1310
    %vm1456 = vcmp.eq.f32.partialorder %v496, %v1306
    %vm1457 = vcmp.eq.f32.partialorder %v498, %v1307
    %vm1458 = vcmp.eq.f32.partialorder %v861, %v1308
    %vm1459 = vcmp.eq.f32.partialorder %v863, %v1309
    %vm1460 = vcmp.eq.f32.partialorder %v1197, %v1310
    %vm1461 = vcmp.eq.f32.partialorder %v502, %v1306
    %vm1462 = vcmp.eq.f32.partialorder %v504, %v1307
    %vm1463 = vcmp.eq.f32.partialorder %v867, %v1308
    %vm1464 = vcmp.eq.f32.partialorder %v869, %v1309
    %vm1465 = vcmp.eq.f32.partialorder %v1202, %v1310
    %vm1466 = vcmp.eq.f32.partialorder %v508, %v1306
    %vm1467 = vcmp.eq.f32.partialorder %v510, %v1307
    %vm1468 = vcmp.eq.f32.partialorder %v873, %v1308
    %vm1469 = vcmp.eq.f32.partialorder %v875, %v1309
    %vm1470 = vcmp.eq.f32.partialorder %v1207, %v1310
    %vm1471 = vcmp.eq.f32.partialorder %v514, %v1306
    %vm1472 = vcmp.eq.f32.partialorder %v516, %v1307
    %vm1473 = vcmp.eq.f32.partialorder %v879, %v1308
    %vm1474 = vcmp.eq.f32.partialorder %v881, %v1309
    %vm1475 = vcmp.eq.f32.partialorder %v1212, %v1310
    %vm1476 = vcmp.eq.f32.partialorder %v520, %v1306
    %vm1477 = vcmp.eq.f32.partialorder %v522, %v1307
    %vm1478 = vcmp.eq.f32.partialorder %v885, %v1308
    %vm1479 = vcmp.eq.f32.partialorder %v887, %v1309
    %vm1480 = vcmp.eq.f32.partialorder %v1217, %v1310
    %vm1481 = vcmp.eq.f32.partialorder %v526, %v1306
    %vm1482 = vcmp.eq.f32.partialorder %v528, %v1307
    %vm1483 = vcmp.eq.f32.partialorder %v891, %v1308
    %vm1484 = vcmp.eq.f32.partialorder %v893, %v1309
    %vm1485 = vcmp.eq.f32.partialorder %v1222, %v1310
    %vm1486 = vcmp.eq.f32.partialorder %v532, %v1306
    %vm1487 = vcmp.eq.f32.partialorder %v534, %v1307
    %vm1488 = vcmp.eq.f32.partialorder %v897, %v1308
    %vm1489 = vcmp.eq.f32.partialorder %v899, %v1309
    %vm1490 = vcmp.eq.f32.partialorder %v1227, %v1310
    %vm1491 = vcmp.eq.f32.partialorder %v538, %v1306
    %vm1492 = vcmp.eq.f32.partialorder %v540, %v1307
    %vm1493 = vcmp.eq.f32.partialorder %v903, %v1308
    %vm1494 = vcmp.eq.f32.partialorder %v905, %v1309
    %vm1495 = vcmp.eq.f32.partialorder %v1232, %v1310
    %vm1496 = vcmp.eq.f32.partialorder %v544, %v1306
    %vm1497 = vcmp.eq.f32.partialorder %v546, %v1307
    %vm1498 = vcmp.eq.f32.partialorder %v909, %v1308
    %vm1499 = vcmp.eq.f32.partialorder %v911, %v1309
    %vm1500 = vcmp.eq.f32.partialorder %v1237, %v1310
    %vm1501 = vcmp.eq.f32.partialorder %v550, %v1306
    %vm1502 = vcmp.eq.f32.partialorder %v552, %v1307
    %vm1503 = vcmp.eq.f32.partialorder %v915, %v1308
    %vm1504 = vcmp.eq.f32.partialorder %v917, %v1309
    %vm1505 = vcmp.eq.f32.partialorder %v1242, %v1310
    %vm1506 = vcmp.eq.f32.partialorder %v556, %v1306
    %vm1507 = vcmp.eq.f32.partialorder %v558, %v1307
    %vm1508 = vcmp.eq.f32.partialorder %v921, %v1308
    %vm1509 = vcmp.eq.f32.partialorder %v923, %v1309
    %vm1510 = vcmp.eq.f32.partialorder %v1247, %v1310
    %vm1511 = vcmp.eq.f32.partialorder %v562, %v1306
    %vm1512 = vcmp.eq.f32.partialorder %v564, %v1307
    %vm1513 = vcmp.eq.f32.partialorder %v927, %v1308
    %vm1514 = vcmp.eq.f32.partialorder %v929, %v1309
    %vm1515 = vcmp.eq.f32.partialorder %v1252, %v1310
    %vm1516 = vcmp.eq.f32.partialorder %v568, %v1306
    %vm1517 = vcmp.eq.f32.partialorder %v570, %v1307
    %vm1518 = vcmp.eq.f32.partialorder %v933, %v1308
    %vm1519 = vcmp.eq.f32.partialorder %v935, %v1309
    %vm1520 = vcmp.eq.f32.partialorder %v1257, %v1310
    %vm1521 = vcmp.eq.f32.partialorder %v574, %v1306
    %vm1522 = vcmp.eq.f32.partialorder %v576, %v1307
    %vm1523 = vcmp.eq.f32.partialorder %v939, %v1308
    %vm1524 = vcmp.eq.f32.partialorder %v941, %v1309
    %vm1525 = vcmp.eq.f32.partialorder %v1262, %v1310
    %vm1526 = vcmp.eq.f32.partialorder %v580, %v1306
    %vm1527 = vcmp.eq.f32.partialorder %v582, %v1307
    %vm1528 = vcmp.eq.f32.partialorder %v945, %v1308
    %vm1529 = vcmp.eq.f32.partialorder %v947, %v1309
    %vm1530 = vcmp.eq.f32.partialorder %v1267, %v1310
    %vm1531 = vcmp.eq.f32.partialorder %v586, %v1306
    %vm1532 = vcmp.eq.f32.partialorder %v588, %v1307
    %vm1533 = vcmp.eq.f32.partialorder %v951, %v1308
    %vm1534 = vcmp.eq.f32.partialorder %v953, %v1309
    %vm1535 = vcmp.eq.f32.partialorder %v1272, %v1310
    %vm1536 = vcmp.eq.f32.partialorder %v592, %v1306
    %vm1537 = vcmp.eq.f32.partialorder %v594, %v1307
    %vm1538 = vcmp.eq.f32.partialorder %v957, %v1308
    %vm1539 = vcmp.eq.f32.partialorder %v959, %v1309
    %vm1540 = vcmp.eq.f32.partialorder %v1277, %v1310
    %vm1541 = vcmp.eq.f32.partialorder %v598, %v1306
    %vm1542 = vcmp.eq.f32.partialorder %v600, %v1307
    %vm1543 = vcmp.eq.f32.partialorder %v963, %v1308
    %vm1544 = vcmp.eq.f32.partialorder %v965, %v1309
    %vm1545 = vcmp.eq.f32.partialorder %v1282, %v1310
    %vm1546 = vcmp.eq.f32.partialorder %v604, %v1306
    %vm1547 = vcmp.eq.f32.partialorder %v606, %v1307
    %vm1548 = vcmp.eq.f32.partialorder %v969, %v1308
    %vm1549 = vcmp.eq.f32.partialorder %v971, %v1309
    %vm1550 = vcmp.eq.f32.partialorder %v1287, %v1310
    %vm1551 = vcmp.eq.f32.partialorder %v610, %v1306
    %vm1552 = vcmp.eq.f32.partialorder %v612, %v1307
    %vm1553 = vcmp.eq.f32.partialorder %v975, %v1308
    %vm1554 = vcmp.eq.f32.partialorder %v977, %v1309
    %vm1555 = vcmp.eq.f32.partialorder %v1292, %v1310
    %vm1556 = vcmp.eq.f32.partialorder %v616, %v1306
    %vm1557 = vcmp.eq.f32.partialorder %v618, %v1307
    %vm1558 = vcmp.eq.f32.partialorder %v981, %v1308
    %vm1559 = vcmp.eq.f32.partialorder %v983, %v1309
    %vm1560 = vcmp.eq.f32.partialorder %v1297, %v1310
    %v1561 = vsel %vm1311, 1.0, 0.0
    %v1562 = vsel %vm1312, 1.0, 0.0
    %v1563 = vsel %vm1313, 1.0, 0.0
    %v1564 = vsel %vm1314, 1.0, 0.0
    %v1565 = vsel %vm1315, 1.0, 0.0
    %v1566 = vsel %vm1316, 1.0, 0.0
    %v1567 = vsel %vm1317, 1.0, 0.0
    %v1568 = vsel %vm1318, 1.0, 0.0
    %v1569 = vsel %vm1319, 1.0, 0.0
    %v1570 = vsel %vm1320, 1.0, 0.0
    %v1571 = vsel %vm1321, 1.0, 0.0
    %v1572 = vsel %vm1322, 1.0, 0.0
    %v1573 = vsel %vm1323, 1.0, 0.0
    %v1574 = vsel %vm1324, 1.0, 0.0
    %v1575 = vsel %vm1325, 1.0, 0.0
    %v1576 = vsel %vm1326, 1.0, 0.0
    %v1577 = vsel %vm1327, 1.0, 0.0
    %v1578 = vsel %vm1328, 1.0, 0.0
    %v1579 = vsel %vm1329, 1.0, 0.0
    %v1580 = vsel %vm1330, 1.0, 0.0
    %v1581 = vsel %vm1331, 1.0, 0.0
    %v1582 = vsel %vm1332, 1.0, 0.0
    %v1583 = vsel %vm1333, 1.0, 0.0
    %v1584 = vsel %vm1334, 1.0, 0.0
    %v1585 = vsel %vm1335, 1.0, 0.0
    %v1586 = vsel %vm1336, 1.0, 0.0
    %v1587 = vsel %vm1337, 1.0, 0.0
    %v1588 = vsel %vm1338, 1.0, 0.0
    %v1589 = vsel %vm1339, 1.0, 0.0
    %v1590 = vsel %vm1340, 1.0, 0.0
    %v1591 = vsel %vm1341, 1.0, 0.0
    %v1592 = vsel %vm1342, 1.0, 0.0
    %v1593 = vsel %vm1343, 1.0, 0.0
    %v1594 = vsel %vm1344, 1.0, 0.0
    %v1595 = vsel %vm1345, 1.0, 0.0
    %v1596 = vsel %vm1346, 1.0, 0.0
    %v1597 = vsel %vm1347, 1.0, 0.0
    %v1598 = vsel %vm1348, 1.0, 0.0
    %v1599 = vsel %vm1349, 1.0, 0.0
    %v1600 = vsel %vm1350, 1.0, 0.0
    %v1601 = vsel %vm1351, 1.0, 0.0
    %v1602 = vsel %vm1352, 1.0, 0.0
    %v1603 = vsel %vm1353, 1.0, 0.0
    %v1604 = vsel %vm1354, 1.0, 0.0
    %v1605 = vsel %vm1355, 1.0, 0.0
    %v1606 = vsel %vm1356, 1.0, 0.0
    %v1607 = vsel %vm1357, 1.0, 0.0
    %v1608 = vsel %vm1358, 1.0, 0.0
    %v1609 = vsel %vm1359, 1.0, 0.0
    %v1610 = vsel %vm1360, 1.0, 0.0
    %v1611 = vsel %vm1361, 1.0, 0.0
    %v1612 = vsel %vm1362, 1.0, 0.0
    %v1613 = vsel %vm1363, 1.0, 0.0
    %v1614 = vsel %vm1364, 1.0, 0.0
    %v1615 = vsel %vm1365, 1.0, 0.0
    %v1616 = vsel %vm1366, 1.0, 0.0
    %v1617 = vsel %vm1367, 1.0, 0.0
    %v1618 = vsel %vm1368, 1.0, 0.0
    %v1619 = vsel %vm1369, 1.0, 0.0
    %v1620 = vsel %vm1370, 1.0, 0.0
    %v1621 = vsel %vm1371, 1.0, 0.0
    %v1622 = vsel %vm1372, 1.0, 0.0
    %v1623 = vsel %vm1373, 1.0, 0.0
    %v1624 = vsel %vm1374, 1.0, 0.0
    %v1625 = vsel %vm1375, 1.0, 0.0
    %v1626 = vsel %vm1376, 1.0, 0.0
    %v1627 = vsel %vm1377, 1.0, 0.0
    %v1628 = vsel %vm1378, 1.0, 0.0
    %v1629 = vsel %vm1379, 1.0, 0.0
    %v1630 = vsel %vm1380, 1.0, 0.0
    %v1631 = vsel %vm1381, 1.0, 0.0
    %v1632 = vsel %vm1382, 1.0, 0.0
    %v1633 = vsel %vm1383, 1.0, 0.0
    %v1634 = vsel %vm1384, 1.0, 0.0
    %v1635 = vsel %vm1385, 1.0, 0.0
    %v1636 = vsel %vm1386, 1.0, 0.0
    %v1637 = vsel %vm1387, 1.0, 0.0
    %v1638 = vsel %vm1388, 1.0, 0.0
    %v1639 = vsel %vm1389, 1.0, 0.0
    %v1640 = vsel %vm1390, 1.0, 0.0
    %v1641 = vsel %vm1391, 1.0, 0.0
    %v1642 = vsel %vm1392, 1.0, 0.0
    %v1643 = vsel %vm1393, 1.0, 0.0
    %v1644 = vsel %vm1394, 1.0, 0.0
    %v1645 = vsel %vm1395, 1.0, 0.0
    %v1646 = vsel %vm1396, 1.0, 0.0
    %v1647 = vsel %vm1397, 1.0, 0.0
    %v1648 = vsel %vm1398, 1.0, 0.0
    %v1649 = vsel %vm1399, 1.0, 0.0
    %v1650 = vsel %vm1400, 1.0, 0.0
    %v1651 = vsel %vm1401, 1.0, 0.0
    %v1652 = vsel %vm1402, 1.0, 0.0
    %v1653 = vsel %vm1403, 1.0, 0.0
    %v1654 = vsel %vm1404, 1.0, 0.0
    %v1655 = vsel %vm1405, 1.0, 0.0
    %v1656 = vsel %vm1406, 1.0, 0.0
    %v1657 = vsel %vm1407, 1.0, 0.0
    %v1658 = vsel %vm1408, 1.0, 0.0
    %v1659 = vsel %vm1409, 1.0, 0.0
    %v1660 = vsel %vm1410, 1.0, 0.0
    %v1661 = vsel %vm1411, 1.0, 0.0
    %v1662 = vsel %vm1412, 1.0, 0.0
    %v1663 = vsel %vm1413, 1.0, 0.0
    %v1664 = vsel %vm1414, 1.0, 0.0
    %v1665 = vsel %vm1415, 1.0, 0.0
    %v1666 = vsel %vm1416, 1.0, 0.0
    %v1667 = vsel %vm1417, 1.0, 0.0
    %v1668 = vsel %vm1418, 1.0, 0.0
    %v1669 = vsel %vm1419, 1.0, 0.0
    %v1670 = vsel %vm1420, 1.0, 0.0
    %v1671 = vsel %vm1421, 1.0, 0.0
    %v1672 = vsel %vm1422, 1.0, 0.0
    %v1673 = vsel %vm1423, 1.0, 0.0
    %v1674 = vsel %vm1424, 1.0, 0.0
    %v1675 = vsel %vm1425, 1.0, 0.0
    %v1676 = vsel %vm1426, 1.0, 0.0
    %v1677 = vsel %vm1427, 1.0, 0.0
    %v1678 = vsel %vm1428, 1.0, 0.0
    %v1679 = vsel %vm1429, 1.0, 0.0
    %v1680 = vsel %vm1430, 1.0, 0.0
    %v1681 = vsel %vm1431, 1.0, 0.0
    %v1682 = vsel %vm1432, 1.0, 0.0
    %v1683 = vsel %vm1433, 1.0, 0.0
    %v1684 = vsel %vm1434, 1.0, 0.0
    %v1685 = vsel %vm1435, 1.0, 0.0
    %v1686 = vsel %vm1436, 1.0, 0.0
    %v1687 = vsel %vm1437, 1.0, 0.0
    %v1688 = vsel %vm1438, 1.0, 0.0
    %v1689 = vsel %vm1439, 1.0, 0.0
    %v1690 = vsel %vm1440, 1.0, 0.0
    %v1691 = vsel %vm1441, 1.0, 0.0
    %v1692 = vsel %vm1442, 1.0, 0.0
    %v1693 = vsel %vm1443, 1.0, 0.0
    %v1694 = vsel %vm1444, 1.0, 0.0
    %v1695 = vsel %vm1445, 1.0, 0.0
    %v1696 = vsel %vm1446, 1.0, 0.0
    %v1697 = vsel %vm1447, 1.0, 0.0
    %v1698 = vsel %vm1448, 1.0, 0.0
    %v1699 = vsel %vm1449, 1.0, 0.0
    %v1700 = vsel %vm1450, 1.0, 0.0
    %v1701 = vsel %vm1451, 1.0, 0.0
    %v1702 = vsel %vm1452, 1.0, 0.0
    %v1703 = vsel %vm1453, 1.0, 0.0
    %v1704 = vsel %vm1454, 1.0, 0.0
    %v1705 = vsel %vm1455, 1.0, 0.0
    %v1706 = vsel %vm1456, 1.0, 0.0
    %v1707 = vsel %vm1457, 1.0, 0.0
    %v1708 = vsel %vm1458, 1.0, 0.0
    %v1709 = vsel %vm1459, 1.0, 0.0
    %v1710 = vsel %vm1460, 1.0, 0.0
    %v1711 = vsel %vm1461, 1.0, 0.0
    %v1712 = vsel %vm1462, 1.0, 0.0
    %v1713 = vsel %vm1463, 1.0, 0.0
    %v1714 = vsel %vm1464, 1.0, 0.0
    %v1715 = vsel %vm1465, 1.0, 0.0
    %v1716 = vsel %vm1466, 1.0, 0.0
    %v1717 = vsel %vm1467, 1.0, 0.0
    %v1718 = vsel %vm1468, 1.0, 0.0
    %v1719 = vsel %vm1469, 1.0, 0.0
    %v1720 = vsel %vm1470, 1.0, 0.0
    %v1721 = vsel %vm1471, 1.0, 0.0
    %v1722 = vsel %vm1472, 1.0, 0.0
    %v1723 = vsel %vm1473, 1.0, 0.0
    %v1724 = vsel %vm1474, 1.0, 0.0
    %v1725 = vsel %vm1475, 1.0, 0.0
    %v1726 = vsel %vm1476, 1.0, 0.0
    %v1727 = vsel %vm1477, 1.0, 0.0
    %v1728 = vsel %vm1478, 1.0, 0.0
    %v1729 = vsel %vm1479, 1.0, 0.0
    %v1730 = vsel %vm1480, 1.0, 0.0
    %v1731 = vsel %vm1481, 1.0, 0.0
    %v1732 = vsel %vm1482, 1.0, 0.0
    %v1733 = vsel %vm1483, 1.0, 0.0
    %v1734 = vsel %vm1484, 1.0, 0.0
    %v1735 = vsel %vm1485, 1.0, 0.0
    %v1736 = vsel %vm1486, 1.0, 0.0
    %v1737 = vsel %vm1487, 1.0, 0.0
    %v1738 = vsel %vm1488, 1.0, 0.0
    %v1739 = vsel %vm1489, 1.0, 0.0
    %v1740 = vsel %vm1490, 1.0, 0.0
    %v1741 = vsel %vm1491, 1.0, 0.0
    %v1742 = vsel %vm1492, 1.0, 0.0
    %v1743 = vsel %vm1493, 1.0, 0.0
    %v1744 = vsel %vm1494, 1.0, 0.0
    %v1745 = vsel %vm1495, 1.0, 0.0
    %v1746 = vsel %vm1496, 1.0, 0.0
    %v1747 = vsel %vm1497, 1.0, 0.0
    %v1748 = vsel %vm1498, 1.0, 0.0
    %v1749 = vsel %vm1499, 1.0, 0.0
    %v1750 = vsel %vm1500, 1.0, 0.0
    %v1751 = vsel %vm1501, 1.0, 0.0
    %v1752 = vsel %vm1502, 1.0, 0.0
    %v1753 = vsel %vm1503, 1.0, 0.0
    %v1754 = vsel %vm1504, 1.0, 0.0
    %v1755 = vsel %vm1505, 1.0, 0.0
    %v1756 = vsel %vm1506, 1.0, 0.0
    %v1757 = vsel %vm1507, 1.0, 0.0
    %v1758 = vsel %vm1508, 1.0, 0.0
    %v1759 = vsel %vm1509, 1.0, 0.0
    %v1760 = vsel %vm1510, 1.0, 0.0
    %v1761 = vsel %vm1511, 1.0, 0.0
    %v1762 = vsel %vm1512, 1.0, 0.0
    %v1763 = vsel %vm1513, 1.0, 0.0
    %v1764 = vsel %vm1514, 1.0, 0.0
    %v1765 = vsel %vm1515, 1.0, 0.0
    %v1766 = vsel %vm1516, 1.0, 0.0
    %v1767 = vsel %vm1517, 1.0, 0.0
    %v1768 = vsel %vm1518, 1.0, 0.0
    %v1769 = vsel %vm1519, 1.0, 0.0
    %v1770 = vsel %vm1520, 1.0, 0.0
    %v1771 = vsel %vm1521, 1.0, 0.0
    %v1772 = vsel %vm1522, 1.0, 0.0
    %v1773 = vsel %vm1523, 1.0, 0.0
    %v1774 = vsel %vm1524, 1.0, 0.0
    %v1775 = vsel %vm1525, 1.0, 0.0
    %v1776 = vsel %vm1526, 1.0, 0.0
    %v1777 = vsel %vm1527, 1.0, 0.0
    %v1778 = vsel %vm1528, 1.0, 0.0
    %v1779 = vsel %vm1529, 1.0, 0.0
    %v1780 = vsel %vm1530, 1.0, 0.0
    %v1781 = vsel %vm1531, 1.0, 0.0
    %v1782 = vsel %vm1532, 1.0, 0.0
    %v1783 = vsel %vm1533, 1.0, 0.0
    %v1784 = vsel %vm1534, 1.0, 0.0
    %v1785 = vsel %vm1535, 1.0, 0.0
    %v1786 = vsel %vm1536, 1.0, 0.0
    %v1787 = vsel %vm1537, 1.0, 0.0
    %v1788 = vsel %vm1538, 1.0, 0.0
    %v1789 = vsel %vm1539, 1.0, 0.0
    %v1790 = vsel %vm1540, 1.0, 0.0
    %v1791 = vsel %vm1541, 1.0, 0.0
    %v1792 = vsel %vm1542, 1.0, 0.0
    %v1793 = vsel %vm1543, 1.0, 0.0
    %v1794 = vsel %vm1544, 1.0, 0.0
    %v1795 = vsel %vm1545, 1.0, 0.0
    %v1796 = vsel %vm1546, 1.0, 0.0
    %v1797 = vsel %vm1547, 1.0, 0.0
    %v1798 = vsel %vm1548, 1.0, 0.0
    %v1799 = vsel %vm1549, 1.0, 0.0
    %v1800 = vsel %vm1550, 1.0, 0.0
    %v1801 = vsel %vm1551, 1.0, 0.0
    %v1802 = vsel %vm1552, 1.0, 0.0
    %v1803 = vsel %vm1553, 1.0, 0.0
    %v1804 = vsel %vm1554, 1.0, 0.0
    %v1805 = vsel %vm1555, 1.0, 0.0
    %v1806 = vsel %vm1556, 1.0, 0.0
    %v1807 = vsel %vm1557, 1.0, 0.0
    %v1808 = vsel %vm1558, 1.0, 0.0
    %v1809 = vsel %vm1559, 1.0, 0.0
    %v1810 = vsel %vm1560, 1.0, 0.0
    %v1811 = vpack.c.bf16 %v1566, %v1561
    %v1812 = vpack.c.bf16 %v1567, %v1562
    %v1813 = vpack.c.bf16 %v1568, %v1563
    %v1814 = vpack.c.bf16 %v1569, %v1564
    %v1815 = vpack.c.bf16 %v1570, %v1565
    %v1816 = vpack.c.bf16 %v1576, %v1571
    %v1817 = vpack.c.bf16 %v1577, %v1572
    %v1818 = vpack.c.bf16 %v1578, %v1573
    %v1819 = vpack.c.bf16 %v1579, %v1574
    %v1820 = vpack.c.bf16 %v1580, %v1575
    %v1821 = vpack.c.bf16 %v1586, %v1581
    %v1822 = vpack.c.bf16 %v1587, %v1582
    %v1823 = vpack.c.bf16 %v1588, %v1583
    %v1824 = vpack.c.bf16 %v1589, %v1584
    %v1825 = vpack.c.bf16 %v1590, %v1585
    %v1826 = vpack.c.bf16 %v1596, %v1591
    %v1827 = vpack.c.bf16 %v1597, %v1592
    %v1828 = vpack.c.bf16 %v1598, %v1593
    %v1829 = vpack.c.bf16 %v1599, %v1594
    %v1830 = vpack.c.bf16 %v1600, %v1595
    %v1831 = vpack.c.bf16 %v1606, %v1601
    %v1832 = vpack.c.bf16 %v1607, %v1602
    %v1833 = vpack.c.bf16 %v1608, %v1603
    %v1834 = vpack.c.bf16 %v1609, %v1604
    %v1835 = vpack.c.bf16 %v1610, %v1605
    %v1836 = vpack.c.bf16 %v1616, %v1611
    %v1837 = vpack.c.bf16 %v1617, %v1612
    %v1838 = vpack.c.bf16 %v1618, %v1613
    %v1839 = vpack.c.bf16 %v1619, %v1614
    %v1840 = vpack.c.bf16 %v1620, %v1615
    %v1841 = vpack.c.bf16 %v1626, %v1621
    %v1842 = vpack.c.bf16 %v1627, %v1622
    %v1843 = vpack.c.bf16 %v1628, %v1623
    %v1844 = vpack.c.bf16 %v1629, %v1624
    %v1845 = vpack.c.bf16 %v1630, %v1625
    %v1846 = vpack.c.bf16 %v1636, %v1631
    %v1847 = vpack.c.bf16 %v1637, %v1632
    %v1848 = vpack.c.bf16 %v1638, %v1633
    %v1849 = vpack.c.bf16 %v1639, %v1634
    %v1850 = vpack.c.bf16 %v1640, %v1635
    %v1851 = vpack.c.bf16 %v1646, %v1641
    %v1852 = vpack.c.bf16 %v1647, %v1642
    %v1853 = vpack.c.bf16 %v1648, %v1643
    %v1854 = vpack.c.bf16 %v1649, %v1644
    %v1855 = vpack.c.bf16 %v1650, %v1645
    %v1856 = vpack.c.bf16 %v1656, %v1651
    %v1857 = vpack.c.bf16 %v1657, %v1652
    %v1858 = vpack.c.bf16 %v1658, %v1653
    %v1859 = vpack.c.bf16 %v1659, %v1654
    %v1860 = vpack.c.bf16 %v1660, %v1655
    %v1861 = vpack.c.bf16 %v1666, %v1661
    %v1862 = vpack.c.bf16 %v1667, %v1662
    %v1863 = vpack.c.bf16 %v1668, %v1663
    %v1864 = vpack.c.bf16 %v1669, %v1664
    %v1865 = vpack.c.bf16 %v1670, %v1665
    %v1866 = vpack.c.bf16 %v1676, %v1671
    %v1867 = vpack.c.bf16 %v1677, %v1672
    %v1868 = vpack.c.bf16 %v1678, %v1673
    %v1869 = vpack.c.bf16 %v1679, %v1674
    %v1870 = vpack.c.bf16 %v1680, %v1675
    %v1871 = vpack.c.bf16 %v1686, %v1681
    %v1872 = vpack.c.bf16 %v1687, %v1682
    %v1873 = vpack.c.bf16 %v1688, %v1683
    %v1874 = vpack.c.bf16 %v1689, %v1684
    %v1875 = vpack.c.bf16 %v1690, %v1685
    %v1876 = vpack.c.bf16 %v1696, %v1691
    %v1877 = vpack.c.bf16 %v1697, %v1692
    %v1878 = vpack.c.bf16 %v1698, %v1693
    %v1879 = vpack.c.bf16 %v1699, %v1694
    %v1880 = vpack.c.bf16 %v1700, %v1695
    %v1881 = vpack.c.bf16 %v1706, %v1701
    %v1882 = vpack.c.bf16 %v1707, %v1702
    %v1883 = vpack.c.bf16 %v1708, %v1703
    %v1884 = vpack.c.bf16 %v1709, %v1704
    %v1885 = vpack.c.bf16 %v1710, %v1705
    %v1886 = vpack.c.bf16 %v1716, %v1711
    %v1887 = vpack.c.bf16 %v1717, %v1712
    %v1888 = vpack.c.bf16 %v1718, %v1713
    %v1889 = vpack.c.bf16 %v1719, %v1714
    %v1890 = vpack.c.bf16 %v1720, %v1715
    %v1891 = vpack.c.bf16 %v1726, %v1721
    %v1892 = vpack.c.bf16 %v1727, %v1722
    %v1893 = vpack.c.bf16 %v1728, %v1723
    %v1894 = vpack.c.bf16 %v1729, %v1724
    %v1895 = vpack.c.bf16 %v1730, %v1725
    %v1896 = vpack.c.bf16 %v1736, %v1731
    %v1897 = vpack.c.bf16 %v1737, %v1732
    %v1898 = vpack.c.bf16 %v1738, %v1733
    %v1899 = vpack.c.bf16 %v1739, %v1734
    %v1900 = vpack.c.bf16 %v1740, %v1735
    %v1901 = vpack.c.bf16 %v1746, %v1741
    %v1902 = vpack.c.bf16 %v1747, %v1742
    %v1903 = vpack.c.bf16 %v1748, %v1743
    %v1904 = vpack.c.bf16 %v1749, %v1744
    %v1905 = vpack.c.bf16 %v1750, %v1745
    %v1906 = vpack.c.bf16 %v1756, %v1751
    %v1907 = vpack.c.bf16 %v1757, %v1752
    %v1908 = vpack.c.bf16 %v1758, %v1753
    %v1909 = vpack.c.bf16 %v1759, %v1754
    %v1910 = vpack.c.bf16 %v1760, %v1755
    %v1911 = vpack.c.bf16 %v1766, %v1761
    %v1912 = vpack.c.bf16 %v1767, %v1762
    %v1913 = vpack.c.bf16 %v1768, %v1763
    %v1914 = vpack.c.bf16 %v1769, %v1764
    %v1915 = vpack.c.bf16 %v1770, %v1765
    %v1916 = vpack.c.bf16 %v1776, %v1771
    %v1917 = vpack.c.bf16 %v1777, %v1772
    %v1918 = vpack.c.bf16 %v1778, %v1773
    %v1919 = vpack.c.bf16 %v1779, %v1774
    %v1920 = vpack.c.bf16 %v1780, %v1775
    %v1921 = vpack.c.bf16 %v1786, %v1781
    %v1922 = vpack.c.bf16 %v1787, %v1782
    %v1923 = vpack.c.bf16 %v1788, %v1783
    %v1924 = vpack.c.bf16 %v1789, %v1784
    %v1925 = vpack.c.bf16 %v1790, %v1785
    %v1926 = vpack.c.bf16 %v1796, %v1791
    %v1927 = vpack.c.bf16 %v1797, %v1792
    %v1928 = vpack.c.bf16 %v1798, %v1793
    %v1929 = vpack.c.bf16 %v1799, %v1794
    %v1930 = vpack.c.bf16 %v1800, %v1795
    %v1931 = vpack.c.bf16 %v1806, %v1801
    %v1932 = vpack.c.bf16 %v1807, %v1802
    %v1933 = vpack.c.bf16 %v1808, %v1803
    %v1934 = vpack.c.bf16 %v1809, %v1804
    %v1935 = vpack.c.bf16 %v1810, %v1805
    %v1936 = vld [vmem:[%s2] sm:$0xff]
    %v1937 = vld [vmem:[%s2 + $0x8] sm:$0xf]
    %v1938 = vld [vmem:[%s2 + $0xc] sm:$0xff]
    %v1939 = vld [vmem:[%s2 + $0x14] sm:$0xf]
    %v1940 = vld [vmem:[%s2 + $0x18] sm:$0xff]
    %v1941 = vld [vmem:[%s2 + $0x20] sm:$0xf]
    %v1942 = vld [vmem:[%s2 + $0x24] sm:$0xff]
    %v1943 = vld [vmem:[%s2 + $0x2c] sm:$0xf]
    %v1944 = vld [vmem:[%s2 + $0x30] sm:$0xff]
    %v1945 = vld [vmem:[%s2 + $0x38] sm:$0xf]
    %v1946 = vld [vmem:[%s2 + $0x3c] sm:$0xff]
    %v1947 = vld [vmem:[%s2 + $0x44] sm:$0xf]
    %v1948 = vld [vmem:[%s2 + $0x48] sm:$0xff]
    %v1949 = vld [vmem:[%s2 + $0x50] sm:$0xf]
    %v1950 = vld [vmem:[%s2 + $0x54] sm:$0xff]
    %v1951 = vld [vmem:[%s2 + $0x5c] sm:$0xf]
    %v1952 = vld [vmem:[%s2 + $0x60] sm:$0xff]
    %v1953 = vld [vmem:[%s2 + $0x68] sm:$0xf]
    %v1954 = vld [vmem:[%s2 + $0x6c] sm:$0xff]
    %v1955 = vld [vmem:[%s2 + $0x74] sm:$0xf]
    %v1956 = vld [vmem:[%s2 + $0x78] sm:$0xff]
    %v1957 = vld [vmem:[%s2 + $0x80] sm:$0xf]
    %v1958 = vld [vmem:[%s2 + $0x84] sm:$0xff]
    %v1959 = vld [vmem:[%s2 + $0x8c] sm:$0xf]
    %v1960 = vld [vmem:[%s2 + $0x90] sm:$0xff]
    %v1961 = vld [vmem:[%s2 + $0x98] sm:$0xf]
    %v1962 = vld [vmem:[%s2 + $0x9c] sm:$0xff]
    %v1963 = vld [vmem:[%s2 + $0xa4] sm:$0xf]
    %v1964 = vld [vmem:[%s2 + $0xa8] sm:$0xff]
    %v1965 = vld [vmem:[%s2 + $0xb0] sm:$0xf]
    %v1966 = vld [vmem:[%s2 + $0xb4] sm:$0xff]
    %v1967 = vld [vmem:[%s2 + $0xbc] sm:$0xf]
    %v1968 = vld [vmem:[%s2 + $0xc0] sm:$0xff]
    %v1969 = vld [vmem:[%s2 + $0xc8] sm:$0xf]
    %v1970 = vld [vmem:[%s2 + $0xcc] sm:$0xff]
    %v1971 = vld [vmem:[%s2 + $0xd4] sm:$0xf]
    %v1972 = vld [vmem:[%s2 + $0xd8] sm:$0xff]
    %v1973 = vld [vmem:[%s2 + $0xe0] sm:$0xf]
    %v1974 = vld [vmem:[%s2 + $0xe4] sm:$0xff]
    %v1975 = vld [vmem:[%s2 + $0xec] sm:$0xf]
    %v1976 = vld [vmem:[%s2 + $0xf0] sm:$0xff]
    %v1977 = vld [vmem:[%s2 + $0xf8] sm:$0xf]
    %v1978 = vld [vmem:[%s2 + $0xfc] sm:$0xff]
    %v1979 = vld [vmem:[%s2 + $0x104] sm:$0xf]
    %v1980 = vld [vmem:[%s2 + $0x108] sm:$0xff]
    %v1981 = vld [vmem:[%s2 + $0x110] sm:$0xf]
    %v1982 = vld [vmem:[%s2 + $0x114] sm:$0xff]
    %v1983 = vld [vmem:[%s2 + $0x11c] sm:$0xf]
    %v1984 = vld [vmem:[%s2 + $0x120] sm:$0xff]
    %v1985 = vld [vmem:[%s2 + $0x128] sm:$0xf]
    %v1986 = vld [vmem:[%s2 + $0x12c] sm:$0xff]
    %v1987 = vld [vmem:[%s2 + $0x134] sm:$0xf]
    %v1988 = vld [vmem:[%s2 + $0x138] sm:$0xff]
    %v1989 = vld [vmem:[%s2 + $0x140] sm:$0xf]
    %v1990 = vld [vmem:[%s2 + $0x144] sm:$0xff]
    %v1991 = vld [vmem:[%s2 + $0x14c] sm:$0xf]
    %v1992 = vld [vmem:[%s2 + $0x150] sm:$0xff]
    %v1993 = vld [vmem:[%s2 + $0x158] sm:$0xf]
    %v1994 = vld [vmem:[%s2 + $0x15c] sm:$0xff]
    %v1995 = vld [vmem:[%s2 + $0x164] sm:$0xf]
    %v1996 = vld [vmem:[%s2 + $0x168] sm:$0xff]
    %v1997 = vld [vmem:[%s2 + $0x170] sm:$0xf]
    %v1998 = vld [vmem:[%s2 + $0x174] sm:$0xff]
    %v1999 = vld [vmem:[%s2 + $0x17c] sm:$0xf]
    %v2000 = vld [vmem:[%s2 + $0x180] sm:$0xff]
    %v2001 = vld [vmem:[%s2 + $0x188] sm:$0xf]
    %v2002 = vld [vmem:[%s2 + $0x18c] sm:$0xff]
    %v2003 = vld [vmem:[%s2 + $0x194] sm:$0xf]
    %v2004 = vld [vmem:[%s2 + $0x198] sm:$0xff]
    %v2005 = vld [vmem:[%s2 + $0x1a0] sm:$0xf]
    %v2006 = vld [vmem:[%s2 + $0x1a4] sm:$0xff]
    %v2007 = vld [vmem:[%s2 + $0x1ac] sm:$0xf]
    %v2008 = vld [vmem:[%s2 + $0x1b0] sm:$0xff]
    %v2009 = vld [vmem:[%s2 + $0x1b8] sm:$0xf]
    %v2010 = vld [vmem:[%s2 + $0x1bc] sm:$0xff]
    %v2011 = vld [vmem:[%s2 + $0x1c4] sm:$0xf]
    %v2012 = vld [vmem:[%s2 + $0x1c8] sm:$0xff]
    %v2013 = vld [vmem:[%s2 + $0x1d0] sm:$0xf]
    %v2014 = vld [vmem:[%s2 + $0x1d4] sm:$0xff]
    %v2015 = vld [vmem:[%s2 + $0x1dc] sm:$0xf]
    %v2016 = vld [vmem:[%s2 + $0x1e0] sm:$0xff]
    %v2017 = vld [vmem:[%s2 + $0x1e8] sm:$0xf]
    %v2018 = vld [vmem:[%s2 + $0x1ec] sm:$0xff]
    %v2019 = vld [vmem:[%s2 + $0x1f4] sm:$0xf]
    %v2020 = vld [vmem:[%s2 + $0x1f8] sm:$0xff]
    %v2021 = vld [vmem:[%s2 + $0x200] sm:$0xf]
    %v2022 = vld [vmem:[%s2 + $0x204] sm:$0xff]
    %v2023 = vld [vmem:[%s2 + $0x20c] sm:$0xf]
    %v2024 = vld [vmem:[%s2 + $0x210] sm:$0xff]
    %v2025 = vld [vmem:[%s2 + $0x218] sm:$0xf]
    %v2026 = vld [vmem:[%s2 + $0x21c] sm:$0xff]
    %v2027 = vld [vmem:[%s2 + $0x224] sm:$0xf]
    %v2028 = vld [vmem:[%s2 + $0x228] sm:$0xff]
    %v2029 = vld [vmem:[%s2 + $0x230] sm:$0xf]
    %v2030 = vld [vmem:[%s2 + $0x234] sm:$0xff]
    %v2031 = vld [vmem:[%s2 + $0x23c] sm:$0xf]
    %v2032 = vld [vmem:[%s2 + $0x240] sm:$0xff]
    %v2033 = vld [vmem:[%s2 + $0x248] sm:$0xf]
    %v2034 = vld [vmem:[%s2 + $0x24c] sm:$0xff]
    %v2035 = vld [vmem:[%s2 + $0x254] sm:$0xf]
    %v2036 = vld [vmem:[%s2 + $0x258] sm:$0xff]
    %v2037 = vld [vmem:[%s2 + $0x260] sm:$0xf]
    %v2038 = vld [vmem:[%s2 + $0x264] sm:$0xff]
    %v2039 = vld [vmem:[%s2 + $0x26c] sm:$0xf]
    %v2040 = vld [vmem:[%s2 + $0x270] sm:$0xff]
    %v2041 = vld [vmem:[%s2 + $0x278] sm:$0xf]
    %v2042 = vld [vmem:[%s2 + $0x27c] sm:$0xff]
    %v2043 = vld [vmem:[%s2 + $0x284] sm:$0xf]
    %v2044 = vld [vmem:[%s2 + $0x288] sm:$0xff]
    %v2045 = vld [vmem:[%s2 + $0x290] sm:$0xf]
    %v2046 = vld [vmem:[%s2 + $0x294] sm:$0xff]
    %v2047 = vld [vmem:[%s2 + $0x29c] sm:$0xf]
    %v2048 = vld [vmem:[%s2 + $0x2a0] sm:$0xff]
    %v2049 = vld [vmem:[%s2 + $0x2a8] sm:$0xf]
    %v2050 = vld [vmem:[%s2 + $0x2ac] sm:$0xff]
    %v2051 = vld [vmem:[%s2 + $0x2b4] sm:$0xf]
    %v2052 = vld [vmem:[%s2 + $0x2b8] sm:$0xff]
    %v2053 = vld [vmem:[%s2 + $0x2c0] sm:$0xf]
    %v2054 = vld [vmem:[%s2 + $0x2c4] sm:$0xff]
    %v2055 = vld [vmem:[%s2 + $0x2cc] sm:$0xf]
    %v2056 = vld [vmem:[%s2 + $0x2d0] sm:$0xff]
    %v2057 = vld [vmem:[%s2 + $0x2d8] sm:$0xf]
    %v2058 = vld [vmem:[%s2 + $0x2dc] sm:$0xff]
    %v2059 = vld [vmem:[%s2 + $0x2e4] sm:$0xf]
    %v2060 = vld [vmem:[%s2 + $0x2e8] sm:$0xff]
    %v2061 = vld [vmem:[%s2 + $0x2f0] sm:$0xf]
    %v2062 = vld [vmem:[%s2 + $0x2f4] sm:$0xff]
    %v2063 = vld [vmem:[%s2 + $0x2fc] sm:$0xf]
    %v2064 = vld [vmem:[%s2 + $0x300] sm:$0xff]
    %v2065 = vld [vmem:[%s2 + $0x308] sm:$0xf]
    %v2066 = vld [vmem:[%s2 + $0x30c] sm:$0xff]
    %v2067 = vld [vmem:[%s2 + $0x314] sm:$0xf]
    %v2068 = vld [vmem:[%s2 + $0x318] sm:$0xff]
    %v2069 = vld [vmem:[%s2 + $0x320] sm:$0xf]
    %v2070 = vld [vmem:[%s2 + $0x324] sm:$0xff]
    %v2071 = vld [vmem:[%s2 + $0x32c] sm:$0xf]
    %v2072 = vld [vmem:[%s2 + $0x330] sm:$0xff]
    %v2073 = vld [vmem:[%s2 + $0x338] sm:$0xf]
    %v2074 = vld [vmem:[%s2 + $0x33c] sm:$0xff]
    %v2075 = vld [vmem:[%s2 + $0x344] sm:$0xf]
    %v2076 = vld [vmem:[%s2 + $0x348] sm:$0xff]
    %v2077 = vld [vmem:[%s2 + $0x350] sm:$0xf]
    %v2078 = vld [vmem:[%s2 + $0x354] sm:$0xff]
    %v2079 = vld [vmem:[%s2 + $0x35c] sm:$0xf]
    %v2080 = vld [vmem:[%s2 + $0x360] sm:$0xff]
    %v2081 = vld [vmem:[%s2 + $0x368] sm:$0xf]
    %v2082 = vld [vmem:[%s2 + $0x36c] sm:$0x11]
    %v2083 = vld [vmem:[%s2 + $0x374] sm:$0x1]
    %v2232 = vunpack.c.l.b16 %v1936
    %v2233 = vunpack.c.h.b16 %v1936
    %v2234 = vunpack.c.l.b16 %v1937
    %v2235 = vunpack.c.l.b16 %v1938
    %v2236 = vunpack.c.h.b16 %v1938
    %v2237 = vunpack.c.l.b16 %v1939
    %v2238 = vunpack.c.l.b16 %v1940
    %v2239 = vunpack.c.h.b16 %v1940
    %v2240 = vunpack.c.l.b16 %v1941
    %v2241 = vunpack.c.l.b16 %v1942
    %v2242 = vunpack.c.h.b16 %v1942
    %v2243 = vunpack.c.l.b16 %v1943
    %v2244 = vunpack.c.l.b16 %v1944
    %v2245 = vunpack.c.h.b16 %v1944
    %v2246 = vunpack.c.l.b16 %v1945
    %v2247 = vunpack.c.l.b16 %v1946
    %v2248 = vunpack.c.h.b16 %v1946
    %v2249 = vunpack.c.l.b16 %v1947
    %v2250 = vunpack.c.l.b16 %v1948
    %v2251 = vunpack.c.h.b16 %v1948
    %v2252 = vunpack.c.l.b16 %v1949
    %v2253 = vunpack.c.l.b16 %v1950
    %v2254 = vunpack.c.h.b16 %v1950
    %v2255 = vunpack.c.l.b16 %v1951
    %v2256 = vunpack.c.l.b16 %v1952
    %v2257 = vunpack.c.h.b16 %v1952
    %v2258 = vunpack.c.l.b16 %v1953
    %v2259 = vunpack.c.l.b16 %v1954
    %v2260 = vunpack.c.h.b16 %v1954
    %v2261 = vunpack.c.l.b16 %v1955
    %v2262 = vunpack.c.l.b16 %v1956
    %v2263 = vunpack.c.h.b16 %v1956
    %v2264 = vunpack.c.l.b16 %v1957
    %v2265 = vunpack.c.l.b16 %v1958
    %v2266 = vunpack.c.h.b16 %v1958
    %v2267 = vunpack.c.l.b16 %v1959
    %v2268 = vunpack.c.l.b16 %v1960
    %v2269 = vunpack.c.h.b16 %v1960
    %v2270 = vunpack.c.l.b16 %v1961
    %v2271 = vunpack.c.l.b16 %v1962
    %v2272 = vunpack.c.h.b16 %v1962
    %v2273 = vunpack.c.l.b16 %v1963
    %v2274 = vunpack.c.l.b16 %v1964
    %v2275 = vunpack.c.h.b16 %v1964
    %v2276 = vunpack.c.l.b16 %v1965
    %v2277 = vunpack.c.l.b16 %v1966
    %v2278 = vunpack.c.h.b16 %v1966
    %v2279 = vunpack.c.l.b16 %v1967
    %v2280 = vunpack.c.l.b16 %v1968
    %v2281 = vunpack.c.h.b16 %v1968
    %v2282 = vunpack.c.l.b16 %v1969
    %v2283 = vunpack.c.l.b16 %v1970
    %v2284 = vunpack.c.h.b16 %v1970
    %v2285 = vunpack.c.l.b16 %v1971
    %v2286 = vunpack.c.l.b16 %v1972
    %v2287 = vunpack.c.h.b16 %v1972
    %v2288 = vunpack.c.l.b16 %v1973
    %v2289 = vunpack.c.l.b16 %v1974
    %v2290 = vunpack.c.h.b16 %v1974
    %v2291 = vunpack.c.l.b16 %v1975
    %v2292 = vunpack.c.l.b16 %v1976
    %v2293 = vunpack.c.h.b16 %v1976
    %v2294 = vunpack.c.l.b16 %v1977
    %v2295 = vunpack.c.l.b16 %v1978
    %v2296 = vunpack.c.h.b16 %v1978
    %v2297 = vunpack.c.l.b16 %v1979
    %v2298 = vunpack.c.l.b16 %v1980
    %v2299 = vunpack.c.h.b16 %v1980
    %v2300 = vunpack.c.l.b16 %v1981
    %v2301 = vunpack.c.l.b16 %v1982
    %v2302 = vunpack.c.h.b16 %v1982
    %v2303 = vunpack.c.l.b16 %v1983
    %v2304 = vunpack.c.l.b16 %v1984
    %v2305 = vunpack.c.h.b16 %v1984
    %v2306 = vunpack.c.l.b16 %v1985
    %v2307 = vunpack.c.l.b16 %v1986
    %v2308 = vunpack.c.h.b16 %v1986
    %v2309 = vunpack.c.l.b16 %v1987
    %v2310 = vunpack.c.l.b16 %v1988
    %v2311 = vunpack.c.h.b16 %v1988
    %v2312 = vunpack.c.l.b16 %v1989
    %v2313 = vunpack.c.l.b16 %v1990
    %v2314 = vunpack.c.h.b16 %v1990
    %v2315 = vunpack.c.l.b16 %v1991
    %v2316 = vunpack.c.l.b16 %v1992
    %v2317 = vunpack.c.h.b16 %v1992
    %v2318 = vunpack.c.l.b16 %v1993
    %v2319 = vunpack.c.l.b16 %v1994
    %v2320 = vunpack.c.h.b16 %v1994
    %v2321 = vunpack.c.l.b16 %v1995
    %v2322 = vunpack.c.l.b16 %v1996
    %v2323 = vunpack.c.h.b16 %v1996
    %v2324 = vunpack.c.l.b16 %v1997
    %v2325 = vunpack.c.l.b16 %v1998
    %v2326 = vunpack.c.h.b16 %v1998
    %v2327 = vunpack.c.l.b16 %v1999
    %v2328 = vunpack.c.l.b16 %v2000
    %v2329 = vunpack.c.h.b16 %v2000
    %v2330 = vunpack.c.l.b16 %v2001
    %v2331 = vunpack.c.l.b16 %v2002
    %v2332 = vunpack.c.h.b16 %v2002
    %v2333 = vunpack.c.l.b16 %v2003
    %v2334 = vunpack.c.l.b16 %v2004
    %v2335 = vunpack.c.h.b16 %v2004
    %v2336 = vunpack.c.l.b16 %v2005
    %v2337 = vunpack.c.l.b16 %v2006
    %v2338 = vunpack.c.h.b16 %v2006
    %v2339 = vunpack.c.l.b16 %v2007
    %v2340 = vunpack.c.l.b16 %v2008
    %v2341 = vunpack.c.h.b16 %v2008
    %v2342 = vunpack.c.l.b16 %v2009
    %v2343 = vunpack.c.l.b16 %v2010
    %v2344 = vunpack.c.h.b16 %v2010
    %v2345 = vunpack.c.l.b16 %v2011
    %v2346 = vunpack.c.l.b16 %v2012
    %v2347 = vunpack.c.h.b16 %v2012
    %v2348 = vunpack.c.l.b16 %v2013
    %v2349 = vunpack.c.l.b16 %v2014
    %v2350 = vunpack.c.h.b16 %v2014
    %v2351 = vunpack.c.l.b16 %v2015
    %v2352 = vunpack.c.l.b16 %v2016
    %v2353 = vunpack.c.h.b16 %v2016
    %v2354 = vunpack.c.l.b16 %v2017
    %v2355 = vunpack.c.l.b16 %v2018
    %v2356 = vunpack.c.h.b16 %v2018
    %v2357 = vunpack.c.l.b16 %v2019
    %v2358 = vunpack.c.l.b16 %v2020
    %v2359 = vunpack.c.h.b16 %v2020
    %v2360 = vunpack.c.l.b16 %v2021
    %v2361 = vunpack.c.l.b16 %v2022
    %v2362 = vunpack.c.h.b16 %v2022
    %v2363 = vunpack.c.l.b16 %v2023
    %v2364 = vunpack.c.l.b16 %v2024
    %v2365 = vunpack.c.h.b16 %v2024
    %v2366 = vunpack.c.l.b16 %v2025
    %v2367 = vunpack.c.l.b16 %v2026
    %v2368 = vunpack.c.h.b16 %v2026
    %v2369 = vunpack.c.l.b16 %v2027
    %v2370 = vunpack.c.l.b16 %v2028
    %v2371 = vunpack.c.h.b16 %v2028
    %v2372 = vunpack.c.l.b16 %v2029
    %v2373 = vunpack.c.l.b16 %v2030
    %v2374 = vunpack.c.h.b16 %v2030
    %v2375 = vunpack.c.l.b16 %v2031
    %v2376 = vunpack.c.l.b16 %v2032
    %v2377 = vunpack.c.h.b16 %v2032
    %v2378 = vunpack.c.l.b16 %v2033
    %v2379 = vunpack.c.l.b16 %v2034
    %v2380 = vunpack.c.h.b16 %v2034
    %v2381 = vunpack.c.l.b16 %v2035
    %v2382 = vunpack.c.l.b16 %v2036
    %v2383 = vunpack.c.h.b16 %v2036
    %v2384 = vunpack.c.l.b16 %v2037
    %v2385 = vunpack.c.l.b16 %v2038
    %v2386 = vunpack.c.h.b16 %v2038
    %v2387 = vunpack.c.l.b16 %v2039
    %v2388 = vunpack.c.l.b16 %v2040
    %v2389 = vunpack.c.h.b16 %v2040
    %v2390 = vunpack.c.l.b16 %v2041
    %v2391 = vunpack.c.l.b16 %v2042
    %v2392 = vunpack.c.h.b16 %v2042
    %v2393 = vunpack.c.l.b16 %v2043
    %v2394 = vunpack.c.l.b16 %v2044
    %v2395 = vunpack.c.h.b16 %v2044
    %v2396 = vunpack.c.l.b16 %v2045
    %v2397 = vunpack.c.l.b16 %v2046
    %v2398 = vunpack.c.h.b16 %v2046
    %v2399 = vunpack.c.l.b16 %v2047
    %v2400 = vunpack.c.l.b16 %v2048
    %v2401 = vunpack.c.h.b16 %v2048
    %v2402 = vunpack.c.l.b16 %v2049
    %v2403 = vunpack.c.l.b16 %v2050
    %v2404 = vunpack.c.h.b16 %v2050
    %v2405 = vunpack.c.l.b16 %v2051
    %v2406 = vunpack.c.l.b16 %v2052
    %v2407 = vunpack.c.h.b16 %v2052
    %v2408 = vunpack.c.l.b16 %v2053
    %v2409 = vunpack.c.l.b16 %v2054
    %v2410 = vunpack.c.h.b16 %v2054
    %v2411 = vunpack.c.l.b16 %v2055
    %v2412 = vunpack.c.l.b16 %v2056
    %v2413 = vunpack.c.h.b16 %v2056
    %v2414 = vunpack.c.l.b16 %v2057
    %v2415 = vunpack.c.l.b16 %v2058
    %v2416 = vunpack.c.h.b16 %v2058
    %v2417 = vunpack.c.l.b16 %v2059
    %v2418 = vunpack.c.l.b16 %v2060
    %v2419 = vunpack.c.h.b16 %v2060
    %v2420 = vunpack.c.l.b16 %v2061
    %v2421 = vunpack.c.l.b16 %v2062
    %v2422 = vunpack.c.h.b16 %v2062
    %v2423 = vunpack.c.l.b16 %v2063
    %v2424 = vunpack.c.l.b16 %v2064
    %v2425 = vunpack.c.h.b16 %v2064
    %v2426 = vunpack.c.l.b16 %v2065
    %v2427 = vunpack.c.l.b16 %v2066
    %v2428 = vunpack.c.h.b16 %v2066
    %v2429 = vunpack.c.l.b16 %v2067
    %v2430 = vunpack.c.l.b16 %v2068
    %v2431 = vunpack.c.h.b16 %v2068
    %v2432 = vunpack.c.l.b16 %v2069
    %v2433 = vunpack.c.l.b16 %v2070
    %v2434 = vunpack.c.h.b16 %v2070
    %v2435 = vunpack.c.l.b16 %v2071
    %v2436 = vunpack.c.l.b16 %v2072
    %v2437 = vunpack.c.h.b16 %v2072
    %v2438 = vunpack.c.l.b16 %v2073
    %v2439 = vunpack.c.l.b16 %v2074
    %v2440 = vunpack.c.h.b16 %v2074
    %v2441 = vunpack.c.l.b16 %v2075
    %v2442 = vunpack.c.l.b16 %v2076
    %v2443 = vunpack.c.h.b16 %v2076
    %v2444 = vunpack.c.l.b16 %v2077
    %v2445 = vunpack.c.l.b16 %v2078
    %v2446 = vunpack.c.h.b16 %v2078
    %v2447 = vunpack.c.l.b16 %v2079
    %v2448 = vunpack.c.l.b16 %v2080
    %v2449 = vunpack.c.h.b16 %v2080
    %v2450 = vunpack.c.l.b16 %v2081
    %v2451 = vunpack.c.l.b16 %v2082
    %v2452 = vunpack.c.h.b16 %v2082
    %v2453 = vunpack.c.l.b16 %v2083
    %v2454 = vpack.c.b16 %v2235, %v2232
    %v2455 = vpack.c.b16 %v2236, %v2233
    %v2456 = vpack.c.b16 %v2237, %v2234
    %v2457 = vpack.c.b16 %v2241, %v2238
    %v2458 = vpack.c.b16 %v2242, %v2239
    %v2459 = vpack.c.b16 %v2243, %v2240
    %v2460 = vpack.c.b16 %v2247, %v2244
    %v2461 = vpack.c.b16 %v2248, %v2245
    %v2462 = vpack.c.b16 %v2249, %v2246
    %v2463 = vpack.c.b16 %v2253, %v2250
    %v2464 = vpack.c.b16 %v2254, %v2251
    %v2465 = vpack.c.b16 %v2255, %v2252
    %v2466 = vpack.c.b16 %v2259, %v2256
    %v2467 = vpack.c.b16 %v2260, %v2257
    %v2468 = vpack.c.b16 %v2261, %v2258
    %v2469 = vpack.c.b16 %v2265, %v2262
    %v2470 = vpack.c.b16 %v2266, %v2263
    %v2471 = vpack.c.b16 %v2267, %v2264
    %v2472 = vpack.c.b16 %v2271, %v2268
    %v2473 = vpack.c.b16 %v2272, %v2269
    %v2474 = vpack.c.b16 %v2273, %v2270
    %v2475 = vpack.c.b16 %v2277, %v2274
    %v2476 = vpack.c.b16 %v2278, %v2275
    %v2477 = vpack.c.b16 %v2279, %v2276
    %v2478 = vpack.c.b16 %v2283, %v2280
    %v2479 = vpack.c.b16 %v2284, %v2281
    %v2480 = vpack.c.b16 %v2285, %v2282
    %v2481 = vpack.c.b16 %v2289, %v2286
    %v2482 = vpack.c.b16 %v2290, %v2287
    %v2483 = vpack.c.b16 %v2291, %v2288
    %v2484 = vpack.c.b16 %v2295, %v2292
    %v2485 = vpack.c.b16 %v2296, %v2293
    %v2486 = vpack.c.b16 %v2297, %v2294
    %v2487 = vpack.c.b16 %v2301, %v2298
    %v2488 = vpack.c.b16 %v2302, %v2299
    %v2489 = vpack.c.b16 %v2303, %v2300
    %v2490 = vpack.c.b16 %v2307, %v2304
    %v2491 = vpack.c.b16 %v2308, %v2305
    %v2492 = vpack.c.b16 %v2309, %v2306
    %v2493 = vpack.c.b16 %v2313, %v2310
    %v2494 = vpack.c.b16 %v2314, %v2311
    %v2495 = vpack.c.b16 %v2315, %v2312
    %v2496 = vpack.c.b16 %v2319, %v2316
    %v2497 = vpack.c.b16 %v2320, %v2317
    %v2498 = vpack.c.b16 %v2321, %v2318
    %v2499 = vpack.c.b16 %v2325, %v2322
    %v2500 = vpack.c.b16 %v2326, %v2323
    %v2501 = vpack.c.b16 %v2327, %v2324
    %v2502 = vpack.c.b16 %v2331, %v2328
    %v2503 = vpack.c.b16 %v2332, %v2329
    %v2504 = vpack.c.b16 %v2333, %v2330
    %v2505 = vpack.c.b16 %v2337, %v2334
    %v2506 = vpack.c.b16 %v2338, %v2335
    %v2507 = vpack.c.b16 %v2339, %v2336
    %v2508 = vpack.c.b16 %v2343, %v2340
    %v2509 = vpack.c.b16 %v2344, %v2341
    %v2510 = vpack.c.b16 %v2345, %v2342
    %v2511 = vpack.c.b16 %v2349, %v2346
    %v2512 = vpack.c.b16 %v2350, %v2347
    %v2513 = vpack.c.b16 %v2351, %v2348
    %v2514 = vpack.c.b16 %v2355, %v2352
    %v2515 = vpack.c.b16 %v2356, %v2353
    %v2516 = vpack.c.b16 %v2357, %v2354
    %v2517 = vpack.c.b16 %v2361, %v2358
    %v2518 = vpack.c.b16 %v2362, %v2359
    %v2519 = vpack.c.b16 %v2363, %v2360
    %v2520 = vpack.c.b16 %v2367, %v2364
    %v2521 = vpack.c.b16 %v2368, %v2365
    %v2522 = vpack.c.b16 %v2369, %v2366
    %v2523 = vpack.c.b16 %v2373, %v2370
    %v2524 = vpack.c.b16 %v2374, %v2371
    %v2525 = vpack.c.b16 %v2375, %v2372
    %v2526 = vpack.c.b16 %v2379, %v2376
    %v2527 = vpack.c.b16 %v2380, %v2377
    %v2528 = vpack.c.b16 %v2381, %v2378
    %v2529 = vpack.c.b16 %v2385, %v2382
    %v2530 = vpack.c.b16 %v2386, %v2383
    %v2531 = vpack.c.b16 %v2387, %v2384
    %v2532 = vpack.c.b16 %v2391, %v2388
    %v2533 = vpack.c.b16 %v2392, %v2389
    %v2534 = vpack.c.b16 %v2393, %v2390
    %v2535 = vpack.c.b16 %v2397, %v2394
    %v2536 = vpack.c.b16 %v2398, %v2395
    %v2537 = vpack.c.b16 %v2399, %v2396
    %v2538 = vpack.c.b16 %v2403, %v2400
    %v2539 = vpack.c.b16 %v2404, %v2401
    %v2540 = vpack.c.b16 %v2405, %v2402
    %v2541 = vpack.c.b16 %v2409, %v2406
    %v2542 = vpack.c.b16 %v2410, %v2407
    %v2543 = vpack.c.b16 %v2411, %v2408
    %v2544 = vpack.c.b16 %v2415, %v2412
    %v2545 = vpack.c.b16 %v2416, %v2413
    %v2546 = vpack.c.b16 %v2417, %v2414
    %v2547 = vpack.c.b16 %v2421, %v2418
    %v2548 = vpack.c.b16 %v2422, %v2419
    %v2549 = vpack.c.b16 %v2423, %v2420
    %v2550 = vpack.c.b16 %v2427, %v2424
    %v2551 = vpack.c.b16 %v2428, %v2425
    %v2552 = vpack.c.b16 %v2429, %v2426
    %v2553 = vpack.c.b16 %v2433, %v2430
    %v2554 = vpack.c.b16 %v2434, %v2431
    %v2555 = vpack.c.b16 %v2435, %v2432
    %v2556 = vpack.c.b16 %v2439, %v2436
    %v2557 = vpack.c.b16 %v2440, %v2437
    %v2558 = vpack.c.b16 %v2441, %v2438
    %v2559 = vpack.c.b16 %v2445, %v2442
    %v2560 = vpack.c.b16 %v2446, %v2443
    %v2561 = vpack.c.b16 %v2447, %v2444
    %v2562 = vpack.c.b16 %v2451, %v2448
    %v2563 = vpack.c.b16 %v2452, %v2449
    %v2564 = vpack.c.b16 %v2453, %v2450
    %vm2673 = vcmask 605184
    %v2675 = vsel %vm2673, %v1815, 0
    %v2678 = vsel %vm2673, %v1820, 0
    %v2681 = vsel %vm2673, %v1825, 0
    %v2684 = vsel %vm2673, %v1830, 0
    %v2687 = vsel %vm2673, %v1835, 0
    %v2690 = vsel %vm2673, %v1840, 0
    %v2693 = vsel %vm2673, %v1845, 0
    %v2696 = vsel %vm2673, %v1850, 0
    %v2699 = vsel %vm2673, %v1855, 0
    %v2702 = vsel %vm2673, %v1860, 0
    %v2705 = vsel %vm2673, %v1865, 0
    %v2708 = vsel %vm2673, %v1870, 0
    %v2711 = vsel %vm2673, %v1875, 0
    %v2714 = vsel %vm2673, %v1880, 0
    %v2717 = vsel %vm2673, %v1885, 0
    %v2720 = vsel %vm2673, %v1890, 0
    %v2723 = vsel %vm2673, %v1895, 0
    %v2726 = vsel %vm2673, %v1900, 0
    %v2729 = vsel %vm2673, %v1905, 0
    %v2732 = vsel %vm2673, %v1910, 0
    %v2735 = vsel %vm2673, %v1915, 0
    %v2738 = vsel %vm2673, %v1920, 0
    %v2741 = vsel %vm2673, %v1925, 0
    %v2744 = vsel %vm2673, %v1930, 0
    %v2747 = vsel %vm2673, %v1935, 0
    %vm2749 = vcmask 1044480
    %v2751 = vsel %vm2749, %v2562, 0
    %v2754 = vsel %vm2749, %v2563, 0
    %v2757 = vsel %vm2749, %v2564, 0
    %2759 = vmatprep.subr.bf16.mxu0 %v2455
    %2760 = vmatpush1.bf16.msra.mxu0 %v2454
    %2761 = vmatprep.subr.bf16.mxu0 %v2458
    %2762 = vmatpush1.bf16.msra.mxu0 %v2457
    %2763 = vmatprep.subr.bf16.mxu0 %v2461
    %2764 = vmatpush1.bf16.msra.mxu0 %v2460
    %2765 = vmatprep.subr.bf16.mxu0 %v2464
    %2766 = vmatpush1.bf16.msra.mxu0 %v2463
    %2767 = vmatprep.subr.bf16.mxu0 %v2467
    %2768 = vmatpush1.bf16.msra.mxu0 %v2466
    %2769 = vmatprep.subr.bf16.mxu0 %v2470
    %2770 = vmatpush1.bf16.msra.mxu0 %v2469
    %2771 = vmatprep.subr.bf16.mxu0 %v2473
    %2772 = vmatpush1.bf16.msra.mxu0 %v2472
    %2773 = vmatprep.subr.bf16.mxu0 %v2476
    %2774 = vmatpush1.bf16.msra.mxu0 %v2475
    %2775 = vmatprep.subr.bf16.mxu0 %v2479
    %2776 = vmatpush1.bf16.msra.mxu0 %v2478
    %2777 = vmatprep.subr.bf16.mxu0 %v2482
    %2778 = vmatpush1.bf16.msra.mxu0 %v2481
    %2779 = vmatprep.subr.bf16.mxu0 %v2485
    %2780 = vmatpush1.bf16.msra.mxu0 %v2484
    %2781 = vmatprep.subr.bf16.mxu0 %v2488
    %2782 = vmatpush1.bf16.msra.mxu0 %v2487
    %2783 = vmatprep.subr.bf16.mxu0 %v2491
    %2784 = vmatpush1.bf16.msra.mxu0 %v2490
    %2785 = vmatprep.subr.bf16.mxu0 %v2494
    %2786 = vmatpush1.bf16.msra.mxu0 %v2493
    %2787 = vmatprep.subr.bf16.mxu0 %v2497
    %2788 = vmatpush1.bf16.msra.mxu0 %v2496
    %2789 = vmatprep.subr.bf16.mxu0 %v2500
    %2790 = vmatpush1.bf16.msra.mxu0 %v2499
    %2791 = vmatprep.mubr.bf16.mxu0 %v1812
    %2792 = vmatmul.mubr.bf16.gmra.mrb[0].mxu0 %v1811
    %v2793 = vpop.f32.mrb[0].mxu0
    %v2794 = vadd.f32 0.0, %v2793
    %v2795 = vpop.f32.mrb[0].mxu0
    %v2796 = vadd.f32 0.0, %v2795
    %v2797 = vpop.f32.mrb[0].mxu0
    %v2798 = vadd.f32 0.0, %v2797
    %v2799 = vpop.f32.mrb[0].mxu0
    %v2800 = vadd.f32 0.0, %v2799
    %2801 = vmatprep.mubr.bf16.mxu0 %v1817
    %2802 = vmatmul.mubr.bf16.gmra.mrb[0].mxu0 %v1816
    %v2803 = vpop.f32.mrb[0].mxu0
    %v2804 = vadd.f32 0.0, %v2803
    %v2805 = vpop.f32.mrb[0].mxu0
    %v2806 = vadd.f32 0.0, %v2805
    %v2807 = vpop.f32.mrb[0].mxu0
    %v2808 = vadd.f32 0.0, %v2807
    %v2809 = vpop.f32.mrb[0].mxu0
    %v2810 = vadd.f32 0.0, %v2809
    %2811 = vmatprep.mubr.bf16.mxu0 %v1822
    %2812 = vmatmul.mubr.bf16.gmra.mrb[0].mxu0 %v1821
    %v2813 = vpop.f32.mrb[0].mxu0
    %v2814 = vadd.f32 0.0, %v2813
    %v2815 = vpop.f32.mrb[0].mxu0
    %v2816 = vadd.f32 0.0, %v2815
    %v2817 = vpop.f32.mrb[0].mxu0
    %v2818 = vadd.f32 0.0, %v2817
    %v2819 = vpop.f32.mrb[0].mxu0
    %v2820 = vadd.f32 0.0, %v2819
    %2821 = vmatprep.mubr.bf16.mxu0 %v1827
    %2822 = vmatmul.mubr.bf16.gmra.mrb[0].mxu0 %v1826
    %v2823 = vpop.f32.mrb[0].mxu0
    %v2824 = vadd.f32 0.0, %v2823
    %v2825 = vpop.f32.mrb[0].mxu0
    %v2826 = vadd.f32 0.0, %v2825
    %v2827 = vpop.f32.mrb[0].mxu0
    %v2828 = vadd.f32 0.0, %v2827
    %v2829 = vpop.f32.mrb[0].mxu0
    %v2830 = vadd.f32 0.0, %v2829
    %2831 = vmatprep.mubr.bf16.mxu0 %v1832
    %2832 = vmatmul.mubr.bf16.gmra.mrb[0].mxu0 %v1831
    %v2833 = vpop.f32.mrb[0].mxu0
    %v2834 = vadd.f32 0.0, %v2833
    %v2835 = vpop.f32.mrb[0].mxu0
    %v2836 = vadd.f32 0.0, %v2835
    %v2837 = vpop.f32.mrb[0].mxu0
    %v2838 = vadd.f32 0.0, %v2837
    %v2839 = vpop.f32.mrb[0].mxu0
    %v2840 = vadd.f32 0.0, %v2839
    %2841 = vmatprep.mubr.bf16.mxu0 %v1837
    %2842 = vmatmul.mubr.bf16.gmra.mrb[0].mxu0 %v1836
    %v2843 = vpop.f32.mrb[0].mxu0
    %v2844 = vadd.f32 0.0, %v2843
    %v2845 = vpop.f32.mrb[0].mxu0
    %v2846 = vadd.f32 0.0, %v2845
    %v2847 = vpop.f32.mrb[0].mxu0
    %v2848 = vadd.f32 0.0, %v2847
    %v2849 = vpop.f32.mrb[0].mxu0
    %v2850 = vadd.f32 0.0, %v2849
    %2851 = vmatprep.mubr.bf16.mxu0 %v1842
    %2852 = vmatmul.mubr.bf16.gmra.mrb[0].mxu0 %v1841
    %v2853 = vpop.f32.mrb[0].mxu0
    %v2854 = vadd.f32 0.0, %v2853
    %v2855 = vpop.f32.mrb[0].mxu0
    %v2856 = vadd.f32 0.0, %v2855
    %v2857 = vpop.f32.mrb[0].mxu0
    %v2858 = vadd.f32 0.0, %v2857
    %v2859 = vpop.f32.mrb[0].mxu0
    %v2860 = vadd.f32 0.0, %v2859
    %2861 = vmatprep.mubr.bf16.mxu0 %v1847
    %2862 = vmatmul.mubr.bf16.gmra.mrb[0].mxu0 %v1846
    %v2863 = vpop.f32.mrb[0].mxu0
    %v2864 = vadd.f32 0.0, %v2863
    %v2865 = vpop.f32.mrb[0].mxu0
    %v2866 = vadd.f32 0.0, %v2865
    %v2867 = vpop.f32.mrb[0].mxu0
    %v2868 = vadd.f32 0.0, %v2867
    %v2869 = vpop.f32.mrb[0].mxu0
    %v2870 = vadd.f32 0.0, %v2869
    %2871 = vmatprep.mubr.bf16.mxu0 %v1852
    %2872 = vmatmul.mubr.bf16.gmra.mrb[0].mxu0 %v1851
    %v2873 = vpop.f32.mrb[0].mxu0
    %v2874 = vadd.f32 0.0, %v2873
    %v2875 = vpop.f32.mrb[0].mxu0
    %v2876 = vadd.f32 0.0, %v2875
    %v2877 = vpop.f32.mrb[0].mxu0
    %v2878 = vadd.f32 0.0, %v2877
    %v2879 = vpop.f32.mrb[0].mxu0
    %v2880 = vadd.f32 0.0, %v2879
    %2881 = vmatprep.mubr.bf16.mxu0 %v1857
    %2882 = vmatmul.mubr.bf16.gmra.mrb[0].mxu0 %v1856
    %v2883 = vpop.f32.mrb[0].mxu0
    %v2884 = vadd.f32 0.0, %v2883
    %v2885 = vpop.f32.mrb[0].mxu0
    %v2886 = vadd.f32 0.0, %v2885
    %v2887 = vpop.f32.mrb[0].mxu0
    %v2888 = vadd.f32 0.0, %v2887
    %v2889 = vpop.f32.mrb[0].mxu0
    %v2890 = vadd.f32 0.0, %v2889
    %2891 = vmatprep.mubr.bf16.mxu0 %v1862
    %2892 = vmatmul.mubr.bf16.gmra.mrb[0].mxu0 %v1861
    %v2893 = vpop.f32.mrb[0].mxu0
    %v2894 = vadd.f32 0.0, %v2893
    %v2895 = vpop.f32.mrb[0].mxu0
    %v2896 = vadd.f32 0.0, %v2895
    %v2897 = vpop.f32.mrb[0].mxu0
    %v2898 = vadd.f32 0.0, %v2897
    %v2899 = vpop.f32.mrb[0].mxu0
    %v2900 = vadd.f32 0.0, %v2899
    %2901 = vmatprep.mubr.bf16.mxu0 %v1867
    %2902 = vmatmul.mubr.bf16.gmra.mrb[0].mxu0 %v1866
    %v2903 = vpop.f32.mrb[0].mxu0
    %v2904 = vadd.f32 0.0, %v2903
    %v2905 = vpop.f32.mrb[0].mxu0
    %v2906 = vadd.f32 0.0, %v2905
    %v2907 = vpop.f32.mrb[0].mxu0
    %v2908 = vadd.f32 0.0, %v2907
    %v2909 = vpop.f32.mrb[0].mxu0
    %v2910 = vadd.f32 0.0, %v2909
    %2911 = vmatprep.mubr.bf16.mxu0 %v1872
    %2912 = vmatmul.mubr.bf16.gmra.mrb[0].mxu0 %v1871
    %v2913 = vpop.f32.mrb[0].mxu0
    %v2914 = vadd.f32 0.0, %v2913
    %v2915 = vpop.f32.mrb[0].mxu0
    %v2916 = vadd.f32 0.0, %v2915
    %v2917 = vpop.f32.mrb[0].mxu0
    %v2918 = vadd.f32 0.0, %v2917
    %v2919 = vpop.f32.mrb[0].mxu0
    %v2920 = vadd.f32 0.0, %v2919
    %2921 = vmatprep.mubr.bf16.mxu0 %v1877
    %2922 = vmatmul.mubr.bf16.gmra.mrb[0].mxu0 %v1876
    %v2923 = vpop.f32.mrb[0].mxu0
    %v2924 = vadd.f32 0.0, %v2923
    %v2925 = vpop.f32.mrb[0].mxu0
    %v2926 = vadd.f32 0.0, %v2925
    %v2927 = vpop.f32.mrb[0].mxu0
    %v2928 = vadd.f32 0.0, %v2927
    %v2929 = vpop.f32.mrb[0].mxu0
    %v2930 = vadd.f32 0.0, %v2929
    %2931 = vmatprep.mubr.bf16.mxu0 %v1882
    %2932 = vmatmul.mubr.bf16.gmra.mrb[0].mxu0 %v1881
    %v2933 = vpop.f32.mrb[0].mxu0
    %v2934 = vadd.f32 0.0, %v2933
    %v2935 = vpop.f32.mrb[0].mxu0
    %v2936 = vadd.f32 0.0, %v2935
    %v2937 = vpop.f32.mrb[0].mxu0
    %v2938 = vadd.f32 0.0, %v2937
    %v2939 = vpop.f32.mrb[0].mxu0
    %v2940 = vadd.f32 0.0, %v2939
    %2941 = vmatprep.mubr.bf16.mxu0 %v1887
    %2942 = vmatmul.mubr.bf16.gmra.mrb[0].mxu0 %v1886
    %v2943 = vpop.f32.mrb[0].mxu0
    %v2944 = vadd.f32 0.0, %v2943
    %v2945 = vpop.f32.mrb[0].mxu0
    %v2946 = vadd.f32 0.0, %v2945
    %v2947 = vpop.f32.mrb[0].mxu0
    %v2948 = vadd.f32 0.0, %v2947
    %v2949 = vpop.f32.mrb[0].mxu0
    %v2950 = vadd.f32 0.0, %v2949
    %2951 = vmatprep.mubr.bf16.mxu0 %v1892
    %2952 = vmatmul.mubr.bf16.gmra.mrb[0].mxu0 %v1891
    %v2953 = vpop.f32.mrb[0].mxu0
    %v2954 = vadd.f32 0.0, %v2953
    %v2955 = vpop.f32.mrb[0].mxu0
    %v2956 = vadd.f32 0.0, %v2955
    %v2957 = vpop.f32.mrb[0].mxu0
    %v2958 = vadd.f32 0.0, %v2957
    %v2959 = vpop.f32.mrb[0].mxu0
    %v2960 = vadd.f32 0.0, %v2959
    %2961 = vmatprep.mubr.bf16.mxu0 %v1897
    %2962 = vmatmul.mubr.bf16.gmra.mrb[0].mxu0 %v1896
    %v2963 = vpop.f32.mrb[0].mxu0
    %v2964 = vadd.f32 0.0, %v2963
    %v2965 = vpop.f32.mrb[0].mxu0
    %v2966 = vadd.f32 0.0, %v2965
    %v2967 = vpop.f32.mrb[0].mxu0
    %v2968 = vadd.f32 0.0, %v2967
    %v2969 = vpop.f32.mrb[0].mxu0
    %v2970 = vadd.f32 0.0, %v2969
    %2971 = vmatprep.mubr.bf16.mxu0 %v1902
    %2972 = vmatmul.mubr.bf16.gmra.mrb[0].mxu0 %v1901
    %v2973 = vpop.f32.mrb[0].mxu0
    %v2974 = vadd.f32 0.0, %v2973
    %v2975 = vpop.f32.mrb[0].mxu0
    %v2976 = vadd.f32 0.0, %v2975
    %v2977 = vpop.f32.mrb[0].mxu0
    %v2978 = vadd.f32 0.0, %v2977
    %v2979 = vpop.f32.mrb[0].mxu0
    %v2980 = vadd.f32 0.0, %v2979
    %2981 = vmatprep.mubr.bf16.mxu0 %v1907
    %2982 = vmatmul.mubr.bf16.gmra.mrb[0].mxu0 %v1906
    %v2983 = vpop.f32.mrb[0].mxu0
    %v2984 = vadd.f32 0.0, %v2983
    %v2985 = vpop.f32.mrb[0].mxu0
    %v2986 = vadd.f32 0.0, %v2985
    %v2987 = vpop.f32.mrb[0].mxu0
    %v2988 = vadd.f32 0.0, %v2987
    %v2989 = vpop.f32.mrb[0].mxu0
    %v2990 = vadd.f32 0.0, %v2989
    %2991 = vmatprep.mubr.bf16.mxu0 %v1912
    %2992 = vmatmul.mubr.bf16.gmra.mrb[0].mxu0 %v1911
    %v2993 = vpop.f32.mrb[0].mxu0
    %v2994 = vadd.f32 0.0, %v2993
    %v2995 = vpop.f32.mrb[0].mxu0
    %v2996 = vadd.f32 0.0, %v2995
    %v2997 = vpop.f32.mrb[0].mxu0
    %v2998 = vadd.f32 0.0, %v2997
    %v2999 = vpop.f32.mrb[0].mxu0
    %v3000 = vadd.f32 0.0, %v2999
    %3001 = vmatprep.mubr.bf16.mxu0 %v1917
    %3002 = vmatmul.mubr.bf16.gmra.mrb[0].mxu0 %v1916
    %v3003 = vpop.f32.mrb[0].mxu0
    %v3004 = vadd.f32 0.0, %v3003
    %v3005 = vpop.f32.mrb[0].mxu0
    %v3006 = vadd.f32 0.0, %v3005
    %v3007 = vpop.f32.mrb[0].mxu0
    %v3008 = vadd.f32 0.0, %v3007
    %v3009 = vpop.f32.mrb[0].mxu0
    %v3010 = vadd.f32 0.0, %v3009
    %3011 = vmatprep.mubr.bf16.mxu0 %v1922
    %3012 = vmatmul.mubr.bf16.gmra.mrb[0].mxu0 %v1921
    %v3013 = vpop.f32.mrb[0].mxu0
    %v3014 = vadd.f32 0.0, %v3013
    %v3015 = vpop.f32.mrb[0].mxu0
    %v3016 = vadd.f32 0.0, %v3015
    %v3017 = vpop.f32.mrb[0].mxu0
    %v3018 = vadd.f32 0.0, %v3017
    %v3019 = vpop.f32.mrb[0].mxu0
    %v3020 = vadd.f32 0.0, %v3019
    %3021 = vmatprep.mubr.bf16.mxu0 %v1927
    %3022 = vmatmul.mubr.bf16.gmra.mrb[0].mxu0 %v1926
    %v3023 = vpop.f32.mrb[0].mxu0
    %v3024 = vadd.f32 0.0, %v3023
    %v3025 = vpop.f32.mrb[0].mxu0
    %v3026 = vadd.f32 0.0, %v3025
    %v3027 = vpop.f32.mrb[0].mxu0
    %v3028 = vadd.f32 0.0, %v3027
    %v3029 = vpop.f32.mrb[0].mxu0
    %v3030 = vadd.f32 0.0, %v3029
    %3031 = vmatprep.mubr.bf16.mxu0 %v1932
    %3032 = vmatmul.mubr.bf16.gmra.mrb[0].mxu0 %v1931
    %v3033 = vpop.f32.mrb[0].mxu0
    %v3034 = vadd.f32 0.0, %v3033
    %v3035 = vpop.f32.mrb[0].mxu0
    %v3036 = vadd.f32 0.0, %v3035
    %v3037 = vpop.f32.mrb[0].mxu0
    %v3038 = vadd.f32 0.0, %v3037
    %v3039 = vpop.f32.mrb[0].mxu0
    %v3040 = vadd.f32 0.0, %v3039
    %3041 = vdwg.mxu0
    %3042 = vmatprep.subr.bf16.mxu0 %v2503
    %3043 = vmatpush1.bf16.msra.mxu0 %v2502
    %3044 = vmatprep.subr.bf16.mxu0 %v2506
    %3045 = vmatpush1.bf16.msra.mxu0 %v2505
    %3046 = vmatprep.subr.bf16.mxu0 %v2509
    %3047 = vmatpush1.bf16.msra.mxu0 %v2508
    %3048 = vmatprep.subr.bf16.mxu0 %v2512
    %3049 = vmatpush1.bf16.msra.mxu0 %v2511
    %3050 = vmatprep.subr.bf16.mxu0 %v2515
    %3051 = vmatpush1.bf16.msra.mxu0 %v2514
    %3052 = vmatprep.subr.bf16.mxu0 %v2518
    %3053 = vmatpush1.bf16.msra.mxu0 %v2517
    %3054 = vmatprep.subr.bf16.mxu0 %v2521
    %3055 = vmatpush1.bf16.msra.mxu0 %v2520
    %3056 = vmatprep.subr.bf16.mxu0 %v2524
    %3057 = vmatpush1.bf16.msra.mxu0 %v2523
    %3058 = vmatprep.subr.bf16.mxu0 %v2527
    %3059 = vmatpush1.bf16.msra.mxu0 %v2526
    %3060 = vmatprep.subr.bf16.mxu0 %v2530
    %3061 = vmatpush1.bf16.msra.mxu0 %v2529
    %3062 = vmatprep.subr.bf16.mxu0 %v2533
    %3063 = vmatpush1.bf16.msra.mxu0 %v2532
    %3064 = vmatprep.subr.bf16.mxu0 %v2536
    %3065 = vmatpush1.bf16.msra.mxu0 %v2535
    %3066 = vmatprep.subr.bf16.mxu0 %v2539
    %3067 = vmatpush1.bf16.msra.mxu0 %v2538
    %3068 = vmatprep.subr.bf16.mxu0 %v2542
    %3069 = vmatpush1.bf16.msra.mxu0 %v2541
    %3070 = vmatprep.subr.bf16.mxu0 %v2545
    %3071 = vmatpush1.bf16.msra.mxu0 %v2544
    %3072 = vmatprep.subr.bf16.mxu0 %v2548
    %3073 = vmatpush1.bf16.msra.mxu0 %v2547
    %3074 = vmatprep.mubr.bf16.mxu0 %v1814
    %3075 = vmatmul.mubr.bf16.gmra.mrb[0].mxu0 %v1813
    %v3076 = vpop.f32.mrb[0].mxu0
    %v3077 = vadd.f32 %v2794, %v3076
    %v3078 = vpop.f32.mrb[0].mxu0
    %v3079 = vadd.f32 %v2796, %v3078
    %v3080 = vpop.f32.mrb[0].mxu0
    %v3081 = vadd.f32 %v2798, %v3080
    %v3082 = vpop.f32.mrb[0].mxu0
    %v3083 = vadd.f32 %v2800, %v3082
    %3084 = vmatprep.mubr.bf16.mxu0 %v1819
    %3085 = vmatmul.mubr.bf16.gmra.mrb[0].mxu0 %v1818
    %v3086 = vpop.f32.mrb[0].mxu0
    %v3087 = vadd.f32 %v2804, %v3086
    %v3088 = vpop.f32.mrb[0].mxu0
    %v3089 = vadd.f32 %v2806, %v3088
    %v3090 = vpop.f32.mrb[0].mxu0
    %v3091 = vadd.f32 %v2808, %v3090
    %v3092 = vpop.f32.mrb[0].mxu0
    %v3093 = vadd.f32 %v2810, %v3092
    %3094 = vmatprep.mubr.bf16.mxu0 %v1824
    %3095 = vmatmul.mubr.bf16.gmra.mrb[0].mxu0 %v1823
    %v3096 = vpop.f32.mrb[0].mxu0
    %v3097 = vadd.f32 %v2814, %v3096
    %v3098 = vpop.f32.mrb[0].mxu0
    %v3099 = vadd.f32 %v2816, %v3098
    %v3100 = vpop.f32.mrb[0].mxu0
    %v3101 = vadd.f32 %v2818, %v3100
    %v3102 = vpop.f32.mrb[0].mxu0
    %v3103 = vadd.f32 %v2820, %v3102
    %3104 = vmatprep.mubr.bf16.mxu0 %v1829
    %3105 = vmatmul.mubr.bf16.gmra.mrb[0].mxu0 %v1828
    %v3106 = vpop.f32.mrb[0].mxu0
    %v3107 = vadd.f32 %v2824, %v3106
    %v3108 = vpop.f32.mrb[0].mxu0
    %v3109 = vadd.f32 %v2826, %v3108
    %v3110 = vpop.f32.mrb[0].mxu0
    %v3111 = vadd.f32 %v2828, %v3110
    %v3112 = vpop.f32.mrb[0].mxu0
    %v3113 = vadd.f32 %v2830, %v3112
    %3114 = vmatprep.mubr.bf16.mxu0 %v1834
    %3115 = vmatmul.mubr.bf16.gmra.mrb[0].mxu0 %v1833
    %v3116 = vpop.f32.mrb[0].mxu0
    %v3117 = vadd.f32 %v2834, %v3116
    %v3118 = vpop.f32.mrb[0].mxu0
    %v3119 = vadd.f32 %v2836, %v3118
    %v3120 = vpop.f32.mrb[0].mxu0
    %v3121 = vadd.f32 %v2838, %v3120
    %v3122 = vpop.f32.mrb[0].mxu0
    %v3123 = vadd.f32 %v2840, %v3122
    %3124 = vmatprep.mubr.bf16.mxu0 %v1839
    %3125 = vmatmul.mubr.bf16.gmra.mrb[0].mxu0 %v1838
    %v3126 = vpop.f32.mrb[0].mxu0
    %v3127 = vadd.f32 %v2844, %v3126
    %v3128 = vpop.f32.mrb[0].mxu0
    %v3129 = vadd.f32 %v2846, %v3128
    %v3130 = vpop.f32.mrb[0].mxu0
    %v3131 = vadd.f32 %v2848, %v3130
    %v3132 = vpop.f32.mrb[0].mxu0
    %v3133 = vadd.f32 %v2850, %v3132
    %3134 = vmatprep.mubr.bf16.mxu0 %v1844
    %3135 = vmatmul.mubr.bf16.gmra.mrb[0].mxu0 %v1843
    %v3136 = vpop.f32.mrb[0].mxu0
    %v3137 = vadd.f32 %v2854, %v3136
    %v3138 = vpop.f32.mrb[0].mxu0
    %v3139 = vadd.f32 %v2856, %v3138
    %v3140 = vpop.f32.mrb[0].mxu0
    %v3141 = vadd.f32 %v2858, %v3140
    %v3142 = vpop.f32.mrb[0].mxu0
    %v3143 = vadd.f32 %v2860, %v3142
    %3144 = vmatprep.mubr.bf16.mxu0 %v1849
    %3145 = vmatmul.mubr.bf16.gmra.mrb[0].mxu0 %v1848
    %v3146 = vpop.f32.mrb[0].mxu0
    %v3147 = vadd.f32 %v2864, %v3146
    %v3148 = vpop.f32.mrb[0].mxu0
    %v3149 = vadd.f32 %v2866, %v3148
    %v3150 = vpop.f32.mrb[0].mxu0
    %v3151 = vadd.f32 %v2868, %v3150
    %v3152 = vpop.f32.mrb[0].mxu0
    %v3153 = vadd.f32 %v2870, %v3152
    %3154 = vmatprep.mubr.bf16.mxu0 %v1854
    %3155 = vmatmul.mubr.bf16.gmra.mrb[0].mxu0 %v1853
    %v3156 = vpop.f32.mrb[0].mxu0
    %v3157 = vadd.f32 %v2874, %v3156
    %v3158 = vpop.f32.mrb[0].mxu0
    %v3159 = vadd.f32 %v2876, %v3158
    %v3160 = vpop.f32.mrb[0].mxu0
    %v3161 = vadd.f32 %v2878, %v3160
    %v3162 = vpop.f32.mrb[0].mxu0
    %v3163 = vadd.f32 %v2880, %v3162
    %3164 = vmatprep.mubr.bf16.mxu0 %v1859
    %3165 = vmatmul.mubr.bf16.gmra.mrb[0].mxu0 %v1858
    %v3166 = vpop.f32.mrb[0].mxu0
    %v3167 = vadd.f32 %v2884, %v3166
    %v3168 = vpop.f32.mrb[0].mxu0
    %v3169 = vadd.f32 %v2886, %v3168
    %v3170 = vpop.f32.mrb[0].mxu0
    %v3171 = vadd.f32 %v2888, %v3170
    %v3172 = vpop.f32.mrb[0].mxu0
    %v3173 = vadd.f32 %v2890, %v3172
    %3174 = vmatprep.mubr.bf16.mxu0 %v1864
    %3175 = vmatmul.mubr.bf16.gmra.mrb[0].mxu0 %v1863
    %v3176 = vpop.f32.mrb[0].mxu0
    %v3177 = vadd.f32 %v2894, %v3176
    %v3178 = vpop.f32.mrb[0].mxu0
    %v3179 = vadd.f32 %v2896, %v3178
    %v3180 = vpop.f32.mrb[0].mxu0
    %v3181 = vadd.f32 %v2898, %v3180
    %v3182 = vpop.f32.mrb[0].mxu0
    %v3183 = vadd.f32 %v2900, %v3182
    %3184 = vmatprep.mubr.bf16.mxu0 %v1869
    %3185 = vmatmul.mubr.bf16.gmra.mrb[0].mxu0 %v1868
    %v3186 = vpop.f32.mrb[0].mxu0
    %v3187 = vadd.f32 %v2904, %v3186
    %v3188 = vpop.f32.mrb[0].mxu0
    %v3189 = vadd.f32 %v2906, %v3188
    %v3190 = vpop.f32.mrb[0].mxu0
    %v3191 = vadd.f32 %v2908, %v3190
    %v3192 = vpop.f32.mrb[0].mxu0
    %v3193 = vadd.f32 %v2910, %v3192
    %3194 = vmatprep.mubr.bf16.mxu0 %v1874
    %3195 = vmatmul.mubr.bf16.gmra.mrb[0].mxu0 %v1873
    %v3196 = vpop.f32.mrb[0].mxu0
    %v3197 = vadd.f32 %v2914, %v3196
    %v3198 = vpop.f32.mrb[0].mxu0
    %v3199 = vadd.f32 %v2916, %v3198
    %v3200 = vpop.f32.mrb[0].mxu0
    %v3201 = vadd.f32 %v2918, %v3200
    %v3202 = vpop.f32.mrb[0].mxu0
    %v3203 = vadd.f32 %v2920, %v3202
    %3204 = vmatprep.mubr.bf16.mxu0 %v1879
    %3205 = vmatmul.mubr.bf16.gmra.mrb[0].mxu0 %v1878
    %v3206 = vpop.f32.mrb[0].mxu0
    %v3207 = vadd.f32 %v2924, %v3206
    %v3208 = vpop.f32.mrb[0].mxu0
    %v3209 = vadd.f32 %v2926, %v3208
    %v3210 = vpop.f32.mrb[0].mxu0
    %v3211 = vadd.f32 %v2928, %v3210
    %v3212 = vpop.f32.mrb[0].mxu0
    %v3213 = vadd.f32 %v2930, %v3212
    %3214 = vmatprep.mubr.bf16.mxu0 %v1884
    %3215 = vmatmul.mubr.bf16.gmra.mrb[0].mxu0 %v1883
    %v3216 = vpop.f32.mrb[0].mxu0
    %v3217 = vadd.f32 %v2934, %v3216
    %v3218 = vpop.f32.mrb[0].mxu0
    %v3219 = vadd.f32 %v2936, %v3218
    %v3220 = vpop.f32.mrb[0].mxu0
    %v3221 = vadd.f32 %v2938, %v3220
    %v3222 = vpop.f32.mrb[0].mxu0
    %v3223 = vadd.f32 %v2940, %v3222
    %3224 = vmatprep.mubr.bf16.mxu0 %v1889
    %3225 = vmatmul.mubr.bf16.gmra.mrb[0].mxu0 %v1888
    %v3226 = vpop.f32.mrb[0].mxu0
    %v3227 = vadd.f32 %v2944, %v3226
    %v3228 = vpop.f32.mrb[0].mxu0
    %v3229 = vadd.f32 %v2946, %v3228
    %v3230 = vpop.f32.mrb[0].mxu0
    %v3231 = vadd.f32 %v2948, %v3230
    %v3232 = vpop.f32.mrb[0].mxu0
    %v3233 = vadd.f32 %v2950, %v3232
    %3234 = vmatprep.mubr.bf16.mxu0 %v1894
    %3235 = vmatmul.mubr.bf16.gmra.mrb[0].mxu0 %v1893
    %v3236 = vpop.f32.mrb[0].mxu0
    %v3237 = vadd.f32 %v2954, %v3236
    %v3238 = vpop.f32.mrb[0].mxu0
    %v3239 = vadd.f32 %v2956, %v3238
    %v3240 = vpop.f32.mrb[0].mxu0
    %v3241 = vadd.f32 %v2958, %v3240
    %v3242 = vpop.f32.mrb[0].mxu0
    %v3243 = vadd.f32 %v2960, %v3242
    %3244 = vmatprep.mubr.bf16.mxu0 %v1899
    %3245 = vmatmul.mubr.bf16.gmra.mrb[0].mxu0 %v1898
    %v3246 = vpop.f32.mrb[0].mxu0
    %v3247 = vadd.f32 %v2964, %v3246
    %v3248 = vpop.f32.mrb[0].mxu0
    %v3249 = vadd.f32 %v2966, %v3248
    %v3250 = vpop.f32.mrb[0].mxu0
    %v3251 = vadd.f32 %v2968, %v3250
    %v3252 = vpop.f32.mrb[0].mxu0
    %v3253 = vadd.f32 %v2970, %v3252
    %3254 = vmatprep.mubr.bf16.mxu0 %v1904
    %3255 = vmatmul.mubr.bf16.gmra.mrb[0].mxu0 %v1903
    %v3256 = vpop.f32.mrb[0].mxu0
    %v3257 = vadd.f32 %v2974, %v3256
    %v3258 = vpop.f32.mrb[0].mxu0
    %v3259 = vadd.f32 %v2976, %v3258
    %v3260 = vpop.f32.mrb[0].mxu0
    %v3261 = vadd.f32 %v2978, %v3260
    %v3262 = vpop.f32.mrb[0].mxu0
    %v3263 = vadd.f32 %v2980, %v3262
    %3264 = vmatprep.mubr.bf16.mxu0 %v1909
    %3265 = vmatmul.mubr.bf16.gmra.mrb[0].mxu0 %v1908
    %v3266 = vpop.f32.mrb[0].mxu0
    %v3267 = vadd.f32 %v2984, %v3266
    %v3268 = vpop.f32.mrb[0].mxu0
    %v3269 = vadd.f32 %v2986, %v3268
    %v3270 = vpop.f32.mrb[0].mxu0
    %v3271 = vadd.f32 %v2988, %v3270
    %v3272 = vpop.f32.mrb[0].mxu0
    %v3273 = vadd.f32 %v2990, %v3272
    %3274 = vmatprep.mubr.bf16.mxu0 %v1914
    %3275 = vmatmul.mubr.bf16.gmra.mrb[0].mxu0 %v1913
    %v3276 = vpop.f32.mrb[0].mxu0
    %v3277 = vadd.f32 %v2994, %v3276
    %v3278 = vpop.f32.mrb[0].mxu0
    %v3279 = vadd.f32 %v2996, %v3278
    %v3280 = vpop.f32.mrb[0].mxu0
    %v3281 = vadd.f32 %v2998, %v3280
    %v3282 = vpop.f32.mrb[0].mxu0
    %v3283 = vadd.f32 %v3000, %v3282
    %3284 = vmatprep.mubr.bf16.mxu0 %v1919
    %3285 = vmatmul.mubr.bf16.gmra.mrb[0].mxu0 %v1918
    %v3286 = vpop.f32.mrb[0].mxu0
    %v3287 = vadd.f32 %v3004, %v3286
    %v3288 = vpop.f32.mrb[0].mxu0
    %v3289 = vadd.f32 %v3006, %v3288
    %v3290 = vpop.f32.mrb[0].mxu0
    %v3291 = vadd.f32 %v3008, %v3290
    %v3292 = vpop.f32.mrb[0].mxu0
    %v3293 = vadd.f32 %v3010, %v3292
    %3294 = vmatprep.mubr.bf16.mxu0 %v1924
    %3295 = vmatmul.mubr.bf16.gmra.mrb[0].mxu0 %v1923
    %v3296 = vpop.f32.mrb[0].mxu0
    %v3297 = vadd.f32 %v3014, %v3296
    %v3298 = vpop.f32.mrb[0].mxu0
    %v3299 = vadd.f32 %v3016, %v3298
    %v3300 = vpop.f32.mrb[0].mxu0
    %v3301 = vadd.f32 %v3018, %v3300
    %v3302 = vpop.f32.mrb[0].mxu0
    %v3303 = vadd.f32 %v3020, %v3302
    %3304 = vmatprep.mubr.bf16.mxu0 %v1929
    %3305 = vmatmul.mubr.bf16.gmra.mrb[0].mxu0 %v1928
    %v3306 = vpop.f32.mrb[0].mxu0
    %v3307 = vadd.f32 %v3024, %v3306
    %v3308 = vpop.f32.mrb[0].mxu0
    %v3309 = vadd.f32 %v3026, %v3308
    %v3310 = vpop.f32.mrb[0].mxu0
    %v3311 = vadd.f32 %v3028, %v3310
    %v3312 = vpop.f32.mrb[0].mxu0
    %v3313 = vadd.f32 %v3030, %v3312
    %3314 = vmatprep.mubr.bf16.mxu0 %v1934
    %3315 = vmatmul.mubr.bf16.gmra.mrb[0].mxu0 %v1933
    %v3316 = vpop.f32.mrb[0].mxu0
    %v3317 = vadd.f32 %v3034, %v3316
    %v3318 = vpop.f32.mrb[0].mxu0
    %v3319 = vadd.f32 %v3036, %v3318
    %v3320 = vpop.f32.mrb[0].mxu0
    %v3321 = vadd.f32 %v3038, %v3320
    %v3322 = vpop.f32.mrb[0].mxu0
    %v3323 = vadd.f32 %v3040, %v3322
    %3324 = vdwg.mxu0
    %3325 = vmatprep.subr.bf16.mxu0 %v2551
    %3326 = vmatpush1.bf16.msra.mxu0 %v2550
    %3327 = vmatprep.subr.bf16.mxu0 %v2554
    %3328 = vmatpush1.bf16.msra.mxu0 %v2553
    %3329 = vmatprep.subr.bf16.mxu0 %v2557
    %3330 = vmatpush1.bf16.msra.mxu0 %v2556
    %3331 = vmatprep.subr.bf16.mxu0 %v2560
    %3332 = vmatpush1.bf16.msra.mxu0 %v2559
    %3333 = vmatprep.subr.bf16.mxu0 %v2754
    %3334 = vmatpush1.bf16.msra.mxu0 %v2751
    %3335 = vmatprep.subr.bf16.mxu0 0
    %3336 = vmatpush1.bf16.msra.mxu0 0
    %3337 = vmatprep.subr.bf16.mxu0 0
    %3338 = vmatpush1.bf16.msra.mxu0 0
    %3339 = vmatprep.subr.bf16.mxu0 0
    %3340 = vmatpush1.bf16.msra.mxu0 0
    %3341 = vmatprep.subr.bf16.mxu0 0
    %3342 = vmatpush1.bf16.msra.mxu0 0
    %3343 = vmatprep.subr.bf16.mxu0 0
    %3344 = vmatpush1.bf16.msra.mxu0 0
    %3345 = vmatprep.subr.bf16.mxu0 0
    %3346 = vmatpush1.bf16.msra.mxu0 0
    %3347 = vmatprep.subr.bf16.mxu0 0
    %3348 = vmatpush1.bf16.msra.mxu0 0
    %3349 = vmatprep.subr.bf16.mxu0 0
    %3350 = vmatpush1.bf16.msra.mxu0 0
    %3351 = vmatprep.subr.bf16.mxu0 0
    %3352 = vmatpush1.bf16.msra.mxu0 0
    %3353 = vmatprep.subr.bf16.mxu0 0
    %3354 = vmatpush1.bf16.msra.mxu0 0
    %3355 = vmatprep.subr.bf16.mxu0 0
    %3356 = vmatpush1.bf16.msra.mxu0 0
    %3357 = vmatprep.mubr.bf16.mxu0 0
    %3358 = vmatmul.mubr.bf16.gmra.mrb[0].mxu0 %v2675
    %v3359 = vpop.f32.mrb[0].mxu0
    %v3360 = vadd.f32 %v3077, %v3359
    %v3361 = vpop.f32.mrb[0].mxu0
    %v3362 = vadd.f32 %v3079, %v3361
    %v3363 = vpop.f32.mrb[0].mxu0
    %v3364 = vadd.f32 %v3081, %v3363
    %v3365 = vpop.f32.mrb[0].mxu0
    %v3366 = vadd.f32 %v3083, %v3365
    %3367 = vmatprep.mubr.bf16.mxu0 0
    %3368 = vmatmul.mubr.bf16.gmra.mrb[0].mxu0 %v2678
    %v3369 = vpop.f32.mrb[0].mxu0
    %v3370 = vadd.f32 %v3087, %v3369
    %v3371 = vpop.f32.mrb[0].mxu0
    %v3372 = vadd.f32 %v3089, %v3371
    %v3373 = vpop.f32.mrb[0].mxu0
    %v3374 = vadd.f32 %v3091, %v3373
    %v3375 = vpop.f32.mrb[0].mxu0
    %v3376 = vadd.f32 %v3093, %v3375
    %3377 = vmatprep.mubr.bf16.mxu0 0
    %3378 = vmatmul.mubr.bf16.gmra.mrb[0].mxu0 %v2681
    %v3379 = vpop.f32.mrb[0].mxu0
    %v3380 = vadd.f32 %v3097, %v3379
    %v3381 = vpop.f32.mrb[0].mxu0
    %v3382 = vadd.f32 %v3099, %v3381
    %v3383 = vpop.f32.mrb[0].mxu0
    %v3384 = vadd.f32 %v3101, %v3383
    %v3385 = vpop.f32.mrb[0].mxu0
    %v3386 = vadd.f32 %v3103, %v3385
    %3387 = vmatprep.mubr.bf16.mxu0 0
    %3388 = vmatmul.mubr.bf16.gmra.mrb[0].mxu0 %v2684
    %v3389 = vpop.f32.mrb[0].mxu0
    %v3390 = vadd.f32 %v3107, %v3389
    %v3391 = vpop.f32.mrb[0].mxu0
    %v3392 = vadd.f32 %v3109, %v3391
    %v3393 = vpop.f32.mrb[0].mxu0
    %v3394 = vadd.f32 %v3111, %v3393
    %v3395 = vpop.f32.mrb[0].mxu0
    %v3396 = vadd.f32 %v3113, %v3395
    %3397 = vmatprep.mubr.bf16.mxu0 0
    %3398 = vmatmul.mubr.bf16.gmra.mrb[0].mxu0 %v2687
    %v3399 = vpop.f32.mrb[0].mxu0
    %v3400 = vadd.f32 %v3117, %v3399
    %v3401 = vpop.f32.mrb[0].mxu0
    %v3402 = vadd.f32 %v3119, %v3401
    %v3403 = vpop.f32.mrb[0].mxu0
    %v3404 = vadd.f32 %v3121, %v3403
    %v3405 = vpop.f32.mrb[0].mxu0
    %v3406 = vadd.f32 %v3123, %v3405
    %3407 = vmatprep.mubr.bf16.mxu0 0
    %3408 = vmatmul.mubr.bf16.gmra.mrb[0].mxu0 %v2690
    %v3409 = vpop.f32.mrb[0].mxu0
    %v3410 = vadd.f32 %v3127, %v3409
    %v3411 = vpop.f32.mrb[0].mxu0
    %v3412 = vadd.f32 %v3129, %v3411
    %v3413 = vpop.f32.mrb[0].mxu0
    %v3414 = vadd.f32 %v3131, %v3413
    %v3415 = vpop.f32.mrb[0].mxu0
    %v3416 = vadd.f32 %v3133, %v3415
    %3417 = vmatprep.mubr.bf16.mxu0 0
    %3418 = vmatmul.mubr.bf16.gmra.mrb[0].mxu0 %v2693
    %v3419 = vpop.f32.mrb[0].mxu0
    %v3420 = vadd.f32 %v3137, %v3419
    %v3421 = vpop.f32.mrb[0].mxu0
    %v3422 = vadd.f32 %v3139, %v3421
    %v3423 = vpop.f32.mrb[0].mxu0
    %v3424 = vadd.f32 %v3141, %v3423
    %v3425 = vpop.f32.mrb[0].mxu0
    %v3426 = vadd.f32 %v3143, %v3425
    %3427 = vmatprep.mubr.bf16.mxu0 0
    %3428 = vmatmul.mubr.bf16.gmra.mrb[0].mxu0 %v2696
    %v3429 = vpop.f32.mrb[0].mxu0
    %v3430 = vadd.f32 %v3147, %v3429
    %v3431 = vpop.f32.mrb[0].mxu0
    %v3432 = vadd.f32 %v3149, %v3431
    %v3433 = vpop.f32.mrb[0].mxu0
    %v3434 = vadd.f32 %v3151, %v3433
    %v3435 = vpop.f32.mrb[0].mxu0
    %v3436 = vadd.f32 %v3153, %v3435
    %3437 = vmatprep.mubr.bf16.mxu0 0
    %3438 = vmatmul.mubr.bf16.gmra.mrb[0].mxu0 %v2699
    %v3439 = vpop.f32.mrb[0].mxu0
    %v3440 = vadd.f32 %v3157, %v3439
    %v3441 = vpop.f32.mrb[0].mxu0
    %v3442 = vadd.f32 %v3159, %v3441
    %v3443 = vpop.f32.mrb[0].mxu0
    %v3444 = vadd.f32 %v3161, %v3443
    %v3445 = vpop.f32.mrb[0].mxu0
    %v3446 = vadd.f32 %v3163, %v3445
    %3447 = vmatprep.mubr.bf16.mxu0 0
    %3448 = vmatmul.mubr.bf16.gmra.mrb[0].mxu0 %v2702
    %v3449 = vpop.f32.mrb[0].mxu0
    %v3450 = vadd.f32 %v3167, %v3449
    %v3451 = vpop.f32.mrb[0].mxu0
    %v3452 = vadd.f32 %v3169, %v3451
    %v3453 = vpop.f32.mrb[0].mxu0
    %v3454 = vadd.f32 %v3171, %v3453
    %v3455 = vpop.f32.mrb[0].mxu0
    %v3456 = vadd.f32 %v3173, %v3455
    %3457 = vmatprep.mubr.bf16.mxu0 0
    %3458 = vmatmul.mubr.bf16.gmra.mrb[0].mxu0 %v2705
    %v3459 = vpop.f32.mrb[0].mxu0
    %v3460 = vadd.f32 %v3177, %v3459
    %v3461 = vpop.f32.mrb[0].mxu0
    %v3462 = vadd.f32 %v3179, %v3461
    %v3463 = vpop.f32.mrb[0].mxu0
    %v3464 = vadd.f32 %v3181, %v3463
    %v3465 = vpop.f32.mrb[0].mxu0
    %v3466 = vadd.f32 %v3183, %v3465
    %3467 = vmatprep.mubr.bf16.mxu0 0
    %3468 = vmatmul.mubr.bf16.gmra.mrb[0].mxu0 %v2708
    %v3469 = vpop.f32.mrb[0].mxu0
    %v3470 = vadd.f32 %v3187, %v3469
    %v3471 = vpop.f32.mrb[0].mxu0
    %v3472 = vadd.f32 %v3189, %v3471
    %v3473 = vpop.f32.mrb[0].mxu0
    %v3474 = vadd.f32 %v3191, %v3473
    %v3475 = vpop.f32.mrb[0].mxu0
    %v3476 = vadd.f32 %v3193, %v3475
    %3477 = vmatprep.mubr.bf16.mxu0 0
    %3478 = vmatmul.mubr.bf16.gmra.mrb[0].mxu0 %v2711
    %v3479 = vpop.f32.mrb[0].mxu0
    %v3480 = vadd.f32 %v3197, %v3479
    %v3481 = vpop.f32.mrb[0].mxu0
    %v3482 = vadd.f32 %v3199, %v3481
    %v3483 = vpop.f32.mrb[0].mxu0
    %v3484 = vadd.f32 %v3201, %v3483
    %v3485 = vpop.f32.mrb[0].mxu0
    %v3486 = vadd.f32 %v3203, %v3485
    %3487 = vmatprep.mubr.bf16.mxu0 0
    %3488 = vmatmul.mubr.bf16.gmra.mrb[0].mxu0 %v2714
    %v3489 = vpop.f32.mrb[0].mxu0
    %v3490 = vadd.f32 %v3207, %v3489
    %v3491 = vpop.f32.mrb[0].mxu0
    %v3492 = vadd.f32 %v3209, %v3491
    %v3493 = vpop.f32.mrb[0].mxu0
    %v3494 = vadd.f32 %v3211, %v3493
    %v3495 = vpop.f32.mrb[0].mxu0
    %v3496 = vadd.f32 %v3213, %v3495
    %3497 = vmatprep.mubr.bf16.mxu0 0
    %3498 = vmatmul.mubr.bf16.gmra.mrb[0].mxu0 %v2717
    %v3499 = vpop.f32.mrb[0].mxu0
    %v3500 = vadd.f32 %v3217, %v3499
    %v3501 = vpop.f32.mrb[0].mxu0
    %v3502 = vadd.f32 %v3219, %v3501
    %v3503 = vpop.f32.mrb[0].mxu0
    %v3504 = vadd.f32 %v3221, %v3503
    %v3505 = vpop.f32.mrb[0].mxu0
    %v3506 = vadd.f32 %v3223, %v3505
    %3507 = vmatprep.mubr.bf16.mxu0 0
    %3508 = vmatmul.mubr.bf16.gmra.mrb[0].mxu0 %v2720
    %v3509 = vpop.f32.mrb[0].mxu0
    %v3510 = vadd.f32 %v3227, %v3509
    %v3511 = vpop.f32.mrb[0].mxu0
    %v3512 = vadd.f32 %v3229, %v3511
    %v3513 = vpop.f32.mrb[0].mxu0
    %v3514 = vadd.f32 %v3231, %v3513
    %v3515 = vpop.f32.mrb[0].mxu0
    %v3516 = vadd.f32 %v3233, %v3515
    %3517 = vmatprep.mubr.bf16.mxu0 0
    %3518 = vmatmul.mubr.bf16.gmra.mrb[0].mxu0 %v2723
    %v3519 = vpop.f32.mrb[0].mxu0
    %v3520 = vadd.f32 %v3237, %v3519
    %v3521 = vpop.f32.mrb[0].mxu0
    %v3522 = vadd.f32 %v3239, %v3521
    %v3523 = vpop.f32.mrb[0].mxu0
    %v3524 = vadd.f32 %v3241, %v3523
    %v3525 = vpop.f32.mrb[0].mxu0
    %v3526 = vadd.f32 %v3243, %v3525
    %3527 = vmatprep.mubr.bf16.mxu0 0
    %3528 = vmatmul.mubr.bf16.gmra.mrb[0].mxu0 %v2726
    %v3529 = vpop.f32.mrb[0].mxu0
    %v3530 = vadd.f32 %v3247, %v3529
    %v3531 = vpop.f32.mrb[0].mxu0
    %v3532 = vadd.f32 %v3249, %v3531
    %v3533 = vpop.f32.mrb[0].mxu0
    %v3534 = vadd.f32 %v3251, %v3533
    %v3535 = vpop.f32.mrb[0].mxu0
    %v3536 = vadd.f32 %v3253, %v3535
    %3537 = vmatprep.mubr.bf16.mxu0 0
    %3538 = vmatmul.mubr.bf16.gmra.mrb[0].mxu0 %v2729
    %v3539 = vpop.f32.mrb[0].mxu0
    %v3540 = vadd.f32 %v3257, %v3539
    %v3541 = vpop.f32.mrb[0].mxu0
    %v3542 = vadd.f32 %v3259, %v3541
    %v3543 = vpop.f32.mrb[0].mxu0
    %v3544 = vadd.f32 %v3261, %v3543
    %v3545 = vpop.f32.mrb[0].mxu0
    %v3546 = vadd.f32 %v3263, %v3545
    %3547 = vmatprep.mubr.bf16.mxu0 0
    %3548 = vmatmul.mubr.bf16.gmra.mrb[0].mxu0 %v2732
    %v3549 = vpop.f32.mrb[0].mxu0
    %v3550 = vadd.f32 %v3267, %v3549
    %v3551 = vpop.f32.mrb[0].mxu0
    %v3552 = vadd.f32 %v3269, %v3551
    %v3553 = vpop.f32.mrb[0].mxu0
    %v3554 = vadd.f32 %v3271, %v3553
    %v3555 = vpop.f32.mrb[0].mxu0
    %v3556 = vadd.f32 %v3273, %v3555
    %3557 = vmatprep.mubr.bf16.mxu0 0
    %3558 = vmatmul.mubr.bf16.gmra.mrb[0].mxu0 %v2735
    %v3559 = vpop.f32.mrb[0].mxu0
    %v3560 = vadd.f32 %v3277, %v3559
    %v3561 = vpop.f32.mrb[0].mxu0
    %v3562 = vadd.f32 %v3279, %v3561
    %v3563 = vpop.f32.mrb[0].mxu0
    %v3564 = vadd.f32 %v3281, %v3563
    %v3565 = vpop.f32.mrb[0].mxu0
    %v3566 = vadd.f32 %v3283, %v3565
    %3567 = vmatprep.mubr.bf16.mxu0 0
    %3568 = vmatmul.mubr.bf16.gmra.mrb[0].mxu0 %v2738
    %v3569 = vpop.f32.mrb[0].mxu0
    %v3570 = vadd.f32 %v3287, %v3569
    %v3571 = vpop.f32.mrb[0].mxu0
    %v3572 = vadd.f32 %v3289, %v3571
    %v3573 = vpop.f32.mrb[0].mxu0
    %v3574 = vadd.f32 %v3291, %v3573
    %v3575 = vpop.f32.mrb[0].mxu0
    %v3576 = vadd.f32 %v3293, %v3575
    %3577 = vmatprep.mubr.bf16.mxu0 0
    %3578 = vmatmul.mubr.bf16.gmra.mrb[0].mxu0 %v2741
    %v3579 = vpop.f32.mrb[0].mxu0
    %v3580 = vadd.f32 %v3297, %v3579
    %v3581 = vpop.f32.mrb[0].mxu0
    %v3582 = vadd.f32 %v3299, %v3581
    %v3583 = vpop.f32.mrb[0].mxu0
    %v3584 = vadd.f32 %v3301, %v3583
    %v3585 = vpop.f32.mrb[0].mxu0
    %v3586 = vadd.f32 %v3303, %v3585
    %3587 = vmatprep.mubr.bf16.mxu0 0
    %3588 = vmatmul.mubr.bf16.gmra.mrb[0].mxu0 %v2744
    %v3589 = vpop.f32.mrb[0].mxu0
    %v3590 = vadd.f32 %v3307, %v3589
    %v3591 = vpop.f32.mrb[0].mxu0
    %v3592 = vadd.f32 %v3309, %v3591
    %v3593 = vpop.f32.mrb[0].mxu0
    %v3594 = vadd.f32 %v3311, %v3593
    %v3595 = vpop.f32.mrb[0].mxu0
    %v3596 = vadd.f32 %v3313, %v3595
    %3597 = vmatprep.mubr.bf16.mxu0 0
    %3598 = vmatmul.mubr.bf16.gmra.mrb[0].mxu0 %v2747
    %v3599 = vpop.f32.mrb[0].mxu0
    %v3600 = vadd.f32 %v3317, %v3599
    %v3601 = vpop.f32.mrb[0].mxu0
    %v3602 = vadd.f32 %v3319, %v3601
    %v3603 = vpop.f32.mrb[0].mxu0
    %v3604 = vadd.f32 %v3321, %v3603
    %v3605 = vpop.f32.mrb[0].mxu0
    %v3606 = vadd.f32 %v3323, %v3605
    %3607 = vdwg.mxu0
    %3608 = vmatprep.subr.bf16.mxu0 0
    %3609 = vmatpush1.bf16.msra.mxu0 %v2456
    %3610 = vmatprep.subr.bf16.mxu0 0
    %3611 = vmatpush1.bf16.msra.mxu0 %v2459
    %3612 = vmatprep.subr.bf16.mxu0 0
    %3613 = vmatpush1.bf16.msra.mxu0 %v2462
    %3614 = vmatprep.subr.bf16.mxu0 0
    %3615 = vmatpush1.bf16.msra.mxu0 %v2465
    %3616 = vmatprep.subr.bf16.mxu0 0
    %3617 = vmatpush1.bf16.msra.mxu0 %v2468
    %3618 = vmatprep.subr.bf16.mxu0 0
    %3619 = vmatpush1.bf16.msra.mxu0 %v2471
    %3620 = vmatprep.subr.bf16.mxu0 0
    %3621 = vmatpush1.bf16.msra.mxu0 %v2474
    %3622 = vmatprep.subr.bf16.mxu0 0
    %3623 = vmatpush1.bf16.msra.mxu0 %v2477
    %3624 = vmatprep.subr.bf16.mxu0 0
    %3625 = vmatpush1.bf16.msra.mxu0 %v2480
    %3626 = vmatprep.subr.bf16.mxu0 0
    %3627 = vmatpush1.bf16.msra.mxu0 %v2483
    %3628 = vmatprep.subr.bf16.mxu0 0
    %3629 = vmatpush1.bf16.msra.mxu0 %v2486
    %3630 = vmatprep.subr.bf16.mxu0 0
    %3631 = vmatpush1.bf16.msra.mxu0 %v2489
    %3632 = vmatprep.subr.bf16.mxu0 0
    %3633 = vmatpush1.bf16.msra.mxu0 %v2492
    %3634 = vmatprep.subr.bf16.mxu0 0
    %3635 = vmatpush1.bf16.msra.mxu0 %v2495
    %3636 = vmatprep.subr.bf16.mxu0 0
    %3637 = vmatpush1.bf16.msra.mxu0 %v2498
    %3638 = vmatprep.subr.bf16.mxu0 0
    %3639 = vmatpush1.bf16.msra.mxu0 %v2501
    %3640 = vmatprep.mubr.bf16.mxu0 %v1812
    %3641 = vmatmul.mubr.bf16.gmra.mrb[0].mxu0 %v1811
    %v3642 = vpop.f32.mrb[0].mxu0
    %v3643 = vadd.f32 0.0, %v3642
    %v3644 = vpop.f32.mrb[0].mxu0
    %v3645 = vpop.f32.mrb[0].mxu0
    %v3646 = vadd.f32 0.0, %v3645
    %v3647 = vpop.f32.mrb[0].mxu0
    %3648 = vmatprep.mubr.bf16.mxu0 %v1817
    %3649 = vmatmul.mubr.bf16.gmra.mrb[0].mxu0 %v1816
    %v3650 = vpop.f32.mrb[0].mxu0
    %v3651 = vadd.f32 0.0, %v3650
    %v3652 = vpop.f32.mrb[0].mxu0
    %v3653 = vpop.f32.mrb[0].mxu0
    %v3654 = vadd.f32 0.0, %v3653
    %v3655 = vpop.f32.mrb[0].mxu0
    %3656 = vmatprep.mubr.bf16.mxu0 %v1822
    %3657 = vmatmul.mubr.bf16.gmra.mrb[0].mxu0 %v1821
    %v3658 = vpop.f32.mrb[0].mxu0
    %v3659 = vadd.f32 0.0, %v3658
    %v3660 = vpop.f32.mrb[0].mxu0
    %v3661 = vpop.f32.mrb[0].mxu0
    %v3662 = vadd.f32 0.0, %v3661
    %v3663 = vpop.f32.mrb[0].mxu0
    %3664 = vmatprep.mubr.bf16.mxu0 %v1827
    %3665 = vmatmul.mubr.bf16.gmra.mrb[0].mxu0 %v1826
    %v3666 = vpop.f32.mrb[0].mxu0
    %v3667 = vadd.f32 0.0, %v3666
    %v3668 = vpop.f32.mrb[0].mxu0
    %v3669 = vpop.f32.mrb[0].mxu0
    %v3670 = vadd.f32 0.0, %v3669
    %v3671 = vpop.f32.mrb[0].mxu0
    %3672 = vmatprep.mubr.bf16.mxu0 %v1832
    %3673 = vmatmul.mubr.bf16.gmra.mrb[0].mxu0 %v1831
    %v3674 = vpop.f32.mrb[0].mxu0
    %v3675 = vadd.f32 0.0, %v3674
    %v3676 = vpop.f32.mrb[0].mxu0
    %v3677 = vpop.f32.mrb[0].mxu0
    %v3678 = vadd.f32 0.0, %v3677
    %v3679 = vpop.f32.mrb[0].mxu0
    %3680 = vmatprep.mubr.bf16.mxu0 %v1837
    %3681 = vmatmul.mubr.bf16.gmra.mrb[0].mxu0 %v1836
    %v3682 = vpop.f32.mrb[0].mxu0
    %v3683 = vadd.f32 0.0, %v3682
    %v3684 = vpop.f32.mrb[0].mxu0
    %v3685 = vpop.f32.mrb[0].mxu0
    %v3686 = vadd.f32 0.0, %v3685
    %v3687 = vpop.f32.mrb[0].mxu0
    %3688 = vmatprep.mubr.bf16.mxu0 %v1842
    %3689 = vmatmul.mubr.bf16.gmra.mrb[0].mxu0 %v1841
    %v3690 = vpop.f32.mrb[0].mxu0
    %v3691 = vadd.f32 0.0, %v3690
    %v3692 = vpop.f32.mrb[0].mxu0
    %v3693 = vpop.f32.mrb[0].mxu0
    %v3694 = vadd.f32 0.0, %v3693
    %v3695 = vpop.f32.mrb[0].mxu0
    %3696 = vmatprep.mubr.bf16.mxu0 %v1847
    %3697 = vmatmul.mubr.bf16.gmra.mrb[0].mxu0 %v1846
    %v3698 = vpop.f32.mrb[0].mxu0
    %v3699 = vadd.f32 0.0, %v3698
    %v3700 = vpop.f32.mrb[0].mxu0
    %v3701 = vpop.f32.mrb[0].mxu0
    %v3702 = vadd.f32 0.0, %v3701
    %v3703 = vpop.f32.mrb[0].mxu0
    %3704 = vmatprep.mubr.bf16.mxu0 %v1852
    %3705 = vmatmul.mubr.bf16.gmra.mrb[0].mxu0 %v1851
    %v3706 = vpop.f32.mrb[0].mxu0
    %v3707 = vadd.f32 0.0, %v3706
    %v3708 = vpop.f32.mrb[0].mxu0
    %v3709 = vpop.f32.mrb[0].mxu0
    %v3710 = vadd.f32 0.0, %v3709
    %v3711 = vpop.f32.mrb[0].mxu0
    %3712 = vmatprep.mubr.bf16.mxu0 %v1857
    %3713 = vmatmul.mubr.bf16.gmra.mrb[0].mxu0 %v1856
    %v3714 = vpop.f32.mrb[0].mxu0
    %v3715 = vadd.f32 0.0, %v3714
    %v3716 = vpop.f32.mrb[0].mxu0
    %v3717 = vpop.f32.mrb[0].mxu0
    %v3718 = vadd.f32 0.0, %v3717
    %v3719 = vpop.f32.mrb[0].mxu0
    %3720 = vmatprep.mubr.bf16.mxu0 %v1862
    %3721 = vmatmul.mubr.bf16.gmra.mrb[0].mxu0 %v1861
    %v3722 = vpop.f32.mrb[0].mxu0
    %v3723 = vadd.f32 0.0, %v3722
    %v3724 = vpop.f32.mrb[0].mxu0
    %v3725 = vpop.f32.mrb[0].mxu0
    %v3726 = vadd.f32 0.0, %v3725
    %v3727 = vpop.f32.mrb[0].mxu0
    %3728 = vmatprep.mubr.bf16.mxu0 %v1867
    %3729 = vmatmul.mubr.bf16.gmra.mrb[0].mxu0 %v1866
    %v3730 = vpop.f32.mrb[0].mxu0
    %v3731 = vadd.f32 0.0, %v3730
    %v3732 = vpop.f32.mrb[0].mxu0
    %v3733 = vpop.f32.mrb[0].mxu0
    %v3734 = vadd.f32 0.0, %v3733
    %v3735 = vpop.f32.mrb[0].mxu0
    %3736 = vmatprep.mubr.bf16.mxu0 %v1872
    %3737 = vmatmul.mubr.bf16.gmra.mrb[0].mxu0 %v1871
    %v3738 = vpop.f32.mrb[0].mxu0
    %v3739 = vadd.f32 0.0, %v3738
    %v3740 = vpop.f32.mrb[0].mxu0
    %v3741 = vpop.f32.mrb[0].mxu0
    %v3742 = vadd.f32 0.0, %v3741
    %v3743 = vpop.f32.mrb[0].mxu0
    %3744 = vmatprep.mubr.bf16.mxu0 %v1877
    %3745 = vmatmul.mubr.bf16.gmra.mrb[0].mxu0 %v1876
    %v3746 = vpop.f32.mrb[0].mxu0
    %v3747 = vadd.f32 0.0, %v3746
    %v3748 = vpop.f32.mrb[0].mxu0
    %v3749 = vpop.f32.mrb[0].mxu0
    %v3750 = vadd.f32 0.0, %v3749
    %v3751 = vpop.f32.mrb[0].mxu0
    %3752 = vmatprep.mubr.bf16.mxu0 %v1882
    %3753 = vmatmul.mubr.bf16.gmra.mrb[0].mxu0 %v1881
    %v3754 = vpop.f32.mrb[0].mxu0
    %v3755 = vadd.f32 0.0, %v3754
    %v3756 = vpop.f32.mrb[0].mxu0
    %v3757 = vpop.f32.mrb[0].mxu0
    %v3758 = vadd.f32 0.0, %v3757
    %v3759 = vpop.f32.mrb[0].mxu0
    %3760 = vmatprep.mubr.bf16.mxu0 %v1887
    %3761 = vmatmul.mubr.bf16.gmra.mrb[0].mxu0 %v1886
    %v3762 = vpop.f32.mrb[0].mxu0
    %v3763 = vadd.f32 0.0, %v3762
    %v3764 = vpop.f32.mrb[0].mxu0
    %v3765 = vpop.f32.mrb[0].mxu0
    %v3766 = vadd.f32 0.0, %v3765
    %v3767 = vpop.f32.mrb[0].mxu0
    %3768 = vmatprep.mubr.bf16.mxu0 %v1892
    %3769 = vmatmul.mubr.bf16.gmra.mrb[0].mxu0 %v1891
    %v3770 = vpop.f32.mrb[0].mxu0
    %v3771 = vadd.f32 0.0, %v3770
    %v3772 = vpop.f32.mrb[0].mxu0
    %v3773 = vpop.f32.mrb[0].mxu0
    %v3774 = vadd.f32 0.0, %v3773
    %v3775 = vpop.f32.mrb[0].mxu0
    %3776 = vmatprep.mubr.bf16.mxu0 %v1897
    %3777 = vmatmul.mubr.bf16.gmra.mrb[0].mxu0 %v1896
    %v3778 = vpop.f32.mrb[0].mxu0
    %v3779 = vadd.f32 0.0, %v3778
    %v3780 = vpop.f32.mrb[0].mxu0
    %v3781 = vpop.f32.mrb[0].mxu0
    %v3782 = vadd.f32 0.0, %v3781
    %v3783 = vpop.f32.mrb[0].mxu0
    %3784 = vmatprep.mubr.bf16.mxu0 %v1902
    %3785 = vmatmul.mubr.bf16.gmra.mrb[0].mxu0 %v1901
    %v3786 = vpop.f32.mrb[0].mxu0
    %v3787 = vadd.f32 0.0, %v3786
    %v3788 = vpop.f32.mrb[0].mxu0
    %v3789 = vpop.f32.mrb[0].mxu0
    %v3790 = vadd.f32 0.0, %v3789
    %v3791 = vpop.f32.mrb[0].mxu0
    %3792 = vmatprep.mubr.bf16.mxu0 %v1907
    %3793 = vmatmul.mubr.bf16.gmra.mrb[0].mxu0 %v1906
    %v3794 = vpop.f32.mrb[0].mxu0
    %v3795 = vadd.f32 0.0, %v3794
    %v3796 = vpop.f32.mrb[0].mxu0
    %v3797 = vpop.f32.mrb[0].mxu0
    %v3798 = vadd.f32 0.0, %v3797
    %v3799 = vpop.f32.mrb[0].mxu0
    %3800 = vmatprep.mubr.bf16.mxu0 %v1912
    %3801 = vmatmul.mubr.bf16.gmra.mrb[0].mxu0 %v1911
    %v3802 = vpop.f32.mrb[0].mxu0
    %v3803 = vadd.f32 0.0, %v3802
    %v3804 = vpop.f32.mrb[0].mxu0
    %v3805 = vpop.f32.mrb[0].mxu0
    %v3806 = vadd.f32 0.0, %v3805
    %v3807 = vpop.f32.mrb[0].mxu0
    %3808 = vmatprep.mubr.bf16.mxu0 %v1917
    %3809 = vmatmul.mubr.bf16.gmra.mrb[0].mxu0 %v1916
    %v3810 = vpop.f32.mrb[0].mxu0
    %v3811 = vadd.f32 0.0, %v3810
    %v3812 = vpop.f32.mrb[0].mxu0
    %v3813 = vpop.f32.mrb[0].mxu0
    %v3814 = vadd.f32 0.0, %v3813
    %v3815 = vpop.f32.mrb[0].mxu0
    %3816 = vmatprep.mubr.bf16.mxu0 %v1922
    %3817 = vmatmul.mubr.bf16.gmra.mrb[0].mxu0 %v1921
    %v3818 = vpop.f32.mrb[0].mxu0
    %v3819 = vadd.f32 0.0, %v3818
    %v3820 = vpop.f32.mrb[0].mxu0
    %v3821 = vpop.f32.mrb[0].mxu0
    %v3822 = vadd.f32 0.0, %v3821
    %v3823 = vpop.f32.mrb[0].mxu0
    %3824 = vmatprep.mubr.bf16.mxu0 %v1927
    %3825 = vmatmul.mubr.bf16.gmra.mrb[0].mxu0 %v1926
    %v3826 = vpop.f32.mrb[0].mxu0
    %v3827 = vadd.f32 0.0, %v3826
    %v3828 = vpop.f32.mrb[0].mxu0
    %v3829 = vpop.f32.mrb[0].mxu0
    %v3830 = vadd.f32 0.0, %v3829
    %v3831 = vpop.f32.mrb[0].mxu0
    %3832 = vmatprep.mubr.bf16.mxu0 %v1932
    %3833 = vmatmul.mubr.bf16.gmra.mrb[0].mxu0 %v1931
    %v3834 = vpop.f32.mrb[0].mxu0
    %v3835 = vadd.f32 0.0, %v3834
    %v3836 = vpop.f32.mrb[0].mxu0
    %v3837 = vpop.f32.mrb[0].mxu0
    %v3838 = vadd.f32 0.0, %v3837
    %v3839 = vpop.f32.mrb[0].mxu0
    %3840 = vdwg.mxu0
    %3841 = vmatprep.subr.bf16.mxu0 0
    %3842 = vmatpush1.bf16.msra.mxu0 %v2504
    %3843 = vmatprep.subr.bf16.mxu0 0
    %3844 = vmatpush1.bf16.msra.mxu0 %v2507
    %3845 = vmatprep.subr.bf16.mxu0 0
    %3846 = vmatpush1.bf16.msra.mxu0 %v2510
    %3847 = vmatprep.subr.bf16.mxu0 0
    %3848 = vmatpush1.bf16.msra.mxu0 %v2513
    %3849 = vmatprep.subr.bf16.mxu0 0
    %3850 = vmatpush1.bf16.msra.mxu0 %v2516
    %3851 = vmatprep.subr.bf16.mxu0 0
    %3852 = vmatpush1.bf16.msra.mxu0 %v2519
    %3853 = vmatprep.subr.bf16.mxu0 0
    %3854 = vmatpush1.bf16.msra.mxu0 %v2522
    %3855 = vmatprep.subr.bf16.mxu0 0
    %3856 = vmatpush1.bf16.msra.mxu0 %v2525
    %3857 = vmatprep.subr.bf16.mxu0 0
    %3858 = vmatpush1.bf16.msra.mxu0 %v2528
    %3859 = vmatprep.subr.bf16.mxu0 0
    %3860 = vmatpush1.bf16.msra.mxu0 %v2531
    %3861 = vmatprep.subr.bf16.mxu0 0
    %3862 = vmatpush1.bf16.msra.mxu0 %v2534
    %3863 = vmatprep.subr.bf16.mxu0 0
    %3864 = vmatpush1.bf16.msra.mxu0 %v2537
    %3865 = vmatprep.subr.bf16.mxu0 0
    %3866 = vmatpush1.bf16.msra.mxu0 %v2540
    %3867 = vmatprep.subr.bf16.mxu0 0
    %3868 = vmatpush1.bf16.msra.mxu0 %v2543
    %3869 = vmatprep.subr.bf16.mxu0 0
    %3870 = vmatpush1.bf16.msra.mxu0 %v2546
    %3871 = vmatprep.subr.bf16.mxu0 0
    %3872 = vmatpush1.bf16.msra.mxu0 %v2549
    %3873 = vmatprep.mubr.bf16.mxu0 %v1814
    %3874 = vmatmul.mubr.bf16.gmra.mrb[0].mxu0 %v1813
    %v3875 = vpop.f32.mrb[0].mxu0
    %v3876 = vadd.f32 %v3643, %v3875
    %v3877 = vpop.f32.mrb[0].mxu0
    %v3878 = vpop.f32.mrb[0].mxu0
    %v3879 = vadd.f32 %v3646, %v3878
    %v3880 = vpop.f32.mrb[0].mxu0
    %3881 = vmatprep.mubr.bf16.mxu0 %v1819
    %3882 = vmatmul.mubr.bf16.gmra.mrb[0].mxu0 %v1818
    %v3883 = vpop.f32.mrb[0].mxu0
    %v3884 = vadd.f32 %v3651, %v3883
    %v3885 = vpop.f32.mrb[0].mxu0
    %v3886 = vpop.f32.mrb[0].mxu0
    %v3887 = vadd.f32 %v3654, %v3886
    %v3888 = vpop.f32.mrb[0].mxu0
    %3889 = vmatprep.mubr.bf16.mxu0 %v1824
    %3890 = vmatmul.mubr.bf16.gmra.mrb[0].mxu0 %v1823
    %v3891 = vpop.f32.mrb[0].mxu0
    %v3892 = vadd.f32 %v3659, %v3891
    %v3893 = vpop.f32.mrb[0].mxu0
    %v3894 = vpop.f32.mrb[0].mxu0
    %v3895 = vadd.f32 %v3662, %v3894
    %v3896 = vpop.f32.mrb[0].mxu0
    %3897 = vmatprep.mubr.bf16.mxu0 %v1829
    %3898 = vmatmul.mubr.bf16.gmra.mrb[0].mxu0 %v1828
    %v3899 = vpop.f32.mrb[0].mxu0
    %v3900 = vadd.f32 %v3667, %v3899
    %v3901 = vpop.f32.mrb[0].mxu0
    %v3902 = vpop.f32.mrb[0].mxu0
    %v3903 = vadd.f32 %v3670, %v3902
    %v3904 = vpop.f32.mrb[0].mxu0
    %3905 = vmatprep.mubr.bf16.mxu0 %v1834
    %3906 = vmatmul.mubr.bf16.gmra.mrb[0].mxu0 %v1833
    %v3907 = vpop.f32.mrb[0].mxu0
    %v3908 = vadd.f32 %v3675, %v3907
    %v3909 = vpop.f32.mrb[0].mxu0
    %v3910 = vpop.f32.mrb[0].mxu0
    %v3911 = vadd.f32 %v3678, %v3910
    %v3912 = vpop.f32.mrb[0].mxu0
    %3913 = vmatprep.mubr.bf16.mxu0 %v1839
    %3914 = vmatmul.mubr.bf16.gmra.mrb[0].mxu0 %v1838
    %v3915 = vpop.f32.mrb[0].mxu0
    %v3916 = vadd.f32 %v3683, %v3915
    %v3917 = vpop.f32.mrb[0].mxu0
    %v3918 = vpop.f32.mrb[0].mxu0
    %v3919 = vadd.f32 %v3686, %v3918
    %v3920 = vpop.f32.mrb[0].mxu0
    %3921 = vmatprep.mubr.bf16.mxu0 %v1844
    %3922 = vmatmul.mubr.bf16.gmra.mrb[0].mxu0 %v1843
    %v3923 = vpop.f32.mrb[0].mxu0
    %v3924 = vadd.f32 %v3691, %v3923
    %v3925 = vpop.f32.mrb[0].mxu0
    %v3926 = vpop.f32.mrb[0].mxu0
    %v3927 = vadd.f32 %v3694, %v3926
    %v3928 = vpop.f32.mrb[0].mxu0
    %3929 = vmatprep.mubr.bf16.mxu0 %v1849
    %3930 = vmatmul.mubr.bf16.gmra.mrb[0].mxu0 %v1848
    %v3931 = vpop.f32.mrb[0].mxu0
    %v3932 = vadd.f32 %v3699, %v3931
    %v3933 = vpop.f32.mrb[0].mxu0
    %v3934 = vpop.f32.mrb[0].mxu0
    %v3935 = vadd.f32 %v3702, %v3934
    %v3936 = vpop.f32.mrb[0].mxu0
    %3937 = vmatprep.mubr.bf16.mxu0 %v1854
    %3938 = vmatmul.mubr.bf16.gmra.mrb[0].mxu0 %v1853
    %v3939 = vpop.f32.mrb[0].mxu0
    %v3940 = vadd.f32 %v3707, %v3939
    %v3941 = vpop.f32.mrb[0].mxu0
    %v3942 = vpop.f32.mrb[0].mxu0
    %v3943 = vadd.f32 %v3710, %v3942
    %v3944 = vpop.f32.mrb[0].mxu0
    %3945 = vmatprep.mubr.bf16.mxu0 %v1859
    %3946 = vmatmul.mubr.bf16.gmra.mrb[0].mxu0 %v1858
    %v3947 = vpop.f32.mrb[0].mxu0
    %v3948 = vadd.f32 %v3715, %v3947
    %v3949 = vpop.f32.mrb[0].mxu0
    %v3950 = vpop.f32.mrb[0].mxu0
    %v3951 = vadd.f32 %v3718, %v3950
    %v3952 = vpop.f32.mrb[0].mxu0
    %3953 = vmatprep.mubr.bf16.mxu0 %v1864
    %3954 = vmatmul.mubr.bf16.gmra.mrb[0].mxu0 %v1863
    %v3955 = vpop.f32.mrb[0].mxu0
    %v3956 = vadd.f32 %v3723, %v3955
    %v3957 = vpop.f32.mrb[0].mxu0
    %v3958 = vpop.f32.mrb[0].mxu0
    %v3959 = vadd.f32 %v3726, %v3958
    %v3960 = vpop.f32.mrb[0].mxu0
    %3961 = vmatprep.mubr.bf16.mxu0 %v1869
    %3962 = vmatmul.mubr.bf16.gmra.mrb[0].mxu0 %v1868
    %v3963 = vpop.f32.mrb[0].mxu0
    %v3964 = vadd.f32 %v3731, %v3963
    %v3965 = vpop.f32.mrb[0].mxu0
    %v3966 = vpop.f32.mrb[0].mxu0
    %v3967 = vadd.f32 %v3734, %v3966
    %v3968 = vpop.f32.mrb[0].mxu0
    %3969 = vmatprep.mubr.bf16.mxu0 %v1874
    %3970 = vmatmul.mubr.bf16.gmra.mrb[0].mxu0 %v1873
    %v3971 = vpop.f32.mrb[0].mxu0
    %v3972 = vadd.f32 %v3739, %v3971
    %v3973 = vpop.f32.mrb[0].mxu0
    %v3974 = vpop.f32.mrb[0].mxu0
    %v3975 = vadd.f32 %v3742, %v3974
    %v3976 = vpop.f32.mrb[0].mxu0
    %3977 = vmatprep.mubr.bf16.mxu0 %v1879
    %3978 = vmatmul.mubr.bf16.gmra.mrb[0].mxu0 %v1878
    %v3979 = vpop.f32.mrb[0].mxu0
    %v3980 = vadd.f32 %v3747, %v3979
    %v3981 = vpop.f32.mrb[0].mxu0
    %v3982 = vpop.f32.mrb[0].mxu0
    %v3983 = vadd.f32 %v3750, %v3982
    %v3984 = vpop.f32.mrb[0].mxu0
    %3985 = vmatprep.mubr.bf16.mxu0 %v1884
    %3986 = vmatmul.mubr.bf16.gmra.mrb[0].mxu0 %v1883
    %v3987 = vpop.f32.mrb[0].mxu0
    %v3988 = vadd.f32 %v3755, %v3987
    %v3989 = vpop.f32.mrb[0].mxu0
    %v3990 = vpop.f32.mrb[0].mxu0
    %v3991 = vadd.f32 %v3758, %v3990
    %v3992 = vpop.f32.mrb[0].mxu0
    %3993 = vmatprep.mubr.bf16.mxu0 %v1889
    %3994 = vmatmul.mubr.bf16.gmra.mrb[0].mxu0 %v1888
    %v3995 = vpop.f32.mrb[0].mxu0
    %v3996 = vadd.f32 %v3763, %v3995
    %v3997 = vpop.f32.mrb[0].mxu0
    %v3998 = vpop.f32.mrb[0].mxu0
    %v3999 = vadd.f32 %v3766, %v3998
    %v4000 = vpop.f32.mrb[0].mxu0
    %4001 = vmatprep.mubr.bf16.mxu0 %v1894
    %4002 = vmatmul.mubr.bf16.gmra.mrb[0].mxu0 %v1893
    %v4003 = vpop.f32.mrb[0].mxu0
    %v4004 = vadd.f32 %v3771, %v4003
    %v4005 = vpop.f32.mrb[0].mxu0
    %v4006 = vpop.f32.mrb[0].mxu0
    %v4007 = vadd.f32 %v3774, %v4006
    %v4008 = vpop.f32.mrb[0].mxu0
    %4009 = vmatprep.mubr.bf16.mxu0 %v1899
    %4010 = vmatmul.mubr.bf16.gmra.mrb[0].mxu0 %v1898
    %v4011 = vpop.f32.mrb[0].mxu0
    %v4012 = vadd.f32 %v3779, %v4011
    %v4013 = vpop.f32.mrb[0].mxu0
    %v4014 = vpop.f32.mrb[0].mxu0
    %v4015 = vadd.f32 %v3782, %v4014
    %v4016 = vpop.f32.mrb[0].mxu0
    %4017 = vmatprep.mubr.bf16.mxu0 %v1904
    %4018 = vmatmul.mubr.bf16.gmra.mrb[0].mxu0 %v1903
    %v4019 = vpop.f32.mrb[0].mxu0
    %v4020 = vadd.f32 %v3787, %v4019
    %v4021 = vpop.f32.mrb[0].mxu0
    %v4022 = vpop.f32.mrb[0].mxu0
    %v4023 = vadd.f32 %v3790, %v4022
    %v4024 = vpop.f32.mrb[0].mxu0
    %4025 = vmatprep.mubr.bf16.mxu0 %v1909
    %4026 = vmatmul.mubr.bf16.gmra.mrb[0].mxu0 %v1908
    %v4027 = vpop.f32.mrb[0].mxu0
    %v4028 = vadd.f32 %v3795, %v4027
    %v4029 = vpop.f32.mrb[0].mxu0
    %v4030 = vpop.f32.mrb[0].mxu0
    %v4031 = vadd.f32 %v3798, %v4030
    %v4032 = vpop.f32.mrb[0].mxu0
    %4033 = vmatprep.mubr.bf16.mxu0 %v1914
    %4034 = vmatmul.mubr.bf16.gmra.mrb[0].mxu0 %v1913
    %v4035 = vpop.f32.mrb[0].mxu0
    %v4036 = vadd.f32 %v3803, %v4035
    %v4037 = vpop.f32.mrb[0].mxu0
    %v4038 = vpop.f32.mrb[0].mxu0
    %v4039 = vadd.f32 %v3806, %v4038
    %v4040 = vpop.f32.mrb[0].mxu0
    %4041 = vmatprep.mubr.bf16.mxu0 %v1919
    %4042 = vmatmul.mubr.bf16.gmra.mrb[0].mxu0 %v1918
    %v4043 = vpop.f32.mrb[0].mxu0
    %v4044 = vadd.f32 %v3811, %v4043
    %v4045 = vpop.f32.mrb[0].mxu0
    %v4046 = vpop.f32.mrb[0].mxu0
    %v4047 = vadd.f32 %v3814, %v4046
    %v4048 = vpop.f32.mrb[0].mxu0
    %4049 = vmatprep.mubr.bf16.mxu0 %v1924
    %4050 = vmatmul.mubr.bf16.gmra.mrb[0].mxu0 %v1923
    %v4051 = vpop.f32.mrb[0].mxu0
    %v4052 = vadd.f32 %v3819, %v4051
    %v4053 = vpop.f32.mrb[0].mxu0
    %v4054 = vpop.f32.mrb[0].mxu0
    %v4055 = vadd.f32 %v3822, %v4054
    %v4056 = vpop.f32.mrb[0].mxu0
    %4057 = vmatprep.mubr.bf16.mxu0 %v1929
    %4058 = vmatmul.mubr.bf16.gmra.mrb[0].mxu0 %v1928
    %v4059 = vpop.f32.mrb[0].mxu0
    %v4060 = vadd.f32 %v3827, %v4059
    %v4061 = vpop.f32.mrb[0].mxu0
    %v4062 = vpop.f32.mrb[0].mxu0
    %v4063 = vadd.f32 %v3830, %v4062
    %v4064 = vpop.f32.mrb[0].mxu0
    %4065 = vmatprep.mubr.bf16.mxu0 %v1934
    %4066 = vmatmul.mubr.bf16.gmra.mrb[0].mxu0 %v1933
    %v4067 = vpop.f32.mrb[0].mxu0
    %v4068 = vadd.f32 %v3835, %v4067
    %v4069 = vpop.f32.mrb[0].mxu0
    %v4070 = vpop.f32.mrb[0].mxu0
    %v4071 = vadd.f32 %v3838, %v4070
    %v4072 = vpop.f32.mrb[0].mxu0
    %4073 = vdwg.mxu0
    %4074 = vmatprep.subr.bf16.mxu0 0
    %4075 = vmatpush1.bf16.msra.mxu0 %v2552
    %4076 = vmatprep.subr.bf16.mxu0 0
    %4077 = vmatpush1.bf16.msra.mxu0 %v2555
    %4078 = vmatprep.subr.bf16.mxu0 0
    %4079 = vmatpush1.bf16.msra.mxu0 %v2558
    %4080 = vmatprep.subr.bf16.mxu0 0
    %4081 = vmatpush1.bf16.msra.mxu0 %v2561
    %4082 = vmatprep.subr.bf16.mxu0 0
    %4083 = vmatpush1.bf16.msra.mxu0 %v2757
    %4084 = vmatprep.subr.bf16.mxu0 0
    %4085 = vmatpush1.bf16.msra.mxu0 0
    %4086 = vmatprep.subr.bf16.mxu0 0
    %4087 = vmatpush1.bf16.msra.mxu0 0
    %4088 = vmatprep.subr.bf16.mxu0 0
    %4089 = vmatpush1.bf16.msra.mxu0 0
    %4090 = vmatprep.subr.bf16.mxu0 0
    %4091 = vmatpush1.bf16.msra.mxu0 0
    %4092 = vmatprep.subr.bf16.mxu0 0
    %4093 = vmatpush1.bf16.msra.mxu0 0
    %4094 = vmatprep.subr.bf16.mxu0 0
    %4095 = vmatpush1.bf16.msra.mxu0 0
    %4096 = vmatprep.subr.bf16.mxu0 0
    %4097 = vmatpush1.bf16.msra.mxu0 0
    %4098 = vmatprep.subr.bf16.mxu0 0
    %4099 = vmatpush1.bf16.msra.mxu0 0
    %4100 = vmatprep.subr.bf16.mxu0 0
    %4101 = vmatpush1.bf16.msra.mxu0 0
    %4102 = vmatprep.subr.bf16.mxu0 0
    %4103 = vmatpush1.bf16.msra.mxu0 0
    %4104 = vmatprep.subr.bf16.mxu0 0
    %4105 = vmatpush1.bf16.msra.mxu0 0
    %4106 = vmatprep.mubr.bf16.mxu0 0
    %4107 = vmatmul.mubr.bf16.gmra.mrb[0].mxu0 %v2675
    %v4108 = vpop.f32.mrb[0].mxu0
    %v4109 = vadd.f32 %v3876, %v4108
    %v4110 = vpop.f32.mrb[0].mxu0
    %v4111 = vpop.f32.mrb[0].mxu0
    %v4112 = vadd.f32 %v3879, %v4111
    %v4113 = vpop.f32.mrb[0].mxu0
    %4114 = vmatprep.mubr.bf16.mxu0 0
    %4115 = vmatmul.mubr.bf16.gmra.mrb[0].mxu0 %v2678
    %v4116 = vpop.f32.mrb[0].mxu0
    %v4117 = vadd.f32 %v3884, %v4116
    %v4118 = vpop.f32.mrb[0].mxu0
    %v4119 = vpop.f32.mrb[0].mxu0
    %v4120 = vadd.f32 %v3887, %v4119
    %v4121 = vpop.f32.mrb[0].mxu0
    %4122 = vmatprep.mubr.bf16.mxu0 0
    %4123 = vmatmul.mubr.bf16.gmra.mrb[0].mxu0 %v2681
    %v4124 = vpop.f32.mrb[0].mxu0
    %v4125 = vadd.f32 %v3892, %v4124
    %v4126 = vpop.f32.mrb[0].mxu0
    %v4127 = vpop.f32.mrb[0].mxu0
    %v4128 = vadd.f32 %v3895, %v4127
    %v4129 = vpop.f32.mrb[0].mxu0
    %4130 = vmatprep.mubr.bf16.mxu0 0
    %4131 = vmatmul.mubr.bf16.gmra.mrb[0].mxu0 %v2684
    %v4132 = vpop.f32.mrb[0].mxu0
    %v4133 = vadd.f32 %v3900, %v4132
    %v4134 = vpop.f32.mrb[0].mxu0
    %v4135 = vpop.f32.mrb[0].mxu0
    %v4136 = vadd.f32 %v3903, %v4135
    %v4137 = vpop.f32.mrb[0].mxu0
    %4138 = vmatprep.mubr.bf16.mxu0 0
    %4139 = vmatmul.mubr.bf16.gmra.mrb[0].mxu0 %v2687
    %v4140 = vpop.f32.mrb[0].mxu0
    %v4141 = vadd.f32 %v3908, %v4140
    %v4142 = vpop.f32.mrb[0].mxu0
    %v4143 = vpop.f32.mrb[0].mxu0
    %v4144 = vadd.f32 %v3911, %v4143
    %v4145 = vpop.f32.mrb[0].mxu0
    %4146 = vmatprep.mubr.bf16.mxu0 0
    %4147 = vmatmul.mubr.bf16.gmra.mrb[0].mxu0 %v2690
    %v4148 = vpop.f32.mrb[0].mxu0
    %v4149 = vadd.f32 %v3916, %v4148
    %v4150 = vpop.f32.mrb[0].mxu0
    %v4151 = vpop.f32.mrb[0].mxu0
    %v4152 = vadd.f32 %v3919, %v4151
    %v4153 = vpop.f32.mrb[0].mxu0
    %4154 = vmatprep.mubr.bf16.mxu0 0
    %4155 = vmatmul.mubr.bf16.gmra.mrb[0].mxu0 %v2693
    %v4156 = vpop.f32.mrb[0].mxu0
    %v4157 = vadd.f32 %v3924, %v4156
    %v4158 = vpop.f32.mrb[0].mxu0
    %v4159 = vpop.f32.mrb[0].mxu0
    %v4160 = vadd.f32 %v3927, %v4159
    %v4161 = vpop.f32.mrb[0].mxu0
    %4162 = vmatprep.mubr.bf16.mxu0 0
    %4163 = vmatmul.mubr.bf16.gmra.mrb[0].mxu0 %v2696
    %v4164 = vpop.f32.mrb[0].mxu0
    %v4165 = vadd.f32 %v3932, %v4164
    %v4166 = vpop.f32.mrb[0].mxu0
    %v4167 = vpop.f32.mrb[0].mxu0
    %v4168 = vadd.f32 %v3935, %v4167
    %v4169 = vpop.f32.mrb[0].mxu0
    %4170 = vmatprep.mubr.bf16.mxu0 0
    %4171 = vmatmul.mubr.bf16.gmra.mrb[0].mxu0 %v2699
    %v4172 = vpop.f32.mrb[0].mxu0
    %v4173 = vadd.f32 %v3940, %v4172
    %v4174 = vpop.f32.mrb[0].mxu0
    %v4175 = vpop.f32.mrb[0].mxu0
    %v4176 = vadd.f32 %v3943, %v4175
    %v4177 = vpop.f32.mrb[0].mxu0
    %4178 = vmatprep.mubr.bf16.mxu0 0
    %4179 = vmatmul.mubr.bf16.gmra.mrb[0].mxu0 %v2702
    %v4180 = vpop.f32.mrb[0].mxu0
    %v4181 = vadd.f32 %v3948, %v4180
    %v4182 = vpop.f32.mrb[0].mxu0
    %v4183 = vpop.f32.mrb[0].mxu0
    %v4184 = vadd.f32 %v3951, %v4183
    %v4185 = vpop.f32.mrb[0].mxu0
    %4186 = vmatprep.mubr.bf16.mxu0 0
    %4187 = vmatmul.mubr.bf16.gmra.mrb[0].mxu0 %v2705
    %v4188 = vpop.f32.mrb[0].mxu0
    %v4189 = vadd.f32 %v3956, %v4188
    %v4190 = vpop.f32.mrb[0].mxu0
    %v4191 = vpop.f32.mrb[0].mxu0
    %v4192 = vadd.f32 %v3959, %v4191
    %v4193 = vpop.f32.mrb[0].mxu0
    %4194 = vmatprep.mubr.bf16.mxu0 0
    %4195 = vmatmul.mubr.bf16.gmra.mrb[0].mxu0 %v2708
    %v4196 = vpop.f32.mrb[0].mxu0
    %v4197 = vadd.f32 %v3964, %v4196
    %v4198 = vpop.f32.mrb[0].mxu0
    %v4199 = vpop.f32.mrb[0].mxu0
    %v4200 = vadd.f32 %v3967, %v4199
    %v4201 = vpop.f32.mrb[0].mxu0
    %4202 = vmatprep.mubr.bf16.mxu0 0
    %4203 = vmatmul.mubr.bf16.gmra.mrb[0].mxu0 %v2711
    %v4204 = vpop.f32.mrb[0].mxu0
    %v4205 = vadd.f32 %v3972, %v4204
    %v4206 = vpop.f32.mrb[0].mxu0
    %v4207 = vpop.f32.mrb[0].mxu0
    %v4208 = vadd.f32 %v3975, %v4207
    %v4209 = vpop.f32.mrb[0].mxu0
    %4210 = vmatprep.mubr.bf16.mxu0 0
    %4211 = vmatmul.mubr.bf16.gmra.mrb[0].mxu0 %v2714
    %v4212 = vpop.f32.mrb[0].mxu0
    %v4213 = vadd.f32 %v3980, %v4212
    %v4214 = vpop.f32.mrb[0].mxu0
    %v4215 = vpop.f32.mrb[0].mxu0
    %v4216 = vadd.f32 %v3983, %v4215
    %v4217 = vpop.f32.mrb[0].mxu0
    %4218 = vmatprep.mubr.bf16.mxu0 0
    %4219 = vmatmul.mubr.bf16.gmra.mrb[0].mxu0 %v2717
    %v4220 = vpop.f32.mrb[0].mxu0
    %v4221 = vadd.f32 %v3988, %v4220
    %v4222 = vpop.f32.mrb[0].mxu0
    %v4223 = vpop.f32.mrb[0].mxu0
    %v4224 = vadd.f32 %v3991, %v4223
    %v4225 = vpop.f32.mrb[0].mxu0
    %4226 = vmatprep.mubr.bf16.mxu0 0
    %4227 = vmatmul.mubr.bf16.gmra.mrb[0].mxu0 %v2720
    %v4228 = vpop.f32.mrb[0].mxu0
    %v4229 = vadd.f32 %v3996, %v4228
    %v4230 = vpop.f32.mrb[0].mxu0
    %v4231 = vpop.f32.mrb[0].mxu0
    %v4232 = vadd.f32 %v3999, %v4231
    %v4233 = vpop.f32.mrb[0].mxu0
    %4234 = vmatprep.mubr.bf16.mxu0 0
    %4235 = vmatmul.mubr.bf16.gmra.mrb[0].mxu0 %v2723
    %v4236 = vpop.f32.mrb[0].mxu0
    %v4237 = vadd.f32 %v4004, %v4236
    %v4238 = vpop.f32.mrb[0].mxu0
    %v4239 = vpop.f32.mrb[0].mxu0
    %v4240 = vadd.f32 %v4007, %v4239
    %v4241 = vpop.f32.mrb[0].mxu0
    %4242 = vmatprep.mubr.bf16.mxu0 0
    %4243 = vmatmul.mubr.bf16.gmra.mrb[0].mxu0 %v2726
    %v4244 = vpop.f32.mrb[0].mxu0
    %v4245 = vadd.f32 %v4012, %v4244
    %v4246 = vpop.f32.mrb[0].mxu0
    %v4247 = vpop.f32.mrb[0].mxu0
    %v4248 = vadd.f32 %v4015, %v4247
    %v4249 = vpop.f32.mrb[0].mxu0
    %4250 = vmatprep.mubr.bf16.mxu0 0
    %4251 = vmatmul.mubr.bf16.gmra.mrb[0].mxu0 %v2729
    %v4252 = vpop.f32.mrb[0].mxu0
    %v4253 = vadd.f32 %v4020, %v4252
    %v4254 = vpop.f32.mrb[0].mxu0
    %v4255 = vpop.f32.mrb[0].mxu0
    %v4256 = vadd.f32 %v4023, %v4255
    %v4257 = vpop.f32.mrb[0].mxu0
    %4258 = vmatprep.mubr.bf16.mxu0 0
    %4259 = vmatmul.mubr.bf16.gmra.mrb[0].mxu0 %v2732
    %v4260 = vpop.f32.mrb[0].mxu0
    %v4261 = vadd.f32 %v4028, %v4260
    %v4262 = vpop.f32.mrb[0].mxu0
    %v4263 = vpop.f32.mrb[0].mxu0
    %v4264 = vadd.f32 %v4031, %v4263
    %v4265 = vpop.f32.mrb[0].mxu0
    %4266 = vmatprep.mubr.bf16.mxu0 0
    %4267 = vmatmul.mubr.bf16.gmra.mrb[0].mxu0 %v2735
    %v4268 = vpop.f32.mrb[0].mxu0
    %v4269 = vadd.f32 %v4036, %v4268
    %v4270 = vpop.f32.mrb[0].mxu0
    %v4271 = vpop.f32.mrb[0].mxu0
    %v4272 = vadd.f32 %v4039, %v4271
    %v4273 = vpop.f32.mrb[0].mxu0
    %4274 = vmatprep.mubr.bf16.mxu0 0
    %4275 = vmatmul.mubr.bf16.gmra.mrb[0].mxu0 %v2738
    %v4276 = vpop.f32.mrb[0].mxu0
    %v4277 = vadd.f32 %v4044, %v4276
    %v4278 = vpop.f32.mrb[0].mxu0
    %v4279 = vpop.f32.mrb[0].mxu0
    %v4280 = vadd.f32 %v4047, %v4279
    %v4281 = vpop.f32.mrb[0].mxu0
    %4282 = vmatprep.mubr.bf16.mxu0 0
    %4283 = vmatmul.mubr.bf16.gmra.mrb[0].mxu0 %v2741
    %v4284 = vpop.f32.mrb[0].mxu0
    %v4285 = vadd.f32 %v4052, %v4284
    %v4286 = vpop.f32.mrb[0].mxu0
    %v4287 = vpop.f32.mrb[0].mxu0
    %v4288 = vadd.f32 %v4055, %v4287
    %v4289 = vpop.f32.mrb[0].mxu0
    %4290 = vmatprep.mubr.bf16.mxu0 0
    %4291 = vmatmul.mubr.bf16.gmra.mrb[0].mxu0 %v2744
    %v4292 = vpop.f32.mrb[0].mxu0
    %v4293 = vadd.f32 %v4060, %v4292
    %v4294 = vpop.f32.mrb[0].mxu0
    %v4295 = vpop.f32.mrb[0].mxu0
    %v4296 = vadd.f32 %v4063, %v4295
    %v4297 = vpop.f32.mrb[0].mxu0
    %4298 = vmatprep.mubr.bf16.mxu0 0
    %4299 = vmatmul.mubr.bf16.gmra.mrb[0].mxu0 %v2747
    %v4300 = vpop.f32.mrb[0].mxu0
    %v4301 = vadd.f32 %v4068, %v4300
    %v4302 = vpop.f32.mrb[0].mxu0
    %v4303 = vpop.f32.mrb[0].mxu0
    %v4304 = vadd.f32 %v4071, %v4303
    %v4305 = vpop.f32.mrb[0].mxu0
    %4306 = vdwg.mxu0
    %v4307 = vmax.f32 %v3360, 0.0
    %v4308 = vmax.f32 %v3362, 0.0
    %v4309 = vmax.f32 %v4109, 0.0
    %v4310 = vmax.f32 %v3364, 0.0
    %v4311 = vmax.f32 %v3366, 0.0
    %v4312 = vmax.f32 %v4112, 0.0
    %v4313 = vmax.f32 %v3370, 0.0
    %v4314 = vmax.f32 %v3372, 0.0
    %v4315 = vmax.f32 %v4117, 0.0
    %v4316 = vmax.f32 %v3374, 0.0
    %v4317 = vmax.f32 %v3376, 0.0
    %v4318 = vmax.f32 %v4120, 0.0
    %v4319 = vmax.f32 %v3380, 0.0
    %v4320 = vmax.f32 %v3382, 0.0
    %v4321 = vmax.f32 %v4125, 0.0
    %v4322 = vmax.f32 %v3384, 0.0
    %v4323 = vmax.f32 %v3386, 0.0
    %v4324 = vmax.f32 %v4128, 0.0
    %v4325 = vmax.f32 %v3390, 0.0
    %v4326 = vmax.f32 %v3392, 0.0
    %v4327 = vmax.f32 %v4133, 0.0
    %v4328 = vmax.f32 %v3394, 0.0
    %v4329 = vmax.f32 %v3396, 0.0
    %v4330 = vmax.f32 %v4136, 0.0
    %v4331 = vmax.f32 %v3400, 0.0
    %v4332 = vmax.f32 %v3402, 0.0
    %v4333 = vmax.f32 %v4141, 0.0
    %v4334 = vmax.f32 %v3404, 0.0
    %v4335 = vmax.f32 %v3406, 0.0
    %v4336 = vmax.f32 %v4144, 0.0
    %v4337 = vmax.f32 %v3410, 0.0
    %v4338 = vmax.f32 %v3412, 0.0
    %v4339 = vmax.f32 %v4149, 0.0
    %v4340 = vmax.f32 %v3414, 0.0
    %v4341 = vmax.f32 %v3416, 0.0
    %v4342 = vmax.f32 %v4152, 0.0
    %v4343 = vmax.f32 %v3420, 0.0
    %v4344 = vmax.f32 %v3422, 0.0
    %v4345 = vmax.f32 %v4157, 0.0
    %v4346 = vmax.f32 %v3424, 0.0
    %v4347 = vmax.f32 %v3426, 0.0
    %v4348 = vmax.f32 %v4160, 0.0
    %v4349 = vmax.f32 %v3430, 0.0
    %v4350 = vmax.f32 %v3432, 0.0
    %v4351 = vmax.f32 %v4165, 0.0
    %v4352 = vmax.f32 %v3434, 0.0
    %v4353 = vmax.f32 %v3436, 0.0
    %v4354 = vmax.f32 %v4168, 0.0
    %v4355 = vmax.f32 %v3440, 0.0
    %v4356 = vmax.f32 %v3442, 0.0
    %v4357 = vmax.f32 %v4173, 0.0
    %v4358 = vmax.f32 %v3444, 0.0
    %v4359 = vmax.f32 %v3446, 0.0
    %v4360 = vmax.f32 %v4176, 0.0
    %v4361 = vmax.f32 %v3450, 0.0
    %v4362 = vmax.f32 %v3452, 0.0
    %v4363 = vmax.f32 %v4181, 0.0
    %v4364 = vmax.f32 %v3454, 0.0
    %v4365 = vmax.f32 %v3456, 0.0
    %v4366 = vmax.f32 %v4184, 0.0
    %v4367 = vmax.f32 %v3460, 0.0
    %v4368 = vmax.f32 %v3462, 0.0
    %v4369 = vmax.f32 %v4189, 0.0
    %v4370 = vmax.f32 %v3464, 0.0
    %v4371 = vmax.f32 %v3466, 0.0
    %v4372 = vmax.f32 %v4192, 0.0
    %v4373 = vmax.f32 %v3470, 0.0
    %v4374 = vmax.f32 %v3472, 0.0
    %v4375 = vmax.f32 %v4197, 0.0
    %v4376 = vmax.f32 %v3474, 0.0
    %v4377 = vmax.f32 %v3476, 0.0
    %v4378 = vmax.f32 %v4200, 0.0
    %v4379 = vmax.f32 %v3480, 0.0
    %v4380 = vmax.f32 %v3482, 0.0
    %v4381 = vmax.f32 %v4205, 0.0
    %v4382 = vmax.f32 %v3484, 0.0
    %v4383 = vmax.f32 %v3486, 0.0
    %v4384 = vmax.f32 %v4208, 0.0
    %v4385 = vmax.f32 %v3490, 0.0
    %v4386 = vmax.f32 %v3492, 0.0
    %v4387 = vmax.f32 %v4213, 0.0
    %v4388 = vmax.f32 %v3494, 0.0
    %v4389 = vmax.f32 %v3496, 0.0
    %v4390 = vmax.f32 %v4216, 0.0
    %v4391 = vmax.f32 %v3500, 0.0
    %v4392 = vmax.f32 %v3502, 0.0
    %v4393 = vmax.f32 %v4221, 0.0
    %v4394 = vmax.f32 %v3504, 0.0
    %v4395 = vmax.f32 %v3506, 0.0
    %v4396 = vmax.f32 %v4224, 0.0
    %v4397 = vmax.f32 %v3510, 0.0
    %v4398 = vmax.f32 %v3512, 0.0
    %v4399 = vmax.f32 %v4229, 0.0
    %v4400 = vmax.f32 %v3514, 0.0
    %v4401 = vmax.f32 %v3516, 0.0
    %v4402 = vmax.f32 %v4232, 0.0
    %v4403 = vmax.f32 %v3520, 0.0
    %v4404 = vmax.f32 %v3522, 0.0
    %v4405 = vmax.f32 %v4237, 0.0
    %v4406 = vmax.f32 %v3524, 0.0
    %v4407 = vmax.f32 %v3526, 0.0
    %v4408 = vmax.f32 %v4240, 0.0
    %v4409 = vmax.f32 %v3530, 0.0
    %v4410 = vmax.f32 %v3532, 0.0
    %v4411 = vmax.f32 %v4245, 0.0
    %v4412 = vmax.f32 %v3534, 0.0
    %v4413 = vmax.f32 %v3536, 0.0
    %v4414 = vmax.f32 %v4248, 0.0
    %v4415 = vmax.f32 %v3540, 0.0
    %v4416 = vmax.f32 %v3542, 0.0
    %v4417 = vmax.f32 %v4253, 0.0
    %v4418 = vmax.f32 %v3544, 0.0
    %v4419 = vmax.f32 %v3546, 0.0
    %v4420 = vmax.f32 %v4256, 0.0
    %v4421 = vmax.f32 %v3550, 0.0
    %v4422 = vmax.f32 %v3552, 0.0
    %v4423 = vmax.f32 %v4261, 0.0
    %v4424 = vmax.f32 %v3554, 0.0
    %v4425 = vmax.f32 %v3556, 0.0
    %v4426 = vmax.f32 %v4264, 0.0
    %v4427 = vmax.f32 %v3560, 0.0
    %v4428 = vmax.f32 %v3562, 0.0
    %v4429 = vmax.f32 %v4269, 0.0
    %v4430 = vmax.f32 %v3564, 0.0
    %v4431 = vmax.f32 %v3566, 0.0
    %v4432 = vmax.f32 %v4272, 0.0
    %v4433 = vmax.f32 %v3570, 0.0
    %v4434 = vmax.f32 %v3572, 0.0
    %v4435 = vmax.f32 %v4277, 0.0
    %v4436 = vmax.f32 %v3574, 0.0
    %v4437 = vmax.f32 %v3576, 0.0
    %v4438 = vmax.f32 %v4280, 0.0
    %v4439 = vmax.f32 %v3580, 0.0
    %v4440 = vmax.f32 %v3582, 0.0
    %v4441 = vmax.f32 %v4285, 0.0
    %v4442 = vmax.f32 %v3584, 0.0
    %v4443 = vmax.f32 %v3586, 0.0
    %v4444 = vmax.f32 %v4288, 0.0
    %v4445 = vmax.f32 %v3590, 0.0
    %v4446 = vmax.f32 %v3592, 0.0
    %v4447 = vmax.f32 %v4293, 0.0
    %v4448 = vmax.f32 %v3594, 0.0
    %v4449 = vmax.f32 %v3596, 0.0
    %v4450 = vmax.f32 %v4296, 0.0
    %v4451 = vmax.f32 %v3600, 0.0
    %v4452 = vmax.f32 %v3602, 0.0
    %v4453 = vmax.f32 %v4301, 0.0
    %v4454 = vmax.f32 %v3604, 0.0
    %v4455 = vmax.f32 %v3606, 0.0
    %v4456 = vmax.f32 %v4304, 0.0
    %4507 = vrot.lane.b32.xlu0 %v4307, 64
    %v4508 = vpop.permute.xlu0 %4507
    %4509 = vrot.lane.b32.xlu0 %v4310, 64
    %v4510 = vpop.permute.xlu0 %4509
    %4511 = vrot.lane.b32.xlu0 %v4313, 64
    %v4512 = vpop.permute.xlu0 %4511
    %4513 = vrot.lane.b32.xlu0 %v4316, 64
    %v4514 = vpop.permute.xlu0 %4513
    %4515 = vrot.lane.b32.xlu0 %v4319, 64
    %v4516 = vpop.permute.xlu0 %4515
    %4517 = vrot.lane.b32.xlu0 %v4322, 64
    %v4518 = vpop.permute.xlu0 %4517
    %4519 = vrot.lane.b32.xlu0 %v4325, 64
    %v4520 = vpop.permute.xlu0 %4519
    %4521 = vrot.lane.b32.xlu0 %v4328, 64
    %v4522 = vpop.permute.xlu0 %4521
    %4523 = vrot.lane.b32.xlu0 %v4331, 64
    %v4524 = vpop.permute.xlu0 %4523
    %4525 = vrot.lane.b32.xlu0 %v4334, 64
    %v4526 = vpop.permute.xlu0 %4525
    %4527 = vrot.lane.b32.xlu0 %v4337, 64
    %v4528 = vpop.permute.xlu0 %4527
    %4529 = vrot.lane.b32.xlu0 %v4340, 64
    %v4530 = vpop.permute.xlu0 %4529
    %4531 = vrot.lane.b32.xlu0 %v4343, 64
    %v4532 = vpop.permute.xlu0 %4531
    %4533 = vrot.lane.b32.xlu0 %v4346, 64
    %v4534 = vpop.permute.xlu0 %4533
    %4535 = vrot.lane.b32.xlu0 %v4349, 64
    %v4536 = vpop.permute.xlu0 %4535
    %4537 = vrot.lane.b32.xlu0 %v4352, 64
    %v4538 = vpop.permute.xlu0 %4537
    %4539 = vrot.lane.b32.xlu0 %v4355, 64
    %v4540 = vpop.permute.xlu0 %4539
    %4541 = vrot.lane.b32.xlu0 %v4358, 64
    %v4542 = vpop.permute.xlu0 %4541
    %4543 = vrot.lane.b32.xlu0 %v4361, 64
    %v4544 = vpop.permute.xlu0 %4543
    %4545 = vrot.lane.b32.xlu0 %v4364, 64
    %v4546 = vpop.permute.xlu0 %4545
    %4547 = vrot.lane.b32.xlu0 %v4367, 64
    %v4548 = vpop.permute.xlu0 %4547
    %4549 = vrot.lane.b32.xlu0 %v4370, 64
    %v4550 = vpop.permute.xlu0 %4549
    %4551 = vrot.lane.b32.xlu0 %v4373, 64
    %v4552 = vpop.permute.xlu0 %4551
    %4553 = vrot.lane.b32.xlu0 %v4376, 64
    %v4554 = vpop.permute.xlu0 %4553
    %4555 = vrot.lane.b32.xlu0 %v4379, 64
    %v4556 = vpop.permute.xlu0 %4555
    %4557 = vrot.lane.b32.xlu0 %v4382, 64
    %v4558 = vpop.permute.xlu0 %4557
    %4559 = vrot.lane.b32.xlu0 %v4385, 64
    %v4560 = vpop.permute.xlu0 %4559
    %4561 = vrot.lane.b32.xlu0 %v4388, 64
    %v4562 = vpop.permute.xlu0 %4561
    %4563 = vrot.lane.b32.xlu0 %v4391, 64
    %v4564 = vpop.permute.xlu0 %4563
    %4565 = vrot.lane.b32.xlu0 %v4394, 64
    %v4566 = vpop.permute.xlu0 %4565
    %4567 = vrot.lane.b32.xlu0 %v4397, 64
    %v4568 = vpop.permute.xlu0 %4567
    %4569 = vrot.lane.b32.xlu0 %v4400, 64
    %v4570 = vpop.permute.xlu0 %4569
    %4571 = vrot.lane.b32.xlu0 %v4403, 64
    %v4572 = vpop.permute.xlu0 %4571
    %4573 = vrot.lane.b32.xlu0 %v4406, 64
    %v4574 = vpop.permute.xlu0 %4573
    %4575 = vrot.lane.b32.xlu0 %v4409, 64
    %v4576 = vpop.permute.xlu0 %4575
    %4577 = vrot.lane.b32.xlu0 %v4412, 64
    %v4578 = vpop.permute.xlu0 %4577
    %4579 = vrot.lane.b32.xlu0 %v4415, 64
    %v4580 = vpop.permute.xlu0 %4579
    %4581 = vrot.lane.b32.xlu0 %v4418, 64
    %v4582 = vpop.permute.xlu0 %4581
    %4583 = vrot.lane.b32.xlu0 %v4421, 64
    %v4584 = vpop.permute.xlu0 %4583
    %4585 = vrot.lane.b32.xlu0 %v4424, 64
    %v4586 = vpop.permute.xlu0 %4585
    %4587 = vrot.lane.b32.xlu0 %v4427, 64
    %v4588 = vpop.permute.xlu0 %4587
    %4589 = vrot.lane.b32.xlu0 %v4430, 64
    %v4590 = vpop.permute.xlu0 %4589
    %4591 = vrot.lane.b32.xlu0 %v4433, 64
    %v4592 = vpop.permute.xlu0 %4591
    %4593 = vrot.lane.b32.xlu0 %v4436, 64
    %v4594 = vpop.permute.xlu0 %4593
    %4595 = vrot.lane.b32.xlu0 %v4439, 64
    %v4596 = vpop.permute.xlu0 %4595
    %4597 = vrot.lane.b32.xlu0 %v4442, 64
    %v4598 = vpop.permute.xlu0 %4597
    %4599 = vrot.lane.b32.xlu0 %v4445, 64
    %v4600 = vpop.permute.xlu0 %4599
    %4601 = vrot.lane.b32.xlu0 %v4448, 64
    %v4602 = vpop.permute.xlu0 %4601
    %4603 = vrot.lane.b32.xlu0 %v4451, 64
    %v4604 = vpop.permute.xlu0 %4603
    %4605 = vrot.lane.b32.xlu0 %v4454, 64
    %v4606 = vpop.permute.xlu0 %4605
    %v4657 = vmax.f32 %v4307, %v4508
    %v4658 = vmax.f32 %v4310, %v4510
    %v4659 = vmax.f32 %v4313, %v4512
    %v4660 = vmax.f32 %v4316, %v4514
    %v4661 = vmax.f32 %v4319, %v4516
    %v4662 = vmax.f32 %v4322, %v4518
    %v4663 = vmax.f32 %v4325, %v4520
    %v4664 = vmax.f32 %v4328, %v4522
    %v4665 = vmax.f32 %v4331, %v4524
    %v4666 = vmax.f32 %v4334, %v4526
    %v4667 = vmax.f32 %v4337, %v4528
    %v4668 = vmax.f32 %v4340, %v4530
    %v4669 = vmax.f32 %v4343, %v4532
    %v4670 = vmax.f32 %v4346, %v4534
    %v4671 = vmax.f32 %v4349, %v4536
    %v4672 = vmax.f32 %v4352, %v4538
    %v4673 = vmax.f32 %v4355, %v4540
    %v4674 = vmax.f32 %v4358, %v4542
    %v4675 = vmax.f32 %v4361, %v4544
    %v4676 = vmax.f32 %v4364, %v4546
    %v4677 = vmax.f32 %v4367, %v4548
    %v4678 = vmax.f32 %v4370, %v4550
    %v4679 = vmax.f32 %v4373, %v4552
    %v4680 = vmax.f32 %v4376, %v4554
    %v4681 = vmax.f32 %v4379, %v4556
    %v4682 = vmax.f32 %v4382, %v4558
    %v4683 = vmax.f32 %v4385, %v4560
    %v4684 = vmax.f32 %v4388, %v4562
    %v4685 = vmax.f32 %v4391, %v4564
    %v4686 = vmax.f32 %v4394, %v4566
    %v4687 = vmax.f32 %v4397, %v4568
    %v4688 = vmax.f32 %v4400, %v4570
    %v4689 = vmax.f32 %v4403, %v4572
    %v4690 = vmax.f32 %v4406, %v4574
    %v4691 = vmax.f32 %v4409, %v4576
    %v4692 = vmax.f32 %v4412, %v4578
    %v4693 = vmax.f32 %v4415, %v4580
    %v4694 = vmax.f32 %v4418, %v4582
    %v4695 = vmax.f32 %v4421, %v4584
    %v4696 = vmax.f32 %v4424, %v4586
    %v4697 = vmax.f32 %v4427, %v4588
    %v4698 = vmax.f32 %v4430, %v4590
    %v4699 = vmax.f32 %v4433, %v4592
    %v4700 = vmax.f32 %v4436, %v4594
    %v4701 = vmax.f32 %v4439, %v4596
    %v4702 = vmax.f32 %v4442, %v4598
    %v4703 = vmax.f32 %v4445, %v4600
    %v4704 = vmax.f32 %v4448, %v4602
    %v4705 = vmax.f32 %v4451, %v4604
    %v4706 = vmax.f32 %v4454, %v4606
    %v4707 = vmax.f32 %v4657, %v4308
    %v4708 = vmax.f32 %v4658, %v4311
    %v4709 = vmax.f32 %v4659, %v4314
    %v4710 = vmax.f32 %v4660, %v4317
    %v4711 = vmax.f32 %v4661, %v4320
    %v4712 = vmax.f32 %v4662, %v4323
    %v4713 = vmax.f32 %v4663, %v4326
    %v4714 = vmax.f32 %v4664, %v4329
    %v4715 = vmax.f32 %v4665, %v4332
    %v4716 = vmax.f32 %v4666, %v4335
    %v4717 = vmax.f32 %v4667, %v4338
    %v4718 = vmax.f32 %v4668, %v4341
    %v4719 = vmax.f32 %v4669, %v4344
    %v4720 = vmax.f32 %v4670, %v4347
    %v4721 = vmax.f32 %v4671, %v4350
    %v4722 = vmax.f32 %v4672, %v4353
    %v4723 = vmax.f32 %v4673, %v4356
    %v4724 = vmax.f32 %v4674, %v4359
    %v4725 = vmax.f32 %v4675, %v4362
    %v4726 = vmax.f32 %v4676, %v4365
    %v4727 = vmax.f32 %v4677, %v4368
    %v4728 = vmax.f32 %v4678, %v4371
    %v4729 = vmax.f32 %v4679, %v4374
    %v4730 = vmax.f32 %v4680, %v4377
    %v4731 = vmax.f32 %v4681, %v4380
    %v4732 = vmax.f32 %v4682, %v4383
    %v4733 = vmax.f32 %v4683, %v4386
    %v4734 = vmax.f32 %v4684, %v4389
    %v4735 = vmax.f32 %v4685, %v4392
    %v4736 = vmax.f32 %v4686, %v4395
    %v4737 = vmax.f32 %v4687, %v4398
    %v4738 = vmax.f32 %v4688, %v4401
    %v4739 = vmax.f32 %v4689, %v4404
    %v4740 = vmax.f32 %v4690, %v4407
    %v4741 = vmax.f32 %v4691, %v4410
    %v4742 = vmax.f32 %v4692, %v4413
    %v4743 = vmax.f32 %v4693, %v4416
    %v4744 = vmax.f32 %v4694, %v4419
    %v4745 = vmax.f32 %v4695, %v4422
    %v4746 = vmax.f32 %v4696, %v4425
    %v4747 = vmax.f32 %v4697, %v4428
    %v4748 = vmax.f32 %v4698, %v4431
    %v4749 = vmax.f32 %v4699, %v4434
    %v4750 = vmax.f32 %v4700, %v4437
    %v4751 = vmax.f32 %v4701, %v4440
    %v4752 = vmax.f32 %v4702, %v4443
    %v4753 = vmax.f32 %v4703, %v4446
    %v4754 = vmax.f32 %v4704, %v4449
    %v4755 = vmax.f32 %v4705, %v4452
    %v4756 = vmax.f32 %v4706, %v4455
    %4807 = vrot.lane.b32.xlu0 %v4308, 64
    %v4808 = vpop.permute.xlu0 %4807
    %4809 = vrot.lane.b32.xlu0 %v4311, 64
    %v4810 = vpop.permute.xlu0 %4809
    %4811 = vrot.lane.b32.xlu0 %v4314, 64
    %v4812 = vpop.permute.xlu0 %4811
    %4813 = vrot.lane.b32.xlu0 %v4317, 64
    %v4814 = vpop.permute.xlu0 %4813
    %4815 = vrot.lane.b32.xlu0 %v4320, 64
    %v4816 = vpop.permute.xlu0 %4815
    %4817 = vrot.lane.b32.xlu0 %v4323, 64
    %v4818 = vpop.permute.xlu0 %4817
    %4819 = vrot.lane.b32.xlu0 %v4326, 64
    %v4820 = vpop.permute.xlu0 %4819
    %4821 = vrot.lane.b32.xlu0 %v4329, 64
    %v4822 = vpop.permute.xlu0 %4821
    %4823 = vrot.lane.b32.xlu0 %v4332, 64
    %v4824 = vpop.permute.xlu0 %4823
    %4825 = vrot.lane.b32.xlu0 %v4335, 64
    %v4826 = vpop.permute.xlu0 %4825
    %4827 = vrot.lane.b32.xlu0 %v4338, 64
    %v4828 = vpop.permute.xlu0 %4827
    %4829 = vrot.lane.b32.xlu0 %v4341, 64
    %v4830 = vpop.permute.xlu0 %4829
    %4831 = vrot.lane.b32.xlu0 %v4344, 64
    %v4832 = vpop.permute.xlu0 %4831
    %4833 = vrot.lane.b32.xlu0 %v4347, 64
    %v4834 = vpop.permute.xlu0 %4833
    %4835 = vrot.lane.b32.xlu0 %v4350, 64
    %v4836 = vpop.permute.xlu0 %4835
    %4837 = vrot.lane.b32.xlu0 %v4353, 64
    %v4838 = vpop.permute.xlu0 %4837
    %4839 = vrot.lane.b32.xlu0 %v4356, 64
    %v4840 = vpop.permute.xlu0 %4839
    %4841 = vrot.lane.b32.xlu0 %v4359, 64
    %v4842 = vpop.permute.xlu0 %4841
    %4843 = vrot.lane.b32.xlu0 %v4362, 64
    %v4844 = vpop.permute.xlu0 %4843
    %4845 = vrot.lane.b32.xlu0 %v4365, 64
    %v4846 = vpop.permute.xlu0 %4845
    %4847 = vrot.lane.b32.xlu0 %v4368, 64
    %v4848 = vpop.permute.xlu0 %4847
    %4849 = vrot.lane.b32.xlu0 %v4371, 64
    %v4850 = vpop.permute.xlu0 %4849
    %4851 = vrot.lane.b32.xlu0 %v4374, 64
    %v4852 = vpop.permute.xlu0 %4851
    %4853 = vrot.lane.b32.xlu0 %v4377, 64
    %v4854 = vpop.permute.xlu0 %4853
    %4855 = vrot.lane.b32.xlu0 %v4380, 64
    %v4856 = vpop.permute.xlu0 %4855
    %4857 = vrot.lane.b32.xlu0 %v4383, 64
    %v4858 = vpop.permute.xlu0 %4857
    %4859 = vrot.lane.b32.xlu0 %v4386, 64
    %v4860 = vpop.permute.xlu0 %4859
    %4861 = vrot.lane.b32.xlu0 %v4389, 64
    %v4862 = vpop.permute.xlu0 %4861
    %4863 = vrot.lane.b32.xlu0 %v4392, 64
    %v4864 = vpop.permute.xlu0 %4863
    %4865 = vrot.lane.b32.xlu0 %v4395, 64
    %v4866 = vpop.permute.xlu0 %4865
    %4867 = vrot.lane.b32.xlu0 %v4398, 64
    %v4868 = vpop.permute.xlu0 %4867
    %4869 = vrot.lane.b32.xlu0 %v4401, 64
    %v4870 = vpop.permute.xlu0 %4869
    %4871 = vrot.lane.b32.xlu0 %v4404, 64
    %v4872 = vpop.permute.xlu0 %4871
    %4873 = vrot.lane.b32.xlu0 %v4407, 64
    %v4874 = vpop.permute.xlu0 %4873
    %4875 = vrot.lane.b32.xlu0 %v4410, 64
    %v4876 = vpop.permute.xlu0 %4875
    %4877 = vrot.lane.b32.xlu0 %v4413, 64
    %v4878 = vpop.permute.xlu0 %4877
    %4879 = vrot.lane.b32.xlu0 %v4416, 64
    %v4880 = vpop.permute.xlu0 %4879
    %4881 = vrot.lane.b32.xlu0 %v4419, 64
    %v4882 = vpop.permute.xlu0 %4881
    %4883 = vrot.lane.b32.xlu0 %v4422, 64
    %v4884 = vpop.permute.xlu0 %4883
    %4885 = vrot.lane.b32.xlu0 %v4425, 64
    %v4886 = vpop.permute.xlu0 %4885
    %4887 = vrot.lane.b32.xlu0 %v4428, 64
    %v4888 = vpop.permute.xlu0 %4887
    %4889 = vrot.lane.b32.xlu0 %v4431, 64
    %v4890 = vpop.permute.xlu0 %4889
    %4891 = vrot.lane.b32.xlu0 %v4434, 64
    %v4892 = vpop.permute.xlu0 %4891
    %4893 = vrot.lane.b32.xlu0 %v4437, 64
    %v4894 = vpop.permute.xlu0 %4893
    %4895 = vrot.lane.b32.xlu0 %v4440, 64
    %v4896 = vpop.permute.xlu0 %4895
    %4897 = vrot.lane.b32.xlu0 %v4443, 64
    %v4898 = vpop.permute.xlu0 %4897
    %4899 = vrot.lane.b32.xlu0 %v4446, 64
    %v4900 = vpop.permute.xlu0 %4899
    %4901 = vrot.lane.b32.xlu0 %v4449, 64
    %v4902 = vpop.permute.xlu0 %4901
    %4903 = vrot.lane.b32.xlu0 %v4452, 64
    %v4904 = vpop.permute.xlu0 %4903
    %4905 = vrot.lane.b32.xlu0 %v4455, 64
    %v4906 = vpop.permute.xlu0 %4905
    %v4957 = vmax.f32 %v4707, %v4808
    %v4958 = vmax.f32 %v4708, %v4810
    %v4959 = vmax.f32 %v4709, %v4812
    %v4960 = vmax.f32 %v4710, %v4814
    %v4961 = vmax.f32 %v4711, %v4816
    %v4962 = vmax.f32 %v4712, %v4818
    %v4963 = vmax.f32 %v4713, %v4820
    %v4964 = vmax.f32 %v4714, %v4822
    %v4965 = vmax.f32 %v4715, %v4824
    %v4966 = vmax.f32 %v4716, %v4826
    %v4967 = vmax.f32 %v4717, %v4828
    %v4968 = vmax.f32 %v4718, %v4830
    %v4969 = vmax.f32 %v4719, %v4832
    %v4970 = vmax.f32 %v4720, %v4834
    %v4971 = vmax.f32 %v4721, %v4836
    %v4972 = vmax.f32 %v4722, %v4838
    %v4973 = vmax.f32 %v4723, %v4840
    %v4974 = vmax.f32 %v4724, %v4842
    %v4975 = vmax.f32 %v4725, %v4844
    %v4976 = vmax.f32 %v4726, %v4846
    %v4977 = vmax.f32 %v4727, %v4848
    %v4978 = vmax.f32 %v4728, %v4850
    %v4979 = vmax.f32 %v4729, %v4852
    %v4980 = vmax.f32 %v4730, %v4854
    %v4981 = vmax.f32 %v4731, %v4856
    %v4982 = vmax.f32 %v4732, %v4858
    %v4983 = vmax.f32 %v4733, %v4860
    %v4984 = vmax.f32 %v4734, %v4862
    %v4985 = vmax.f32 %v4735, %v4864
    %v4986 = vmax.f32 %v4736, %v4866
    %v4987 = vmax.f32 %v4737, %v4868
    %v4988 = vmax.f32 %v4738, %v4870
    %v4989 = vmax.f32 %v4739, %v4872
    %v4990 = vmax.f32 %v4740, %v4874
    %v4991 = vmax.f32 %v4741, %v4876
    %v4992 = vmax.f32 %v4742, %v4878
    %v4993 = vmax.f32 %v4743, %v4880
    %v4994 = vmax.f32 %v4744, %v4882
    %v4995 = vmax.f32 %v4745, %v4884
    %v4996 = vmax.f32 %v4746, %v4886
    %v4997 = vmax.f32 %v4747, %v4888
    %v4998 = vmax.f32 %v4748, %v4890
    %v4999 = vmax.f32 %v4749, %v4892
    %v5000 = vmax.f32 %v4750, %v4894
    %v5001 = vmax.f32 %v4751, %v4896
    %v5002 = vmax.f32 %v4752, %v4898
    %v5003 = vmax.f32 %v4753, %v4900
    %v5004 = vmax.f32 %v4754, %v4902
    %v5005 = vmax.f32 %v4755, %v4904
    %v5006 = vmax.f32 %v4756, %v4906
    %v5007 = vmax.f32 %v4957, %v4309
    %v5008 = vmax.f32 %v4958, %v4312
    %v5009 = vmax.f32 %v4959, %v4315
    %v5010 = vmax.f32 %v4960, %v4318
    %v5011 = vmax.f32 %v4961, %v4321
    %v5012 = vmax.f32 %v4962, %v4324
    %v5013 = vmax.f32 %v4963, %v4327
    %v5014 = vmax.f32 %v4964, %v4330
    %v5015 = vmax.f32 %v4965, %v4333
    %v5016 = vmax.f32 %v4966, %v4336
    %v5017 = vmax.f32 %v4967, %v4339
    %v5018 = vmax.f32 %v4968, %v4342
    %v5019 = vmax.f32 %v4969, %v4345
    %v5020 = vmax.f32 %v4970, %v4348
    %v5021 = vmax.f32 %v4971, %v4351
    %v5022 = vmax.f32 %v4972, %v4354
    %v5023 = vmax.f32 %v4973, %v4357
    %v5024 = vmax.f32 %v4974, %v4360
    %v5025 = vmax.f32 %v4975, %v4363
    %v5026 = vmax.f32 %v4976, %v4366
    %v5027 = vmax.f32 %v4977, %v4369
    %v5028 = vmax.f32 %v4978, %v4372
    %v5029 = vmax.f32 %v4979, %v4375
    %v5030 = vmax.f32 %v4980, %v4378
    %v5031 = vmax.f32 %v4981, %v4381
    %v5032 = vmax.f32 %v4982, %v4384
    %v5033 = vmax.f32 %v4983, %v4387
    %v5034 = vmax.f32 %v4984, %v4390
    %v5035 = vmax.f32 %v4985, %v4393
    %v5036 = vmax.f32 %v4986, %v4396
    %v5037 = vmax.f32 %v4987, %v4399
    %v5038 = vmax.f32 %v4988, %v4402
    %v5039 = vmax.f32 %v4989, %v4405
    %v5040 = vmax.f32 %v4990, %v4408
    %v5041 = vmax.f32 %v4991, %v4411
    %v5042 = vmax.f32 %v4992, %v4414
    %v5043 = vmax.f32 %v4993, %v4417
    %v5044 = vmax.f32 %v4994, %v4420
    %v5045 = vmax.f32 %v4995, %v4423
    %v5046 = vmax.f32 %v4996, %v4426
    %v5047 = vmax.f32 %v4997, %v4429
    %v5048 = vmax.f32 %v4998, %v4432
    %v5049 = vmax.f32 %v4999, %v4435
    %v5050 = vmax.f32 %v5000, %v4438
    %v5051 = vmax.f32 %v5001, %v4441
    %v5052 = vmax.f32 %v5002, %v4444
    %v5053 = vmax.f32 %v5003, %v4447
    %v5054 = vmax.f32 %v5004, %v4450
    %v5055 = vmax.f32 %v5005, %v4453
    %v5056 = vmax.f32 %v5006, %v4456
    %5107 = vrot.lane.b32.xlu0 %v5007, 122
    %v5108 = vpop.permute.xlu0 %5107
    %5109 = vrot.lane.b32.xlu0 %v5008, 122
    %v5110 = vpop.permute.xlu0 %5109
    %5111 = vrot.lane.b32.xlu0 %v5009, 122
    %v5112 = vpop.permute.xlu0 %5111
    %5113 = vrot.lane.b32.xlu0 %v5010, 122
    %v5114 = vpop.permute.xlu0 %5113
    %5115 = vrot.lane.b32.xlu0 %v5011, 122
    %v5116 = vpop.permute.xlu0 %5115
    %5117 = vrot.lane.b32.xlu0 %v5012, 122
    %v5118 = vpop.permute.xlu0 %5117
    %5119 = vrot.lane.b32.xlu0 %v5013, 122
    %v5120 = vpop.permute.xlu0 %5119
    %5121 = vrot.lane.b32.xlu0 %v5014, 122
    %v5122 = vpop.permute.xlu0 %5121
    %5123 = vrot.lane.b32.xlu0 %v5015, 122
    %v5124 = vpop.permute.xlu0 %5123
    %5125 = vrot.lane.b32.xlu0 %v5016, 122
    %v5126 = vpop.permute.xlu0 %5125
    %5127 = vrot.lane.b32.xlu0 %v5017, 122
    %v5128 = vpop.permute.xlu0 %5127
    %5129 = vrot.lane.b32.xlu0 %v5018, 122
    %v5130 = vpop.permute.xlu0 %5129
    %5131 = vrot.lane.b32.xlu0 %v5019, 122
    %v5132 = vpop.permute.xlu0 %5131
    %5133 = vrot.lane.b32.xlu0 %v5020, 122
    %v5134 = vpop.permute.xlu0 %5133
    %5135 = vrot.lane.b32.xlu0 %v5021, 122
    %v5136 = vpop.permute.xlu0 %5135
    %5137 = vrot.lane.b32.xlu0 %v5022, 122
    %v5138 = vpop.permute.xlu0 %5137
    %5139 = vrot.lane.b32.xlu0 %v5023, 122
    %v5140 = vpop.permute.xlu0 %5139
    %5141 = vrot.lane.b32.xlu0 %v5024, 122
    %v5142 = vpop.permute.xlu0 %5141
    %5143 = vrot.lane.b32.xlu0 %v5025, 122
    %v5144 = vpop.permute.xlu0 %5143
    %5145 = vrot.lane.b32.xlu0 %v5026, 122
    %v5146 = vpop.permute.xlu0 %5145
    %5147 = vrot.lane.b32.xlu0 %v5027, 122
    %v5148 = vpop.permute.xlu0 %5147
    %5149 = vrot.lane.b32.xlu0 %v5028, 122
    %v5150 = vpop.permute.xlu0 %5149
    %5151 = vrot.lane.b32.xlu0 %v5029, 122
    %v5152 = vpop.permute.xlu0 %5151
    %5153 = vrot.lane.b32.xlu0 %v5030, 122
    %v5154 = vpop.permute.xlu0 %5153
    %5155 = vrot.lane.b32.xlu0 %v5031, 122
    %v5156 = vpop.permute.xlu0 %5155
    %5157 = vrot.lane.b32.xlu0 %v5032, 122
    %v5158 = vpop.permute.xlu0 %5157
    %5159 = vrot.lane.b32.xlu0 %v5033, 122
    %v5160 = vpop.permute.xlu0 %5159
    %5161 = vrot.lane.b32.xlu0 %v5034, 122
    %v5162 = vpop.permute.xlu0 %5161
    %5163 = vrot.lane.b32.xlu0 %v5035, 122
    %v5164 = vpop.permute.xlu0 %5163
    %5165 = vrot.lane.b32.xlu0 %v5036, 122
    %v5166 = vpop.permute.xlu0 %5165
    %5167 = vrot.lane.b32.xlu0 %v5037, 122
    %v5168 = vpop.permute.xlu0 %5167
    %5169 = vrot.lane.b32.xlu0 %v5038, 122
    %v5170 = vpop.permute.xlu0 %5169
    %5171 = vrot.lane.b32.xlu0 %v5039, 122
    %v5172 = vpop.permute.xlu0 %5171
    %5173 = vrot.lane.b32.xlu0 %v5040, 122
    %v5174 = vpop.permute.xlu0 %5173
    %5175 = vrot.lane.b32.xlu0 %v5041, 122
    %v5176 = vpop.permute.xlu0 %5175
    %5177 = vrot.lane.b32.xlu0 %v5042, 122
    %v5178 = vpop.permute.xlu0 %5177
    %5179 = vrot.lane.b32.xlu0 %v5043, 122
    %v5180 = vpop.permute.xlu0 %5179
    %5181 = vrot.lane.b32.xlu0 %v5044, 122
    %v5182 = vpop.permute.xlu0 %5181
    %5183 = vrot.lane.b32.xlu0 %v5045, 122
    %v5184 = vpop.permute.xlu0 %5183
    %5185 = vrot.lane.b32.xlu0 %v5046, 122
    %v5186 = vpop.permute.xlu0 %5185
    %5187 = vrot.lane.b32.xlu0 %v5047, 122
    %v5188 = vpop.permute.xlu0 %5187
    %5189 = vrot.lane.b32.xlu0 %v5048, 122
    %v5190 = vpop.permute.xlu0 %5189
    %5191 = vrot.lane.b32.xlu0 %v5049, 122
    %v5192 = vpop.permute.xlu0 %5191
    %5193 = vrot.lane.b32.xlu0 %v5050, 122
    %v5194 = vpop.permute.xlu0 %5193
    %5195 = vrot.lane.b32.xlu0 %v5051, 122
    %v5196 = vpop.permute.xlu0 %5195
    %5197 = vrot.lane.b32.xlu0 %v5052, 122
    %v5198 = vpop.permute.xlu0 %5197
    %5199 = vrot.lane.b32.xlu0 %v5053, 122
    %v5200 = vpop.permute.xlu0 %5199
    %5201 = vrot.lane.b32.xlu0 %v5054, 122
    %v5202 = vpop.permute.xlu0 %5201
    %5203 = vrot.lane.b32.xlu0 %v5055, 122
    %v5204 = vpop.permute.xlu0 %5203
    %5205 = vrot.lane.b32.xlu0 %v5056, 122
    %v5206 = vpop.permute.xlu0 %5205
    %v5257 = vmax.f32 %v5007, %v5108
    %v5258 = vmax.f32 %v5008, %v5110
    %v5259 = vmax.f32 %v5009, %v5112
    %v5260 = vmax.f32 %v5010, %v5114
    %v5261 = vmax.f32 %v5011, %v5116
    %v5262 = vmax.f32 %v5012, %v5118
    %v5263 = vmax.f32 %v5013, %v5120
    %v5264 = vmax.f32 %v5014, %v5122
    %v5265 = vmax.f32 %v5015, %v5124
    %v5266 = vmax.f32 %v5016, %v5126
    %v5267 = vmax.f32 %v5017, %v5128
    %v5268 = vmax.f32 %v5018, %v5130
    %v5269 = vmax.f32 %v5019, %v5132
    %v5270 = vmax.f32 %v5020, %v5134
    %v5271 = vmax.f32 %v5021, %v5136
    %v5272 = vmax.f32 %v5022, %v5138
    %v5273 = vmax.f32 %v5023, %v5140
    %v5274 = vmax.f32 %v5024, %v5142
    %v5275 = vmax.f32 %v5025, %v5144
    %v5276 = vmax.f32 %v5026, %v5146
    %v5277 = vmax.f32 %v5027, %v5148
    %v5278 = vmax.f32 %v5028, %v5150
    %v5279 = vmax.f32 %v5029, %v5152
    %v5280 = vmax.f32 %v5030, %v5154
    %v5281 = vmax.f32 %v5031, %v5156
    %v5282 = vmax.f32 %v5032, %v5158
    %v5283 = vmax.f32 %v5033, %v5160
    %v5284 = vmax.f32 %v5034, %v5162
    %v5285 = vmax.f32 %v5035, %v5164
    %v5286 = vmax.f32 %v5036, %v5166
    %v5287 = vmax.f32 %v5037, %v5168
    %v5288 = vmax.f32 %v5038, %v5170
    %v5289 = vmax.f32 %v5039, %v5172
    %v5290 = vmax.f32 %v5040, %v5174
    %v5291 = vmax.f32 %v5041, %v5176
    %v5292 = vmax.f32 %v5042, %v5178
    %v5293 = vmax.f32 %v5043, %v5180
    %v5294 = vmax.f32 %v5044, %v5182
    %v5295 = vmax.f32 %v5045, %v5184
    %v5296 = vmax.f32 %v5046, %v5186
    %v5297 = vmax.f32 %v5047, %v5188
    %v5298 = vmax.f32 %v5048, %v5190
    %v5299 = vmax.f32 %v5049, %v5192
    %v5300 = vmax.f32 %v5050, %v5194
    %v5301 = vmax.f32 %v5051, %v5196
    %v5302 = vmax.f32 %v5052, %v5198
    %v5303 = vmax.f32 %v5053, %v5200
    %v5304 = vmax.f32 %v5054, %v5202
    %v5305 = vmax.f32 %v5055, %v5204
    %v5306 = vmax.f32 %v5056, %v5206
    %5357 = vrot.lane.b32.xlu0 %v5257, 116
    %v5358 = vpop.permute.xlu0 %5357
    %5359 = vrot.lane.b32.xlu0 %v5258, 116
    %v5360 = vpop.permute.xlu0 %5359
    %5361 = vrot.lane.b32.xlu0 %v5259, 116
    %v5362 = vpop.permute.xlu0 %5361
    %5363 = vrot.lane.b32.xlu0 %v5260, 116
    %v5364 = vpop.permute.xlu0 %5363
    %5365 = vrot.lane.b32.xlu0 %v5261, 116
    %v5366 = vpop.permute.xlu0 %5365
    %5367 = vrot.lane.b32.xlu0 %v5262, 116
    %v5368 = vpop.permute.xlu0 %5367
    %5369 = vrot.lane.b32.xlu0 %v5263, 116
    %v5370 = vpop.permute.xlu0 %5369
    %5371 = vrot.lane.b32.xlu0 %v5264, 116
    %v5372 = vpop.permute.xlu0 %5371
    %5373 = vrot.lane.b32.xlu0 %v5265, 116
    %v5374 = vpop.permute.xlu0 %5373
    %5375 = vrot.lane.b32.xlu0 %v5266, 116
    %v5376 = vpop.permute.xlu0 %5375
    %5377 = vrot.lane.b32.xlu0 %v5267, 116
    %v5378 = vpop.permute.xlu0 %5377
    %5379 = vrot.lane.b32.xlu0 %v5268, 116
    %v5380 = vpop.permute.xlu0 %5379
    %5381 = vrot.lane.b32.xlu0 %v5269, 116
    %v5382 = vpop.permute.xlu0 %5381
    %5383 = vrot.lane.b32.xlu0 %v5270, 116
    %v5384 = vpop.permute.xlu0 %5383
    %5385 = vrot.lane.b32.xlu0 %v5271, 116
    %v5386 = vpop.permute.xlu0 %5385
    %5387 = vrot.lane.b32.xlu0 %v5272, 116
    %v5388 = vpop.permute.xlu0 %5387
    %5389 = vrot.lane.b32.xlu0 %v5273, 116
    %v5390 = vpop.permute.xlu0 %5389
    %5391 = vrot.lane.b32.xlu0 %v5274, 116
    %v5392 = vpop.permute.xlu0 %5391
    %5393 = vrot.lane.b32.xlu0 %v5275, 116
    %v5394 = vpop.permute.xlu0 %5393
    %5395 = vrot.lane.b32.xlu0 %v5276, 116
    %v5396 = vpop.permute.xlu0 %5395
    %5397 = vrot.lane.b32.xlu0 %v5277, 116
    %v5398 = vpop.permute.xlu0 %5397
    %5399 = vrot.lane.b32.xlu0 %v5278, 116
    %v5400 = vpop.permute.xlu0 %5399
    %5401 = vrot.lane.b32.xlu0 %v5279, 116
    %v5402 = vpop.permute.xlu0 %5401
    %5403 = vrot.lane.b32.xlu0 %v5280, 116
    %v5404 = vpop.permute.xlu0 %5403
    %5405 = vrot.lane.b32.xlu0 %v5281, 116
    %v5406 = vpop.permute.xlu0 %5405
    %5407 = vrot.lane.b32.xlu0 %v5282, 116
    %v5408 = vpop.permute.xlu0 %5407
    %5409 = vrot.lane.b32.xlu0 %v5283, 116
    %v5410 = vpop.permute.xlu0 %5409
    %5411 = vrot.lane.b32.xlu0 %v5284, 116
    %v5412 = vpop.permute.xlu0 %5411
    %5413 = vrot.lane.b32.xlu0 %v5285, 116
    %v5414 = vpop.permute.xlu0 %5413
    %5415 = vrot.lane.b32.xlu0 %v5286, 116
    %v5416 = vpop.permute.xlu0 %5415
    %5417 = vrot.lane.b32.xlu0 %v5287, 116
    %v5418 = vpop.permute.xlu0 %5417
    %5419 = vrot.lane.b32.xlu0 %v5288, 116
    %v5420 = vpop.permute.xlu0 %5419
    %5421 = vrot.lane.b32.xlu0 %v5289, 116
    %v5422 = vpop.permute.xlu0 %5421
    %5423 = vrot.lane.b32.xlu0 %v5290, 116
    %v5424 = vpop.permute.xlu0 %5423
    %5425 = vrot.lane.b32.xlu0 %v5291, 116
    %v5426 = vpop.permute.xlu0 %5425
    %5427 = vrot.lane.b32.xlu0 %v5292, 116
    %v5428 = vpop.permute.xlu0 %5427
    %5429 = vrot.lane.b32.xlu0 %v5293, 116
    %v5430 = vpop.permute.xlu0 %5429
    %5431 = vrot.lane.b32.xlu0 %v5294, 116
    %v5432 = vpop.permute.xlu0 %5431
    %5433 = vrot.lane.b32.xlu0 %v5295, 116
    %v5434 = vpop.permute.xlu0 %5433
    %5435 = vrot.lane.b32.xlu0 %v5296, 116
    %v5436 = vpop.permute.xlu0 %5435
    %5437 = vrot.lane.b32.xlu0 %v5297, 116
    %v5438 = vpop.permute.xlu0 %5437
    %5439 = vrot.lane.b32.xlu0 %v5298, 116
    %v5440 = vpop.permute.xlu0 %5439
    %5441 = vrot.lane.b32.xlu0 %v5299, 116
    %v5442 = vpop.permute.xlu0 %5441
    %5443 = vrot.lane.b32.xlu0 %v5300, 116
    %v5444 = vpop.permute.xlu0 %5443
    %5445 = vrot.lane.b32.xlu0 %v5301, 116
    %v5446 = vpop.permute.xlu0 %5445
    %5447 = vrot.lane.b32.xlu0 %v5302, 116
    %v5448 = vpop.permute.xlu0 %5447
    %5449 = vrot.lane.b32.xlu0 %v5303, 116
    %v5450 = vpop.permute.xlu0 %5449
    %5451 = vrot.lane.b32.xlu0 %v5304, 116
    %v5452 = vpop.permute.xlu0 %5451
    %5453 = vrot.lane.b32.xlu0 %v5305, 116
    %v5454 = vpop.permute.xlu0 %5453
    %5455 = vrot.lane.b32.xlu0 %v5306, 116
    %v5456 = vpop.permute.xlu0 %5455
    %v5507 = vmax.f32 %v5257, %v5358
    %v5508 = vmax.f32 %v5258, %v5360
    %v5509 = vmax.f32 %v5259, %v5362
    %v5510 = vmax.f32 %v5260, %v5364
    %v5511 = vmax.f32 %v5261, %v5366
    %v5512 = vmax.f32 %v5262, %v5368
    %v5513 = vmax.f32 %v5263, %v5370
    %v5514 = vmax.f32 %v5264, %v5372
    %v5515 = vmax.f32 %v5265, %v5374
    %v5516 = vmax.f32 %v5266, %v5376
    %v5517 = vmax.f32 %v5267, %v5378
    %v5518 = vmax.f32 %v5268, %v5380
    %v5519 = vmax.f32 %v5269, %v5382
    %v5520 = vmax.f32 %v5270, %v5384
    %v5521 = vmax.f32 %v5271, %v5386
    %v5522 = vmax.f32 %v5272, %v5388
    %v5523 = vmax.f32 %v5273, %v5390
    %v5524 = vmax.f32 %v5274, %v5392
    %v5525 = vmax.f32 %v5275, %v5394
    %v5526 = vmax.f32 %v5276, %v5396
    %v5527 = vmax.f32 %v5277, %v5398
    %v5528 = vmax.f32 %v5278, %v5400
    %v5529 = vmax.f32 %v5279, %v5402
    %v5530 = vmax.f32 %v5280, %v5404
    %v5531 = vmax.f32 %v5281, %v5406
    %v5532 = vmax.f32 %v5282, %v5408
    %v5533 = vmax.f32 %v5283, %v5410
    %v5534 = vmax.f32 %v5284, %v5412
    %v5535 = vmax.f32 %v5285, %v5414
    %v5536 = vmax.f32 %v5286, %v5416
    %v5537 = vmax.f32 %v5287, %v5418
    %v5538 = vmax.f32 %v5288, %v5420
    %v5539 = vmax.f32 %v5289, %v5422
    %v5540 = vmax.f32 %v5290, %v5424
    %v5541 = vmax.f32 %v5291, %v5426
    %v5542 = vmax.f32 %v5292, %v5428
    %v5543 = vmax.f32 %v5293, %v5430
    %v5544 = vmax.f32 %v5294, %v5432
    %v5545 = vmax.f32 %v5295, %v5434
    %v5546 = vmax.f32 %v5296, %v5436
    %v5547 = vmax.f32 %v5297, %v5438
    %v5548 = vmax.f32 %v5298, %v5440
    %v5549 = vmax.f32 %v5299, %v5442
    %v5550 = vmax.f32 %v5300, %v5444
    %v5551 = vmax.f32 %v5301, %v5446
    %v5552 = vmax.f32 %v5302, %v5448
    %v5553 = vmax.f32 %v5303, %v5450
    %v5554 = vmax.f32 %v5304, %v5452
    %v5555 = vmax.f32 %v5305, %v5454
    %v5556 = vmax.f32 %v5306, %v5456
    %5607 = vrot.lane.b32.xlu0 %v5507, 104
    %v5608 = vpop.permute.xlu0 %5607
    %5609 = vrot.lane.b32.xlu0 %v5508, 104
    %v5610 = vpop.permute.xlu0 %5609
    %5611 = vrot.lane.b32.xlu0 %v5509, 104
    %v5612 = vpop.permute.xlu0 %5611
    %5613 = vrot.lane.b32.xlu0 %v5510, 104
    %v5614 = vpop.permute.xlu0 %5613
    %5615 = vrot.lane.b32.xlu0 %v5511, 104
    %v5616 = vpop.permute.xlu0 %5615
    %5617 = vrot.lane.b32.xlu0 %v5512, 104
    %v5618 = vpop.permute.xlu0 %5617
    %5619 = vrot.lane.b32.xlu0 %v5513, 104
    %v5620 = vpop.permute.xlu0 %5619
    %5621 = vrot.lane.b32.xlu0 %v5514, 104
    %v5622 = vpop.permute.xlu0 %5621
    %5623 = vrot.lane.b32.xlu0 %v5515, 104
    %v5624 = vpop.permute.xlu0 %5623
    %5625 = vrot.lane.b32.xlu0 %v5516, 104
    %v5626 = vpop.permute.xlu0 %5625
    %5627 = vrot.lane.b32.xlu0 %v5517, 104
    %v5628 = vpop.permute.xlu0 %5627
    %5629 = vrot.lane.b32.xlu0 %v5518, 104
    %v5630 = vpop.permute.xlu0 %5629
    %5631 = vrot.lane.b32.xlu0 %v5519, 104
    %v5632 = vpop.permute.xlu0 %5631
    %5633 = vrot.lane.b32.xlu0 %v5520, 104
    %v5634 = vpop.permute.xlu0 %5633
    %5635 = vrot.lane.b32.xlu0 %v5521, 104
    %v5636 = vpop.permute.xlu0 %5635
    %5637 = vrot.lane.b32.xlu0 %v5522, 104
    %v5638 = vpop.permute.xlu0 %5637
    %5639 = vrot.lane.b32.xlu0 %v5523, 104
    %v5640 = vpop.permute.xlu0 %5639
    %5641 = vrot.lane.b32.xlu0 %v5524, 104
    %v5642 = vpop.permute.xlu0 %5641
    %5643 = vrot.lane.b32.xlu0 %v5525, 104
    %v5644 = vpop.permute.xlu0 %5643
    %5645 = vrot.lane.b32.xlu0 %v5526, 104
    %v5646 = vpop.permute.xlu0 %5645
    %5647 = vrot.lane.b32.xlu0 %v5527, 104
    %v5648 = vpop.permute.xlu0 %5647
    %5649 = vrot.lane.b32.xlu0 %v5528, 104
    %v5650 = vpop.permute.xlu0 %5649
    %5651 = vrot.lane.b32.xlu0 %v5529, 104
    %v5652 = vpop.permute.xlu0 %5651
    %5653 = vrot.lane.b32.xlu0 %v5530, 104
    %v5654 = vpop.permute.xlu0 %5653
    %5655 = vrot.lane.b32.xlu0 %v5531, 104
    %v5656 = vpop.permute.xlu0 %5655
    %5657 = vrot.lane.b32.xlu0 %v5532, 104
    %v5658 = vpop.permute.xlu0 %5657
    %5659 = vrot.lane.b32.xlu0 %v5533, 104
    %v5660 = vpop.permute.xlu0 %5659
    %5661 = vrot.lane.b32.xlu0 %v5534, 104
    %v5662 = vpop.permute.xlu0 %5661
    %5663 = vrot.lane.b32.xlu0 %v5535, 104
    %v5664 = vpop.permute.xlu0 %5663
    %5665 = vrot.lane.b32.xlu0 %v5536, 104
    %v5666 = vpop.permute.xlu0 %5665
    %5667 = vrot.lane.b32.xlu0 %v5537, 104
    %v5668 = vpop.permute.xlu0 %5667
    %5669 = vrot.lane.b32.xlu0 %v5538, 104
    %v5670 = vpop.permute.xlu0 %5669
    %5671 = vrot.lane.b32.xlu0 %v5539, 104
    %v5672 = vpop.permute.xlu0 %5671
    %5673 = vrot.lane.b32.xlu0 %v5540, 104
    %v5674 = vpop.permute.xlu0 %5673
    %5675 = vrot.lane.b32.xlu0 %v5541, 104
    %v5676 = vpop.permute.xlu0 %5675
    %5677 = vrot.lane.b32.xlu0 %v5542, 104
    %v5678 = vpop.permute.xlu0 %5677
    %5679 = vrot.lane.b32.xlu0 %v5543, 104
    %v5680 = vpop.permute.xlu0 %5679
    %5681 = vrot.lane.b32.xlu0 %v5544, 104
    %v5682 = vpop.permute.xlu0 %5681
    %5683 = vrot.lane.b32.xlu0 %v5545, 104
    %v5684 = vpop.permute.xlu0 %5683
    %5685 = vrot.lane.b32.xlu0 %v5546, 104
    %v5686 = vpop.permute.xlu0 %5685
    %5687 = vrot.lane.b32.xlu0 %v5547, 104
    %v5688 = vpop.permute.xlu0 %5687
    %5689 = vrot.lane.b32.xlu0 %v5548, 104
    %v5690 = vpop.permute.xlu0 %5689
    %5691 = vrot.lane.b32.xlu0 %v5549, 104
    %v5692 = vpop.permute.xlu0 %5691
    %5693 = vrot.lane.b32.xlu0 %v5550, 104
    %v5694 = vpop.permute.xlu0 %5693
    %5695 = vrot.lane.b32.xlu0 %v5551, 104
    %v5696 = vpop.permute.xlu0 %5695
    %5697 = vrot.lane.b32.xlu0 %v5552, 104
    %v5698 = vpop.permute.xlu0 %5697
    %5699 = vrot.lane.b32.xlu0 %v5553, 104
    %v5700 = vpop.permute.xlu0 %5699
    %5701 = vrot.lane.b32.xlu0 %v5554, 104
    %v5702 = vpop.permute.xlu0 %5701
    %5703 = vrot.lane.b32.xlu0 %v5555, 104
    %v5704 = vpop.permute.xlu0 %5703
    %5705 = vrot.lane.b32.xlu0 %v5556, 104
    %v5706 = vpop.permute.xlu0 %5705
    %v5757 = vmax.f32 %v5507, %v5608
    %v5758 = vmax.f32 %v5508, %v5610
    %v5759 = vmax.f32 %v5509, %v5612
    %v5760 = vmax.f32 %v5510, %v5614
    %v5761 = vmax.f32 %v5511, %v5616
    %v5762 = vmax.f32 %v5512, %v5618
    %v5763 = vmax.f32 %v5513, %v5620
    %v5764 = vmax.f32 %v5514, %v5622
    %v5765 = vmax.f32 %v5515, %v5624
    %v5766 = vmax.f32 %v5516, %v5626
    %v5767 = vmax.f32 %v5517, %v5628
    %v5768 = vmax.f32 %v5518, %v5630
    %v5769 = vmax.f32 %v5519, %v5632
    %v5770 = vmax.f32 %v5520, %v5634
    %v5771 = vmax.f32 %v5521, %v5636
    %v5772 = vmax.f32 %v5522, %v5638
    %v5773 = vmax.f32 %v5523, %v5640
    %v5774 = vmax.f32 %v5524, %v5642
    %v5775 = vmax.f32 %v5525, %v5644
    %v5776 = vmax.f32 %v5526, %v5646
    %v5777 = vmax.f32 %v5527, %v5648
    %v5778 = vmax.f32 %v5528, %v5650
    %v5779 = vmax.f32 %v5529, %v5652
    %v5780 = vmax.f32 %v5530, %v5654
    %v5781 = vmax.f32 %v5531, %v5656
    %v5782 = vmax.f32 %v5532, %v5658
    %v5783 = vmax.f32 %v5533, %v5660
    %v5784 = vmax.f32 %v5534, %v5662
    %v5785 = vmax.f32 %v5535, %v5664
    %v5786 = vmax.f32 %v5536, %v5666
    %v5787 = vmax.f32 %v5537, %v5668
    %v5788 = vmax.f32 %v5538, %v5670
    %v5789 = vmax.f32 %v5539, %v5672
    %v5790 = vmax.f32 %v5540, %v5674
    %v5791 = vmax.f32 %v5541, %v5676
    %v5792 = vmax.f32 %v5542, %v5678
    %v5793 = vmax.f32 %v5543, %v5680
    %v5794 = vmax.f32 %v5544, %v5682
    %v5795 = vmax.f32 %v5545, %v5684
    %v5796 = vmax.f32 %v5546, %v5686
    %v5797 = vmax.f32 %v5547, %v5688
    %v5798 = vmax.f32 %v5548, %v5690
    %v5799 = vmax.f32 %v5549, %v5692
    %v5800 = vmax.f32 %v5550, %v5694
    %v5801 = vmax.f32 %v5551, %v5696
    %v5802 = vmax.f32 %v5552, %v5698
    %v5803 = vmax.f32 %v5553, %v5700
    %v5804 = vmax.f32 %v5554, %v5702
    %v5805 = vmax.f32 %v5555, %v5704
    %v5806 = vmax.f32 %v5556, %v5706
    %v5807 = vld [vmem:[%s3] sm:$0xff]
    %v5808 = vld [vmem:[%s3 + $0x8] sm:$0xff]
    %v5809 = vld [vmem:[%s3 + $0x10] sm:$0xff]
    %v5810 = vld [vmem:[%s3 + $0x18] sm:$0xff]
    %v5811 = vld [vmem:[%s3 + $0x20] sm:$0xf]
    %v5812 = vld [vmem:[%s3 + $0x28] sm:$0xf]
    %v5813 = vld [vmem:[%s4] sm:$0xff]
    %v5814 = vld [vmem:[%s4 + $0x8] sm:$0xff]
    %v5815 = vld [vmem:[%s4 + $0x10] sm:$0xf]
    %5817 = vset.pattern.permute.xlu0 0
    %5818 = vperm.xlu0 %5817, %v5813
    %v5819 = vpop.permute.xlu0 %5818
    %5822 = vset.pattern.permute.xlu0 0
    %5823 = vperm.xlu0 %5822, %v5814
    %v5824 = vpop.permute.xlu0 %5823
    %5827 = vset.pattern.permute.xlu0 0
    %5828 = vperm.xlu0 %5827, %v5815
    %v5829 = vpop.permute.xlu0 %5828
    %vm5831 = vcmask 588800
    %v5833 = vsel %vm5831, %v5808, 0
    %v5836 = vsel %vm5831, %v5810, 0
    %v5839 = vsel %vm5831, %v5812, 0
    %5841 = vmatprep.subr.mxu0 0.0
    %5842 = vmatpush1.msra.mxu0 %v5757
    %5843 = vmatprep.subr.mxu0 0.0
    %5844 = vmatpush1.msra.mxu0 %v5758
    %5845 = vmatprep.subr.mxu0 0.0
    %5846 = vmatpush1.msra.mxu0 %v5759
    %5847 = vmatprep.subr.mxu0 0.0
    %5848 = vmatpush1.msra.mxu0 %v5760
    %5849 = vmatprep.subr.mxu0 0.0
    %5850 = vmatpush1.msra.mxu0 %v5761
    %5851 = vmatprep.subr.mxu0 0.0
    %5852 = vmatpush1.msra.mxu0 %v5762
    %5853 = vmatprep.subr.mxu0 0.0
    %5854 = vmatpush1.msra.mxu0 %v5763
    %5855 = vmatprep.subr.mxu0 0.0
    %5856 = vmatpush1.msra.mxu0 %v5764
    %5857 = vmatprep.subr.mxu0 0.0
    %5858 = vmatpush1.msra.mxu0 %v5765
    %5859 = vmatprep.subr.mxu0 0.0
    %5860 = vmatpush1.msra.mxu0 %v5766
    %5861 = vmatprep.subr.mxu0 0.0
    %5862 = vmatpush1.msra.mxu0 %v5767
    %5863 = vmatprep.subr.mxu0 0.0
    %5864 = vmatpush1.msra.mxu0 %v5768
    %5865 = vmatprep.subr.mxu0 0.0
    %5866 = vmatpush1.msra.mxu0 %v5769
    %5867 = vmatprep.subr.mxu0 0.0
    %5868 = vmatpush1.msra.mxu0 %v5770
    %5869 = vmatprep.subr.mxu0 0.0
    %5870 = vmatpush1.msra.mxu0 %v5771
    %5871 = vmatprep.subr.mxu0 0.0
    %5872 = vmatpush1.msra.mxu0 %v5772
    %5873 = vmatprep.subr.mxu0 0.0
    %5874 = vmatpush1.msra.mxu0 %v5773
    %5875 = vmatprep.subr.mxu0 0.0
    %5876 = vmatpush1.msra.mxu0 %v5774
    %5877 = vmatprep.subr.mxu0 0.0
    %5878 = vmatpush1.msra.mxu0 %v5775
    %5879 = vmatprep.subr.mxu0 0.0
    %5880 = vmatpush1.msra.mxu0 %v5776
    %5881 = vmatprep.subr.mxu0 0.0
    %5882 = vmatpush1.msra.mxu0 %v5777
    %5883 = vmatprep.subr.mxu0 0.0
    %5884 = vmatpush1.msra.mxu0 %v5778
    %5885 = vmatprep.subr.mxu0 0.0
    %5886 = vmatpush1.msra.mxu0 %v5779
    %5887 = vmatprep.subr.mxu0 0.0
    %5888 = vmatpush1.msra.mxu0 %v5780
    %5889 = vmatprep.subr.mxu0 0.0
    %5890 = vmatpush1.msra.mxu0 %v5781
    %5891 = vmatprep.subr.mxu0 0.0
    %5892 = vmatpush1.msra.mxu0 0.0
    %5893 = vmatprep.subr.mxu0 0.0
    %5894 = vmatpush1.msra.mxu0 0.0
    %5895 = vmatprep.subr.mxu0 0.0
    %5896 = vmatpush1.msra.mxu0 0.0
    %5897 = vmatprep.subr.mxu0 0.0
    %5898 = vmatpush1.msra.mxu0 0.0
    %5899 = vmatprep.subr.mxu0 0.0
    %5900 = vmatpush1.msra.mxu0 0.0
    %5901 = vmatprep.subr.mxu0 0.0
    %5902 = vmatpush1.msra.mxu0 0.0
    %5903 = vmatprep.subr.mxu0 0.0
    %5904 = vmatpush1.msra.mxu0 0.0
    %5905 = vmatprep.mubr.f32.mxu0 %v5833
    %5906 = vmatmul.mubr.f32.gmra.mrb[0].mxu0 %v5807
    %v5907 = vpop.f32.mrb[0].mxu0
    %v5908 = vadd.f32 %v5819, %v5907
    %v5909 = vpop.f32.mrb[0].mxu0
    %5910 = vmatprep.mubr.f32.mxu0 %v5836
    %5911 = vmatmul.mubr.f32.gmra.mrb[0].mxu0 %v5809
    %v5912 = vpop.f32.mrb[0].mxu0
    %v5913 = vadd.f32 %v5824, %v5912
    %v5914 = vpop.f32.mrb[0].mxu0
    %5915 = vmatprep.mubr.f32.mxu0 %v5839
    %5916 = vmatmul.mubr.f32.gmra.mrb[0].mxu0 %v5811
    %v5917 = vpop.f32.mrb[0].mxu0
    %v5918 = vadd.f32 %v5829, %v5917
    %v5919 = vpop.f32.mrb[0].mxu0
    %5920 = vdwg.mxu0
    %v5921 = vld [vmem:[%s5] sm:$0xf]
    %v5922 = vld [vmem:[%s6] sm:$0xf]
    %5924 = vset.pattern.permute.xlu0 0
    %5925 = vperm.xlu0 %5924, %v5922
    %v5926 = vpop.permute.xlu0 %5925
    %vm5928 = vcmask 48128
    %v5930 = vsel %vm5928, %v5921, 0
    %v5933 = vsel %vm5928, %v5908, 0
    %v5936 = vsel %vm5928, %v5913, 0
    %v5939 = vsel %vm5928, %v5918, 0
    %5941 = vmatprep.subr.mxu0 0.0
    %5942 = vmatpush1.xpose.msra.mxu0 %v5933
    %5943 = vmatprep.subr.mxu0 0.0
    %5944 = vmatpush1.xpose.msra.mxu0 %v5936
    %5945 = vmatprep.subr.mxu0 0.0
    %5946 = vmatpush1.xpose.msra.mxu0 %v5939
    %5947 = vmatprep.subr.mxu0 0.0
    %5948 = vmatpush1.xpose.msra.mxu0 0.0
    %5949 = vmatprep.subr.mxu0 0.0
    %5950 = vmatpush1.xpose.msra.mxu0 0.0
    %5951 = vmatprep.subr.mxu0 0.0
    %5952 = vmatpush1.xpose.msra.mxu0 0.0
    %5953 = vmatprep.subr.mxu0 0.0
    %5954 = vmatpush1.xpose.msra.mxu0 0.0
    %5955 = vmatprep.subr.mxu0 0.0
    %5956 = vmatpush1.xpose.msra.mxu0 0.0
    %5957 = vmatprep.subr.mxu0 0.0
    %5958 = vmatpush1.xpose.msra.mxu0 0.0
    %5959 = vmatprep.subr.mxu0 0.0
    %5960 = vmatpush1.xpose.msra.mxu0 0.0
    %5961 = vmatprep.subr.mxu0 0.0
    %5962 = vmatpush1.xpose.msra.mxu0 0.0
    %5963 = vmatprep.subr.mxu0 0.0
    %5964 = vmatpush1.xpose.msra.mxu0 0.0
    %5965 = vmatprep.subr.mxu0 0.0
    %5966 = vmatpush1.xpose.msra.mxu0 0.0
    %5967 = vmatprep.subr.mxu0 0.0
    %5968 = vmatpush1.xpose.msra.mxu0 0.0
    %5969 = vmatprep.subr.mxu0 0.0
    %5970 = vmatpush1.xpose.msra.mxu0 0.0
    %5971 = vmatprep.subr.mxu0 0.0
    %5972 = vmatpush1.xpose.msra.mxu0 0.0
    %5973 = vmatprep.subr.mxu0 0.0
    %5974 = vmatpush1.xpose.msra.mxu0 0.0
    %5975 = vmatprep.subr.mxu0 0.0
    %5976 = vmatpush1.xpose.msra.mxu0 0.0
    %5977 = vmatprep.subr.mxu0 0.0
    %5978 = vmatpush1.xpose.msra.mxu0 0.0
    %5979 = vmatprep.subr.mxu0 0.0
    %5980 = vmatpush1.xpose.msra.mxu0 0.0
    %5981 = vmatprep.subr.mxu0 0.0
    %5982 = vmatpush1.xpose.msra.mxu0 0.0
    %5983 = vmatprep.subr.mxu0 0.0
    %5984 = vmatpush1.xpose.msra.mxu0 0.0
    %5985 = vmatprep.subr.mxu0 0.0
    %5986 = vmatpush1.xpose.msra.mxu0 0.0
    %5987 = vmatprep.subr.mxu0 0.0
    %5988 = vmatpush1.xpose.msra.mxu0 0.0
    %5989 = vmatprep.subr.mxu0 0.0
    %5990 = vmatpush1.xpose.msra.mxu0 0.0
    %5991 = vmatprep.subr.mxu0 0.0
    %5992 = vmatpush1.xpose.msra.mxu0 0.0
    %5993 = vmatprep.subr.mxu0 0.0
    %5994 = vmatpush1.xpose.msra.mxu0 0.0
    %5995 = vmatprep.subr.mxu0 0.0
    %5996 = vmatpush1.xpose.msra.mxu0 0.0
    %5997 = vmatprep.subr.mxu0 0.0
    %5998 = vmatpush1.xpose.msra.mxu0 0.0
    %5999 = vmatprep.subr.mxu0 0.0
    %6000 = vmatpush1.xpose.msra.mxu0 0.0
    %6001 = vmatprep.subr.mxu0 0.0
    %6002 = vmatpush1.xpose.msra.mxu0 0.0
    %6003 = vmatprep.subr.mxu0 0.0
    %6004 = vmatpush1.xpose.msra.mxu0 0.0
    %6005 = vmatprep.mubr.f32.mxu0 0.0
    %6006 = vmatmul.mubr.f32.gmra.mrb[0].mxu0 %v5930
    %v6007 = vpop.f32.mrb[0].mxu0
    %v6008 = vadd.f32 %v5926, %v6007
    %v6009 = vpop.f32.mrb[0].mxu0
    %6010 = vdwg.mxu0
    %vm6011 = vcmask 158720
    %v6012 = vsel %vm6011, %v6008, -inf
    %v6013 = vrot.slane %v6012, 4
    %v6014 = vmax.f32 %v6012, %v6013
    %v6015 = vrot.slane %v6014, 2
    %v6016 = vmax.f32 %v6014, %v6015
    %v6017 = vrot.slane %v6016, 1
    %v6018 = vmax.f32 %v6016, %v6017
    %v6019 = vsub.f32 %v6008, %v6018
    %v6020 = vmul.f32 %v6019, 1.442695
    %v6021 = vpow.pop %v6020
    %v6022 = vsel %vm6011, %v6021, 0.0
    %v6023 = vrot.slane %v6022, 4
    %v6024 = vadd.f32 %v6022, %v6023
    %v6025 = vrot.slane %v6024, 2
    %v6026 = vadd.f32 %v6024, %v6025
    %v6027 = vrot.slane %v6026, 1
    %v6028 = vadd.f32 %v6026, %v6027
    %v6029 = vrcp.pop %v6028
    %v6030 = vmul.f32 %v6021, %v6029
    %6031 = vst.msk [vmem:[#allocation2] sm:$0xf] %vm6011, %v6030
    %v6032 = vld [vmem:[%s3] sm:$0xff]
    %v6033 = vld [vmem:[%s3 + $0x8] sm:$0xff]
    %v6034 = vld [vmem:[%s3 + $0x10] sm:$0xff]
    %v6035 = vld [vmem:[%s3 + $0x18] sm:$0xff]
    %v6036 = vld [vmem:[%s3 + $0x20] sm:$0xf]
    %v6037 = vld [vmem:[%s3 + $0x28] sm:$0xf]
    %v6038 = vld [vmem:[%s4] sm:$0xff]
    %v6039 = vld [vmem:[%s4 + $0x8] sm:$0xff]
    %v6040 = vld [vmem:[%s4 + $0x10] sm:$0xf]
    %6042 = vset.pattern.permute.xlu0 0
    %6043 = vperm.xlu0 %6042, %v6038
    %v6044 = vpop.permute.xlu0 %6043
    %6047 = vset.pattern.permute.xlu0 0
    %6048 = vperm.xlu0 %6047, %v6039
    %v6049 = vpop.permute.xlu0 %6048
    %6052 = vset.pattern.permute.xlu0 0
    %6053 = vperm.xlu0 %6052, %v6040
    %v6054 = vpop.permute.xlu0 %6053
    %v6057 = vsel %vm5831, %v6033, 0
    %v6060 = vsel %vm5831, %v6035, 0
    %v6063 = vsel %vm5831, %v6037, 0
    %6065 = vmatprep.subr.mxu0 0.0
    %6066 = vmatpush1.msra.mxu0 %v5782
    %6067 = vmatprep.subr.mxu0 0.0
    %6068 = vmatpush1.msra.mxu0 %v5783
    %6069 = vmatprep.subr.mxu0 0.0
    %6070 = vmatpush1.msra.mxu0 %v5784
    %6071 = vmatprep.subr.mxu0 0.0
    %6072 = vmatpush1.msra.mxu0 %v5785
    %6073 = vmatprep.subr.mxu0 0.0
    %6074 = vmatpush1.msra.mxu0 %v5786
    %6075 = vmatprep.subr.mxu0 0.0
    %6076 = vmatpush1.msra.mxu0 %v5787
    %6077 = vmatprep.subr.mxu0 0.0
    %6078 = vmatpush1.msra.mxu0 %v5788
    %6079 = vmatprep.subr.mxu0 0.0
    %6080 = vmatpush1.msra.mxu0 %v5789
    %6081 = vmatprep.subr.mxu0 0.0
    %6082 = vmatpush1.msra.mxu0 %v5790
    %6083 = vmatprep.subr.mxu0 0.0
    %6084 = vmatpush1.msra.mxu0 %v5791
    %6085 = vmatprep.subr.mxu0 0.0
    %6086 = vmatpush1.msra.mxu0 %v5792
    %6087 = vmatprep.subr.mxu0 0.0
    %6088 = vmatpush1.msra.mxu0 %v5793
    %6089 = vmatprep.subr.mxu0 0.0
    %6090 = vmatpush1.msra.mxu0 %v5794
    %6091 = vmatprep.subr.mxu0 0.0
    %6092 = vmatpush1.msra.mxu0 %v5795
    %6093 = vmatprep.subr.mxu0 0.0
    %6094 = vmatpush1.msra.mxu0 %v5796
    %6095 = vmatprep.subr.mxu0 0.0
    %6096 = vmatpush1.msra.mxu0 %v5797
    %6097 = vmatprep.subr.mxu0 0.0
    %6098 = vmatpush1.msra.mxu0 %v5798
    %6099 = vmatprep.subr.mxu0 0.0
    %6100 = vmatpush1.msra.mxu0 %v5799
    %6101 = vmatprep.subr.mxu0 0.0
    %6102 = vmatpush1.msra.mxu0 %v5800
    %6103 = vmatprep.subr.mxu0 0.0
    %6104 = vmatpush1.msra.mxu0 %v5801
    %6105 = vmatprep.subr.mxu0 0.0
    %6106 = vmatpush1.msra.mxu0 %v5802
    %6107 = vmatprep.subr.mxu0 0.0
    %6108 = vmatpush1.msra.mxu0 %v5803
    %6109 = vmatprep.subr.mxu0 0.0
    %6110 = vmatpush1.msra.mxu0 %v5804
    %6111 = vmatprep.subr.mxu0 0.0
    %6112 = vmatpush1.msra.mxu0 %v5805
    %6113 = vmatprep.subr.mxu0 0.0
    %6114 = vmatpush1.msra.mxu0 %v5806
    %6115 = vmatprep.subr.mxu0 0.0
    %6116 = vmatpush1.msra.mxu0 0.0
    %6117 = vmatprep.subr.mxu0 0.0
    %6118 = vmatpush1.msra.mxu0 0.0
    %6119 = vmatprep.subr.mxu0 0.0
    %6120 = vmatpush1.msra.mxu0 0.0
    %6121 = vmatprep.subr.mxu0 0.0
    %6122 = vmatpush1.msra.mxu0 0.0
    %6123 = vmatprep.subr.mxu0 0.0
    %6124 = vmatpush1.msra.mxu0 0.0
    %6125 = vmatprep.subr.mxu0 0.0
    %6126 = vmatpush1.msra.mxu0 0.0
    %6127 = vmatprep.subr.mxu0 0.0
    %6128 = vmatpush1.msra.mxu0 0.0
    %6129 = vmatprep.mubr.f32.mxu0 %v6057
    %6130 = vmatmul.mubr.f32.gmra.mrb[0].mxu0 %v6032
    %v6131 = vpop.f32.mrb[0].mxu0
    %v6132 = vadd.f32 %v6044, %v6131
    %v6133 = vpop.f32.mrb[0].mxu0
    %6134 = vmatprep.mubr.f32.mxu0 %v6060
    %6135 = vmatmul.mubr.f32.gmra.mrb[0].mxu0 %v6034
    %v6136 = vpop.f32.mrb[0].mxu0
    %v6137 = vadd.f32 %v6049, %v6136
    %v6138 = vpop.f32.mrb[0].mxu0
    %6139 = vmatprep.mubr.f32.mxu0 %v6063
    %6140 = vmatmul.mubr.f32.gmra.mrb[0].mxu0 %v6036
    %v6141 = vpop.f32.mrb[0].mxu0
    %v6142 = vadd.f32 %v6054, %v6141
    %v6143 = vpop.f32.mrb[0].mxu0
    %6144 = vdwg.mxu0
    %v6145 = vld [vmem:[%s5] sm:$0xf]
    %v6146 = vld [vmem:[%s6] sm:$0xf]
    %6148 = vset.pattern.permute.xlu0 0
    %6149 = vperm.xlu0 %6148, %v6146
    %v6150 = vpop.permute.xlu0 %6149
    %v6153 = vsel %vm5928, %v6145, 0
    %v6156 = vsel %vm5928, %v6132, 0
    %v6159 = vsel %vm5928, %v6137, 0
    %v6162 = vsel %vm5928, %v6142, 0
    %6164 = vmatprep.subr.mxu0 0.0
    %6165 = vmatpush1.xpose.msra.mxu0 %v6156
    %6166 = vmatprep.subr.mxu0 0.0
    %6167 = vmatpush1.xpose.msra.mxu0 %v6159
    %6168 = vmatprep.subr.mxu0 0.0
    %6169 = vmatpush1.xpose.msra.mxu0 %v6162
    %6170 = vmatprep.subr.mxu0 0.0
    %6171 = vmatpush1.xpose.msra.mxu0 0.0
    %6172 = vmatprep.subr.mxu0 0.0
    %6173 = vmatpush1.xpose.msra.mxu0 0.0
    %6174 = vmatprep.subr.mxu0 0.0
    %6175 = vmatpush1.xpose.msra.mxu0 0.0
    %6176 = vmatprep.subr.mxu0 0.0
    %6177 = vmatpush1.xpose.msra.mxu0 0.0
    %6178 = vmatprep.subr.mxu0 0.0
    %6179 = vmatpush1.xpose.msra.mxu0 0.0
    %6180 = vmatprep.subr.mxu0 0.0
    %6181 = vmatpush1.xpose.msra.mxu0 0.0
    %6182 = vmatprep.subr.mxu0 0.0
    %6183 = vmatpush1.xpose.msra.mxu0 0.0
    %6184 = vmatprep.subr.mxu0 0.0
    %6185 = vmatpush1.xpose.msra.mxu0 0.0
    %6186 = vmatprep.subr.mxu0 0.0
    %6187 = vmatpush1.xpose.msra.mxu0 0.0
    %6188 = vmatprep.subr.mxu0 0.0
    %6189 = vmatpush1.xpose.msra.mxu0 0.0
    %6190 = vmatprep.subr.mxu0 0.0
    %6191 = vmatpush1.xpose.msra.mxu0 0.0
    %6192 = vmatprep.subr.mxu0 0.0
    %6193 = vmatpush1.xpose.msra.mxu0 0.0
    %6194 = vmatprep.subr.mxu0 0.0
    %6195 = vmatpush1.xpose.msra.mxu0 0.0
    %6196 = vmatprep.subr.mxu0 0.0
    %6197 = vmatpush1.xpose.msra.mxu0 0.0
    %6198 = vmatprep.subr.mxu0 0.0
    %6199 = vmatpush1.xpose.msra.mxu0 0.0
    %6200 = vmatprep.subr.mxu0 0.0
    %6201 = vmatpush1.xpose.msra.mxu0 0.0
    %6202 = vmatprep.subr.mxu0 0.0
    %6203 = vmatpush1.xpose.msra.mxu0 0.0
    %6204 = vmatprep.subr.mxu0 0.0
    %6205 = vmatpush1.xpose.msra.mxu0 0.0
    %6206 = vmatprep.subr.mxu0 0.0
    %6207 = vmatpush1.xpose.msra.mxu0 0.0
    %6208 = vmatprep.subr.mxu0 0.0
    %6209 = vmatpush1.xpose.msra.mxu0 0.0
    %6210 = vmatprep.subr.mxu0 0.0
    %6211 = vmatpush1.xpose.msra.mxu0 0.0
    %6212 = vmatprep.subr.mxu0 0.0
    %6213 = vmatpush1.xpose.msra.mxu0 0.0
    %6214 = vmatprep.subr.mxu0 0.0
    %6215 = vmatpush1.xpose.msra.mxu0 0.0
    %6216 = vmatprep.subr.mxu0 0.0
    %6217 = vmatpush1.xpose.msra.mxu0 0.0
    %6218 = vmatprep.subr.mxu0 0.0
    %6219 = vmatpush1.xpose.msra.mxu0 0.0
    %6220 = vmatprep.subr.mxu0 0.0
    %6221 = vmatpush1.xpose.msra.mxu0 0.0
    %6222 = vmatprep.subr.mxu0 0.0
    %6223 = vmatpush1.xpose.msra.mxu0 0.0
    %6224 = vmatprep.subr.mxu0 0.0
    %6225 = vmatpush1.xpose.msra.mxu0 0.0
    %6226 = vmatprep.subr.mxu0 0.0
    %6227 = vmatpush1.xpose.msra.mxu0 0.0
    %6228 = vmatprep.mubr.f32.mxu0 0.0
    %6229 = vmatmul.mubr.f32.gmra.mrb[0].mxu0 %v6153
    %v6230 = vpop.f32.mrb[0].mxu0
    %v6231 = vadd.f32 %v6150, %v6230
    %v6232 = vpop.f32.mrb[0].mxu0
    %6233 = vdwg.mxu0
    %v6234 = vsel %vm6011, %v6231, -inf
    %v6235 = vrot.slane %v6234, 4
    %v6236 = vmax.f32 %v6234, %v6235
    %v6237 = vrot.slane %v6236, 2
    %v6238 = vmax.f32 %v6236, %v6237
    %v6239 = vrot.slane %v6238, 1
    %v6240 = vmax.f32 %v6238, %v6239
    %v6241 = vsub.f32 %v6231, %v6240
    %v6242 = vmul.f32 %v6241, 1.442695
    %v6243 = vpow.pop %v6242
    %v6244 = vsel %vm6011, %v6243, 0.0
    %v6245 = vrot.slane %v6244, 4
    %v6246 = vadd.f32 %v6244, %v6245
    %v6247 = vrot.slane %v6246, 2
    %v6248 = vadd.f32 %v6246, %v6247
    %v6249 = vrot.slane %v6248, 1
    %v6250 = vadd.f32 %v6248, %v6249
    %v6251 = vrcp.pop %v6250
    %v6252 = vmul.f32 %v6243, %v6251
    %s6253 = scalar_lea.vmem [#allocation2], 4
    %6254 = vst.msk [vmem:[%s6253] sm:$0xf] %vm6011, %v6252
    // Predicated region
    $region30: #{textcnn_forward.1} parent=1 // pred_check
      _
    $region31: #{textcnn_forward.1} parent=1 // pred_check_branch
      %6256 = sbr.rel (0) target = $region33
    $region32: #{textcnn_forward.1} parent=1 // pred_region
      %s6258 = ssub.s32 128, 128
      %6259 = vsyncadd [#allocation3], %s6258
      %s6260 = sshll.u32 [#allocation2], 4
      %s6261 = int_to_ptr.vmem [resolvable:$true] %s6260
      %6266 = dma.vmem_to_hbm [thread:$0]  %s6261, 128, %s7, [#allocation3], 64, 64, 4
    $region33: #{textcnn_forward.1} parent=1 // pred_fallthru
      _
    // Predicated region
    $region34: #{textcnn_forward.1} parent=1 // pred_check
      _
    $region35: #{textcnn_forward.1} parent=1 // pred_check_branch
      %6268 = sbr.rel (0) target = $region37
    $region36: #{textcnn_forward.1} parent=1 // pred_region
      %6269 = dma.done [#allocation3], 128
    $region37: #{textcnn_forward.1} parent=1 // pred_fallthru
      _
    %6270 = vsyncpa [#allocation3], 1

</llo_original>
